<compile_context>
chip_gen: v6e
topology: v6e:2x2x1
jax: 0.10.0
libtpu: 0.0.40
codegen_flags: <defaults>
</compile_context>

<pallas_src>
import math
import functools

import jax
import jax.numpy as jnp
from jax.experimental import pallas as pl
from jax.experimental.pallas import tpu as pltpu

EPS = 1e-5          # nn.LayerNorm default
NEG_INF = -1e10     # matches masked_fill(-1e10) in the PyTorch module


# ----------------------------------------------------------------------------
# In-kernel helpers (operate on arrays already loaded from refs).
# ----------------------------------------------------------------------------
def _layer_norm(y, gamma, beta):
    mean = jnp.mean(y, axis=-1, keepdims=True)
    var = jnp.mean(jnp.square(y - mean), axis=-1, keepdims=True)
    return (y - mean) * jax.lax.rsqrt(var + EPS) * gamma + beta


def _to_head_major(x2d, nh, hd):
    """[L, nh*hd] f32 -> [nh, L, hd]: one reshape + one XLU transpose."""
    L = x2d.shape[0]
    return pltpu.einshape("lnd->nld", x2d.reshape(L, nh, hd))


def _mha(x_q, x_kv, bias, wq, bq, wk, bk, wv, bv, wo, bo, nh, hd,
         exact_softmax):
    """Multi-head attention with head-batched contractions.

    x_q: [T, H] f32, x_kv: [S, H] f32, bias: additive mask bias ([Mq, S],
    Mq in {1, T}), wq/wk/wv/wo: [H, H] bf16, biases: [H] f32.
    Returns (attn_out [T, H] f32, attn_probs [nh, T, S] f32).
    """
    T = x_q.shape[0]
    S = x_kv.shape[0]
    H = nh * hd

    xq16 = x_q.astype(jnp.bfloat16)
    xkv16 = x_kv.astype(jnp.bfloat16)

    q = jnp.dot(xq16, wq, preferred_element_type=jnp.float32) + bq   # [T, H]
    k = jnp.dot(xkv16, wk, preferred_element_type=jnp.float32) + bk  # [S, H]
    v = jnp.dot(xkv16, wv, preferred_element_type=jnp.float32) + bv  # [S, H]
    q = q * (1.0 / math.sqrt(hd))          # fold 1/sqrt(hd) into Q once

    # Head-major operands: [nh, T, hd] / [nh, S, hd] (no per-head lane slices).
    qh = _to_head_major(q, nh, hd).astype(jnp.bfloat16)
    kh = _to_head_major(k, nh, hd).astype(jnp.bfloat16)
    vh = _to_head_major(v, nh, hd).astype(jnp.bfloat16)

    # One batched contraction over all heads: [nh, T, S] f32.
    scores = jnp.einsum('htd,hsd->hts', qh, kh,
                        preferred_element_type=jnp.float32)
    scores = scores + bias[None]

    scores = scores - jnp.max(scores, axis=-1, keepdims=True)
    p = jnp.exp(scores)
    denom = jnp.sum(p, axis=-1, keepdims=True)
    if exact_softmax:
        attn = p / denom                                  # exact (returned map)
    else:
        attn = p * pl.reciprocal(denom, approx=True)      # EUP slot, internal

    # Context, batched over heads: [nh, T, hd] f32.
    ctx = jnp.einsum('hts,hsd->htd', attn.astype(jnp.bfloat16), vh,
                     preferred_element_type=jnp.float32)

    # Re-concatenate heads ([T, nh, hd] -> [T, H]) and do ONE K=H projection.
    ctx2d = pltpu.einshape("ntd->tnd", ctx).reshape(T, H)
    out = jnp.dot(ctx2d.astype(jnp.bfloat16), wo,
                  preferred_element_type=jnp.float32) + bo            # [T, H]
    return out, attn


# ----------------------------------------------------------------------------
# Fused decoder-layer kernel (one batch element per grid step).
# ----------------------------------------------------------------------------
def _decoder_layer_kernel(nh, hd, causal, *refs):
    out_ref, attn_ref = refs[-2], refs[-1]
    trg_ref, enc_ref = refs[0], refs[1]
    if causal:
        smask_ref = refs[2]
        prm = refs[3:-2]
    else:
        tmask_ref, smask_ref = refs[2], refs[3]
        prm = refs[4:-2]

    (swq, sbq, swk, sbk, swv, sbv, swo, sbo, g1, be1,
     cwq, cbq, cwk, cbk, cwv, cbv, cwo, cbo, g2, be2,
     w1, b1, w2, b2, g3, be3) = prm

    x0 = trg_ref[0]          # [T, H] f32
    enc = enc_ref[0]         # [S, H] f32
    T = x0.shape[0]

    # --- additive mask biases (built once per grid step, f32) ---------------
    if causal:
        rows = jax.lax.broadcasted_iota(jnp.int32, (T, T), 0)
        cols = jax.lax.broadcasted_iota(jnp.int32, (T, T), 1)
        self_bias = jnp.where(rows >= cols, jnp.float32(0.0),
                              jnp.float32(NEG_INF))            # [T, T]
    else:
        self_bias = jnp.where(tmask_ref[0] == 0, jnp.float32(NEG_INF),
                              jnp.float32(0.0))                # [Qt, T]
    cross_bias = jnp.where(smask_ref[0] == 0, jnp.float32(NEG_INF),
                           jnp.float32(0.0))                   # [Qs, S]

    # --- self attention + residual + LN (map NOT written to HBM) ------------
    sa, _ = _mha(x0, x0, self_bias,
                 swq[...], sbq[0], swk[...], sbk[0],
                 swv[...], sbv[0], swo[...], sbo[0], nh, hd,
                 exact_softmax=False)
    x1 = _layer_norm(x0 + sa, g1[0], be1[0])

    # --- cross attention + residual + LN (this map is returned) -------------
    ca, attn = _mha(x1, enc, cross_bias,
                    cwq[...], cbq[0], cwk[...], cbk[0],
                    cwv[...], cbv[0], cwo[...], cbo[0], nh, hd,
                    exact_softmax=True)
    x2 = _layer_norm(x1 + ca, g2[0], be2[0])

    # --- position-wise FFN, chunked over PF + residual + LN ------------------
    x2_16 = x2.astype(jnp.bfloat16)
    PF = w1.shape[1]
    ck = min(PF, 512)
    f = None
    for c0 in range(0, PF, ck):               # static chunk loop
        c1 = min(c0 + ck, PF)
        h = jnp.dot(x2_16, w1[:, c0:c1],
                    preferred_element_type=jnp.float32) + b1[0, c0:c1]
        h = jnp.maximum(h, 0.0)
        part = jnp.dot(h.astype(jnp.bfloat16), w2[c0:c1, :],
                       preferred_element_type=jnp.float32)
        f = part if f is None else f + part
    f = f + b2[0]

    out_ref[0] = _layer_norm(x2 + f, g3[0], be3[0])
    attn_ref[0] = attn.astype(attn_ref.dtype)


# ----------------------------------------------------------------------------
# DecoderLayer forward wrapper.
# ----------------------------------------------------------------------------
def decoder_layer_forward(trg, enc_src, trg_mask, src_mask, params, n_heads,
                          *, trg_mask_is_causal=False, attn_dtype=jnp.float32):
    """trg: [B,T,H], enc_src: [B,S,H], trg_mask: [B,1,T,T], src_mask: [B,1,1,S].

    If trg_mask_is_causal=True the target mask is assumed to be the standard
    lower-triangular causal mask and is generated in-kernel (trg_mask is not
    streamed from HBM).  Default False keeps the fully general mask semantics.
    """
    B, T, H = trg.shape
    S = enc_src.shape[1]
    hd = H // n_heads
    w1, b1, w2, b2 = params["ffn"]
    PF = w1.shape[1]

    # Compact masks (no [B,T,S] f32 broadcast in HBM); broadcast in-kernel.
    smask = src_mask[:, 0].astype(jnp.float32)            # [B, Qs, S]
    Qs = smask.shape[1]
    mask_specs = []
    mask_args = []
    Qt = 0
    if not trg_mask_is_causal:
        tmask = trg_mask[:, 0].astype(jnp.float32)        # [B, Qt, T]
        Qt = tmask.shape[1]
        mask_specs.append(pl.BlockSpec((1, Qt, T), lambda i: (i, 0, 0)))
        mask_args.append(tmask)
    mask_specs.append(pl.BlockSpec((1, Qs, S), lambda i: (i, 0, 0)))
    mask_args.append(smask)

    # Constant parameter blocks: same block every grid step -> single-buffer.
    def const(shape):
        nd = len(shape)
        return pl.BlockSpec(shape, lambda i, _n=nd: (0,) * _n,
                            pipeline_mode=pl.Buffered(1))

    def attn_inputs(p):
        wq, bq, wk, bk, wv, bv, wo, bo = p
        return [wq.astype(jnp.bfloat16), bq,
                wk.astype(jnp.bfloat16), bk,
                wv.astype(jnp.bfloat16), bv,
                wo.astype(jnp.bfloat16), bo]

    attn_specs = [const((H, H)), const((1, H)),
                  const((H, H)), const((1, H)),
                  const((H, H)), const((1, H)),
                  const((H, H)), const((1, H))]
    ln_specs = [const((1, H)), const((1, H))]
    ffn_specs = [const((H, PF)), const((1, PF)), const((PF, H)), const((1, H))]

    data_specs = [pl.BlockSpec((1, T, H), lambda i: (i, 0, 0)),
                  pl.BlockSpec((1, S, H), lambda i: (i, 0, 0))]

    in_specs = (data_specs + mask_specs
                + attn_specs + ln_specs
                + attn_specs + ln_specs
                + ffn_specs + ln_specs)

    args = ([trg, enc_src] + mask_args
            + attn_inputs(params["self_attn"]) + list(params["ln1"])
            + attn_inputs(params["enc_attn"]) + list(params["ln2"])
            + [w1.astype(jnp.bfloat16), b1, w2.astype(jnp.bfloat16), b2]
            + list(params["ln3"]))

    # --- VMEM budget hint computed from the actual block sizes --------------
    BF, F4 = 2, 4
    attn_isz = jnp.dtype(attn_dtype).itemsize
    param_bytes = (2 * (4 * H * H * BF + 4 * H * F4)              # 2 attn blocks
                   + H * PF * BF + PF * F4 + PF * H * BF + H * F4  # FFN
                   + 6 * H * F4)                                    # 3 LayerNorms
    act_in = (T * H + S * H + Qs * S + Qt * T) * F4
    act_out = T * H * F4 + n_heads * T * S * attn_isz
    work = (6 * (T + S) * H * F4                       # q/k/v + head-major copies
            + 4 * n_heads * T * max(T, S) * F4         # scores + probs (x2 attns)
            + 2 * T * min(PF, 512) * F4)               # FFN chunk intermediates
    est = param_bytes + 2 * (act_in + act_out) + work
    try:
        vmem_cap = pltpu.get_tpu_info().vmem_capacity_bytes
    except Exception:
        vmem_cap = 64 * 1024 * 1024
    vmem_limit = int(min(max(32 * 1024 * 1024, int(est * 1.25)),
                         int(0.85 * vmem_cap)))

    out, attn = pl.pallas_call(
        functools.partial(_decoder_layer_kernel, n_heads, hd,
                          trg_mask_is_causal),
        out_shape=(jax.ShapeDtypeStruct((B, T, H), jnp.float32),
                   jax.ShapeDtypeStruct((B, n_heads, T, S), attn_dtype)),
        grid=(B,),
        in_specs=in_specs,
        out_specs=(pl.BlockSpec((1, T, H), lambda i: (i, 0, 0)),
                   pl.BlockSpec((1, n_heads, T, S), lambda i: (i, 0, 0, 0))),
        compiler_params=pltpu.CompilerParams(
            dimension_semantics=("parallel",),
            vmem_limit_bytes=vmem_limit),
    )(*args)
    return out, attn


# ----------------------------------------------------------------------------
# Pure-JAX reference (mirrors the PyTorch module, eval mode, f32 math).
# ----------------------------------------------------------------------------
def _ref_mha(q_in, kv_in, mask, p, nh):
    wq, bq, wk, bk, wv, bv, wo, bo = p
    B, T, H = q_in.shape
    S = kv_in.shape[1]
    hd = H // nh
    Q = q_in @ wq + bq[0]
    K = kv_in @ wk + bk[0]
    V = kv_in @ wv + bv[0]
    Q = Q.reshape(B, T, nh, hd).transpose(0, 2, 1, 3)
    K = K.reshape(B, S, nh, hd).transpose(0, 2, 1, 3)
    V = V.reshape(B, S, nh, hd).transpose(0, 2, 1, 3)
    energy = jnp.einsum("bhtd,bhsd->bhts", Q, K) / math.sqrt(hd)
    energy = jnp.where(mask == 0, NEG_INF, energy)
    attn = jax.nn.softmax(energy, axis=-1)
    x = jnp.einsum("bhts,bhsd->bhtd", attn, V)
    x = x.transpose(0, 2, 1, 3).reshape(B, T, H)
    return x @ wo + bo[0], attn


def _ref_ln(x, gamma, beta):
    mean = jnp.mean(x, axis=-1, keepdims=True)
    var = jnp.mean((x - mean) ** 2, axis=-1, keepdims=True)
    return (x - mean) * jax.lax.rsqrt(var + EPS) * gamma[0] + beta[0]


def decoder_layer_reference(trg, enc_src, trg_mask, src_mask, params, nh):
    a, _ = _ref_mha(trg, trg, trg_mask, params["self_attn"], nh)
    trg = _ref_ln(trg + a, *params["ln1"])
    a, attn = _ref_mha(trg, enc_src, src_mask, params["enc_attn"], nh)
    trg = _ref_ln(trg + a, *params["ln2"])
    w1, b1, w2, b2 = params["ffn"]
    f = jnp.maximum(trg @ w1 + b1[0], 0.0) @ w2 + b2[0]
    trg = _ref_ln(trg + f, *params["ln3"])
    return trg, attn


# ----------------------------------------------------------------------------
# Deterministic parameter construction and demo.
# ----------------------------------------------------------------------------
def make_params(key, hid_dim, pf_dim):
    def lin(k, din, dout):
        kw, kb = jax.random.split(k)
        w = jax.random.normal(kw, (din, dout), jnp.float32) * 0.1
        b = jax.random.normal(kb, (1, dout), jnp.float32) * 0.1
        return w, b

    keys = jax.random.split(key, 8)

    def attn_params(k):
        ks = jax.random.split(k, 4)
        wq, bq = lin(ks[0], hid_dim, hid_dim)
        wk, bk = lin(ks[1], hid_dim, hid_dim)
        wv, bv = lin(ks[2], hid_dim, hid_dim)
        wo, bo = lin(ks[3], hid_dim, hid_dim)
        return (wq, bq, wk, bk, wv, bv, wo, bo)

    ln = lambda: (jnp.ones((1, hid_dim), jnp.float32),
                  jnp.zeros((1, hid_dim), jnp.float32))

    w1, b1 = lin(keys[2], hid_dim, pf_dim)
    w2, b2 = lin(keys[3], pf_dim, hid_dim)

    return {
        "self_attn": attn_params(keys[0]),
        "enc_attn": attn_params(keys[1]),
        "ffn": (w1, b1, w2, b2),
        "ln1": ln(), "ln2": ln(), "ln3": ln(),
    }


if __name__ == "__main__":
    B, T, S, H, NH, PF = 2, 8, 8, 32, 4, 64

    key = jax.random.PRNGKey(0)
    k_trg, k_enc, k_par = jax.random.split(key, 3)

    trg = jax.random.normal(k_trg, (B, T, H), jnp.float32)
    enc_src = jax.random.normal(k_enc, (B, S, H), jnp.float32)

    # Causal target mask [B,1,T,T]; source padding mask [B,1,1,S].
    trg_mask = jnp.tril(jnp.ones((T, T), jnp.float32))[None, None].repeat(B, 0)
    src_valid = jnp.array([[1] * S, [1] * (S - 2) + [0, 0]], jnp.float32)
    src_mask = src_valid[:, None, None, :]

    params = make_params(k_par, H, PF)

    # Optimized path: causal target mask generated in-kernel (no T*T HBM read).
    out_c, attn_c = decoder_layer_forward(trg, enc_src, trg_mask, src_mask,
                                          params, NH, trg_mask_is_causal=True)
    # General path: arbitrary target mask streamed (full module semantics).
    out_g, attn_g = decoder_layer_forward(trg, enc_src, trg_mask, src_mask,
                                          params, NH)
    out_c, attn_c, out_g, attn_g = jax.block_until_ready(
        (out_c, attn_c, out_g, attn_g))

    ref_out, ref_attn = decoder_layer_reference(trg, enc_src, trg_mask,
                                                src_mask, params, NH)

    # Tolerances account for bf16 matmul operands (f32 accumulation) at these
    # demo shapes; re-validate tolerances at production H/PF/T.
    for out, attn in ((out_c, attn_c), (out_g, attn_g)):
        assert out.shape == (B, T, H)
        assert attn.shape == (B, NH, T, S)
        assert jnp.allclose(out, ref_out, atol=8e-2, rtol=8e-2), \
            float(jnp.max(jnp.abs(out - ref_out)))
        assert jnp.allclose(attn, ref_attn, atol=4e-2, rtol=4e-2), \
            float(jnp.max(jnp.abs(attn - ref_attn)))

    print("KERNEL_OK")
</pallas_src>

<mosaic_0001>
module attributes {stable_mosaic.version = 11 : i64} {
  func.func @_decoder_layer_kernel(%arg0: i32, %arg1: memref<1x8x32xf32, #tpu.memory_space<vmem>>, %arg2: memref<1x8x32xf32, #tpu.memory_space<vmem>>, %arg3: memref<1x1x8xf32, #tpu.memory_space<vmem>>, %arg4: memref<32x32xbf16, #tpu.memory_space<vmem>>, %arg5: memref<1x32xf32, #tpu.memory_space<vmem>>, %arg6: memref<32x32xbf16, #tpu.memory_space<vmem>>, %arg7: memref<1x32xf32, #tpu.memory_space<vmem>>, %arg8: memref<32x32xbf16, #tpu.memory_space<vmem>>, %arg9: memref<1x32xf32, #tpu.memory_space<vmem>>, %arg10: memref<32x32xbf16, #tpu.memory_space<vmem>>, %arg11: memref<1x32xf32, #tpu.memory_space<vmem>>, %arg12: memref<1x32xf32, #tpu.memory_space<vmem>>, %arg13: memref<1x32xf32, #tpu.memory_space<vmem>>, %arg14: memref<32x32xbf16, #tpu.memory_space<vmem>>, %arg15: memref<1x32xf32, #tpu.memory_space<vmem>>, %arg16: memref<32x32xbf16, #tpu.memory_space<vmem>>, %arg17: memref<1x32xf32, #tpu.memory_space<vmem>>, %arg18: memref<32x32xbf16, #tpu.memory_space<vmem>>, %arg19: memref<1x32xf32, #tpu.memory_space<vmem>>, %arg20: memref<32x32xbf16, #tpu.memory_space<vmem>>, %arg21: memref<1x32xf32, #tpu.memory_space<vmem>>, %arg22: memref<1x32xf32, #tpu.memory_space<vmem>>, %arg23: memref<1x32xf32, #tpu.memory_space<vmem>>, %arg24: memref<32x64xbf16, #tpu.memory_space<vmem>>, %arg25: memref<1x64xf32, #tpu.memory_space<vmem>>, %arg26: memref<64x32xbf16, #tpu.memory_space<vmem>>, %arg27: memref<1x32xf32, #tpu.memory_space<vmem>>, %arg28: memref<1x32xf32, #tpu.memory_space<vmem>>, %arg29: memref<1x32xf32, #tpu.memory_space<vmem>>, %arg30: memref<1x8x32xf32, #tpu.memory_space<vmem>>, %arg31: memref<1x4x8x8xf32, #tpu.memory_space<vmem>>) attributes {dimension_semantics = [#tpu.dimension_semantics<parallel>], iteration_bounds = array<i64: 2>, scalar_prefetch = 0 : i64, scratch_operands = 0 : i64, tpu.core_type = #tpu.core_type<tc>, window_params = [{transform_indices = @transform_0, window_bounds = array<i64: 1, 8, 32>}, {transform_indices = @transform_1, window_bounds = array<i64: 1, 8, 32>}, {transform_indices = @transform_2, window_bounds = array<i64: 1, 1, 8>}, {pipeline_mode = #tpu.pipeline_mode<synchronous>, transform_indices = @transform_3, window_bounds = array<i64: 32, 32>}, {pipeline_mode = #tpu.pipeline_mode<synchronous>, transform_indices = @transform_4, window_bounds = array<i64: 1, 32>}, {pipeline_mode = #tpu.pipeline_mode<synchronous>, transform_indices = @transform_5, window_bounds = array<i64: 32, 32>}, {pipeline_mode = #tpu.pipeline_mode<synchronous>, transform_indices = @transform_6, window_bounds = array<i64: 1, 32>}, {pipeline_mode = #tpu.pipeline_mode<synchronous>, transform_indices = @transform_7, window_bounds = array<i64: 32, 32>}, {pipeline_mode = #tpu.pipeline_mode<synchronous>, transform_indices = @transform_8, window_bounds = array<i64: 1, 32>}, {pipeline_mode = #tpu.pipeline_mode<synchronous>, transform_indices = @transform_9, window_bounds = array<i64: 32, 32>}, {pipeline_mode = #tpu.pipeline_mode<synchronous>, transform_indices = @transform_10, window_bounds = array<i64: 1, 32>}, {pipeline_mode = #tpu.pipeline_mode<synchronous>, transform_indices = @transform_11, window_bounds = array<i64: 1, 32>}, {pipeline_mode = #tpu.pipeline_mode<synchronous>, transform_indices = @transform_12, window_bounds = array<i64: 1, 32>}, {pipeline_mode = #tpu.pipeline_mode<synchronous>, transform_indices = @transform_13, window_bounds = array<i64: 32, 32>}, {pipeline_mode = #tpu.pipeline_mode<synchronous>, transform_indices = @transform_14, window_bounds = array<i64: 1, 32>}, {pipeline_mode = #tpu.pipeline_mode<synchronous>, transform_indices = @transform_15, window_bounds = array<i64: 32, 32>}, {pipeline_mode = #tpu.pipeline_mode<synchronous>, transform_indices = @transform_16, window_bounds = array<i64: 1, 32>}, {pipeline_mode = #tpu.pipeline_mode<synchronous>, transform_indices = @transform_17, window_bounds = array<i64: 32, 32>}, {pipeline_mode = #tpu.pipeline_mode<synchronous>, transform_indices = @transform_18, window_bounds = array<i64: 1, 32>}, {pipeline_mode = #tpu.pipeline_mode<synchronous>, transform_indices = @transform_19, window_bounds = array<i64: 32, 32>}, {pipeline_mode = #tpu.pipeline_mode<synchronous>, transform_indices = @transform_20, window_bounds = array<i64: 1, 32>}, {pipeline_mode = #tpu.pipeline_mode<synchronous>, transform_indices = @transform_21, window_bounds = array<i64: 1, 32>}, {pipeline_mode = #tpu.pipeline_mode<synchronous>, transform_indices = @transform_22, window_bounds = array<i64: 1, 32>}, {pipeline_mode = #tpu.pipeline_mode<synchronous>, transform_indices = @transform_23, window_bounds = array<i64: 32, 64>}, {pipeline_mode = #tpu.pipeline_mode<synchronous>, transform_indices = @transform_24, window_bounds = array<i64: 1, 64>}, {pipeline_mode = #tpu.pipeline_mode<synchronous>, transform_indices = @transform_25, window_bounds = array<i64: 64, 32>}, {pipeline_mode = #tpu.pipeline_mode<synchronous>, transform_indices = @transform_26, window_bounds = array<i64: 1, 32>}, {pipeline_mode = #tpu.pipeline_mode<synchronous>, transform_indices = @transform_27, window_bounds = array<i64: 1, 32>}, {pipeline_mode = #tpu.pipeline_mode<synchronous>, transform_indices = @transform_28, window_bounds = array<i64: 1, 32>}, {transform_indices = @transform_29, window_bounds = array<i64: 1, 8, 32>}, {transform_indices = @transform_30, window_bounds = array<i64: 1, 4, 8, 8>}]} {
    %c0 = arith.constant 0 : index
    %c0_0 = arith.constant 0 : index
    %c0_1 = arith.constant 0 : index
    %0 = vector.load %arg1[%c0, %c0_0, %c0_1] : memref<1x8x32xf32, #tpu.memory_space<vmem>>, vector<1x8x32xf32>
    %1 = vector.shape_cast %0 : vector<1x8x32xf32> to vector<8x32xf32>
    %c0_2 = arith.constant 0 : index
    %c0_3 = arith.constant 0 : index
    %c0_4 = arith.constant 0 : index
    %2 = vector.load %arg2[%c0_2, %c0_3, %c0_4] : memref<1x8x32xf32, #tpu.memory_space<vmem>>, vector<1x8x32xf32>
    %3 = vector.shape_cast %2 : vector<1x8x32xf32> to vector<8x32xf32>
    %4 = tpu.iota {dimensions = array<i32: 0>} : vector<8x8xi32>
    %5 = tpu.iota {dimensions = array<i32: 1>} : vector<8x8xi32>
    %6 = arith.cmpi sge, %4, %5 : vector<8x8xi32>
    %cst = arith.constant 0.000000e+00 : f32
    %cst_5 = arith.constant -1.000000e+10 : f32
    %7 = vector.broadcast %cst : f32 to vector<8x8xf32>
    %8 = vector.broadcast %cst_5 : f32 to vector<8x8xf32>
    %9 = arith.select %6, %7, %8 : vector<8x8xi1>, vector<8x8xf32>
    %c0_6 = arith.constant 0 : index
    %c0_7 = arith.constant 0 : index
    %c0_8 = arith.constant 0 : index
    %10 = vector.load %arg3[%c0_6, %c0_7, %c0_8] : memref<1x1x8xf32, #tpu.memory_space<vmem>>, vector<1x1x8xf32>
    %11 = vector.shape_cast %10 : vector<1x1x8xf32> to vector<1x8xf32>
    %cst_9 = arith.constant 0.000000e+00 : f32
    %12 = vector.broadcast %cst_9 : f32 to vector<1x8xf32>
    %13 = arith.cmpf oeq, %11, %12 : vector<1x8xf32>
    %cst_10 = arith.constant -1.000000e+10 : f32
    %cst_11 = arith.constant 0.000000e+00 : f32
    %14 = vector.broadcast %cst_10 : f32 to vector<1x8xf32>
    %15 = vector.broadcast %cst_11 : f32 to vector<1x8xf32>
    %16 = arith.select %13, %14, %15 : vector<1x8xi1>, vector<1x8xf32>
    %c0_12 = arith.constant 0 : index
    %c0_13 = arith.constant 0 : index
    %17 = vector.load %arg4[%c0_12, %c0_13] : memref<32x32xbf16, #tpu.memory_space<vmem>>, vector<32x32xbf16>
    %c0_14 = arith.constant 0 : index
    %c0_15 = arith.constant 0 : index
    %18 = vector.load %arg5[%c0_14, %c0_15] : memref<1x32xf32, #tpu.memory_space<vmem>>, vector<1x32xf32>
    %19 = vector.shape_cast %18 : vector<1x32xf32> to vector<32xf32>
    %c0_16 = arith.constant 0 : index
    %c0_17 = arith.constant 0 : index
    %20 = vector.load %arg6[%c0_16, %c0_17] : memref<32x32xbf16, #tpu.memory_space<vmem>>, vector<32x32xbf16>
    %c0_18 = arith.constant 0 : index
    %c0_19 = arith.constant 0 : index
    %21 = vector.load %arg7[%c0_18, %c0_19] : memref<1x32xf32, #tpu.memory_space<vmem>>, vector<1x32xf32>
    %22 = vector.shape_cast %21 : vector<1x32xf32> to vector<32xf32>
    %c0_20 = arith.constant 0 : index
    %c0_21 = arith.constant 0 : index
    %23 = vector.load %arg8[%c0_20, %c0_21] : memref<32x32xbf16, #tpu.memory_space<vmem>>, vector<32x32xbf16>
    %c0_22 = arith.constant 0 : index
    %c0_23 = arith.constant 0 : index
    %24 = vector.load %arg9[%c0_22, %c0_23] : memref<1x32xf32, #tpu.memory_space<vmem>>, vector<1x32xf32>
    %25 = vector.shape_cast %24 : vector<1x32xf32> to vector<32xf32>
    %c0_24 = arith.constant 0 : index
    %c0_25 = arith.constant 0 : index
    %26 = vector.load %arg10[%c0_24, %c0_25] : memref<32x32xbf16, #tpu.memory_space<vmem>>, vector<32x32xbf16>
    %c0_26 = arith.constant 0 : index
    %c0_27 = arith.constant 0 : index
    %27 = vector.load %arg11[%c0_26, %c0_27] : memref<1x32xf32, #tpu.memory_space<vmem>>, vector<1x32xf32>
    %28 = vector.shape_cast %27 : vector<1x32xf32> to vector<32xf32>
    %29 = arith.truncf %1 : vector<8x32xf32> to vector<8x32xbf16>
    %30 = arith.truncf %1 : vector<8x32xf32> to vector<8x32xbf16>
    %cst_28 = arith.constant dense<0.000000e+00> : vector<8x32xf32>
    %31 = tpu.matmul %29, %17, %cst_28 {dimension_numbers = #tpu.dot_dimension_numbers<[1], [0], [0], [1], [0, 0, 1, 1], [], []>} : vector<8x32xbf16>, vector<32x32xbf16>, vector<8x32xf32> -> vector<8x32xf32>
    %32 = vector.shape_cast %19 : vector<32xf32> to vector<1x32xf32>
    %33 = vector.broadcast %32 : vector<1x32xf32> to vector<8x32xf32>
    %34 = arith.addf %31, %33 : vector<8x32xf32>
    %cst_29 = arith.constant dense<0.000000e+00> : vector<8x32xf32>
    %35 = tpu.matmul %30, %20, %cst_29 {dimension_numbers = #tpu.dot_dimension_numbers<[1], [0], [0], [1], [0, 0, 1, 1], [], []>} : vector<8x32xbf16>, vector<32x32xbf16>, vector<8x32xf32> -> vector<8x32xf32>
    %36 = vector.shape_cast %22 : vector<32xf32> to vector<1x32xf32>
    %37 = vector.broadcast %36 : vector<1x32xf32> to vector<8x32xf32>
    %38 = arith.addf %35, %37 : vector<8x32xf32>
    %cst_30 = arith.constant dense<0.000000e+00> : vector<8x32xf32>
    %39 = tpu.matmul %30, %23, %cst_30 {dimension_numbers = #tpu.dot_dimension_numbers<[1], [0], [0], [1], [0, 0, 1, 1], [], []>} : vector<8x32xbf16>, vector<32x32xbf16>, vector<8x32xf32> -> vector<8x32xf32>
    %40 = vector.shape_cast %25 : vector<32xf32> to vector<1x32xf32>
    %41 = vector.broadcast %40 : vector<1x32xf32> to vector<8x32xf32>
    %42 = arith.addf %39, %41 : vector<8x32xf32>
    %cst_31 = arith.constant 0.353553385 : f32
    %43 = vector.broadcast %cst_31 : f32 to vector<8x32xf32>
    %44 = arith.mulf %34, %43 : vector<8x32xf32>
    %45 = vector.shape_cast %44 : vector<8x32xf32> to vector<8x4x8xf32>
    %46 = tpu.transpose %45, [1, 0, 2] : vector<8x4x8xf32> -> vector<4x8x8xf32>
    %47 = arith.truncf %46 : vector<4x8x8xf32> to vector<4x8x8xbf16>
    %48 = vector.shape_cast %38 : vector<8x32xf32> to vector<8x4x8xf32>
    %49 = tpu.transpose %48, [1, 0, 2] : vector<8x4x8xf32> -> vector<4x8x8xf32>
    %50 = arith.truncf %49 : vector<4x8x8xf32> to vector<4x8x8xbf16>
    %51 = vector.shape_cast %42 : vector<8x32xf32> to vector<8x4x8xf32>
    %52 = tpu.transpose %51, [1, 0, 2] : vector<8x4x8xf32> -> vector<4x8x8xf32>
    %53 = arith.truncf %52 : vector<4x8x8xf32> to vector<4x8x8xbf16>
    "tpu.trace_start"() <{level = 10 : i32, message = "htd,hsd->hts"}> : () -> ()
    %cst_32 = arith.constant dense<0.000000e+00> : vector<4x8x8xf32>
    %54 = tpu.matmul %47, %50, %cst_32 {dimension_numbers = #tpu.dot_dimension_numbers<[2], [2], [1], [1], [0, 0, 0, 1, 1, 1], [0], [0]>} : vector<4x8x8xbf16>, vector<4x8x8xbf16>, vector<4x8x8xf32> -> vector<4x8x8xf32>
    "tpu.trace_stop"() : () -> ()
    %55 = vector.shape_cast %9 : vector<8x8xf32> to vector<1x8x8xf32>
    %56 = vector.broadcast %55 : vector<1x8x8xf32> to vector<4x8x8xf32>
    %57 = arith.addf %54, %56 : vector<4x8x8xf32>
    %cst_33 = arith.constant dense<0xFF800000> : vector<4x8xf32>
    %58 = vector.multi_reduction <maximumf>, %57, %cst_33 [2] : vector<4x8x8xf32> to vector<4x8xf32>
    %59 = vector.shape_cast %58 : vector<4x8xf32> to vector<4x8x1xf32>
    %60 = vector.broadcast %59 : vector<4x8x1xf32> to vector<4x8x8xf32>
    %61 = arith.subf %57, %60 : vector<4x8x8xf32>
    %62 = math.exp %61 : vector<4x8x8xf32>
    %cst_34 = arith.constant dense<0.000000e+00> : vector<4x8xf32>
    %63 = vector.multi_reduction <add>, %62, %cst_34 [2] : vector<4x8x8xf32> to vector<4x8xf32>
    %64 = vector.shape_cast %63 : vector<4x8xf32> to vector<4x8x1xf32>
    %65 = tpu.reciprocal %64 {approx = true} : vector<4x8x1xf32> -> vector<4x8x1xf32>
    %66 = vector.broadcast %65 : vector<4x8x1xf32> to vector<4x8x8xf32>
    %67 = arith.mulf %62, %66 : vector<4x8x8xf32>
    %68 = arith.truncf %67 : vector<4x8x8xf32> to vector<4x8x8xbf16>
    "tpu.trace_start"() <{level = 10 : i32, message = "hts,hsd->htd"}> : () -> ()
    %cst_35 = arith.constant dense<0.000000e+00> : vector<4x8x8xf32>
    %69 = tpu.matmul %68, %53, %cst_35 {dimension_numbers = #tpu.dot_dimension_numbers<[2], [1], [1], [2], [0, 0, 0, 1, 1, 2], [0], [0]>} : vector<4x8x8xbf16>, vector<4x8x8xbf16>, vector<4x8x8xf32> -> vector<4x8x8xf32>
    "tpu.trace_stop"() : () -> ()
    %70 = tpu.transpose %69, [1, 0, 2] : vector<4x8x8xf32> -> vector<8x4x8xf32>
    %71 = vector.shape_cast %70 : vector<8x4x8xf32> to vector<8x32xf32>
    %72 = arith.truncf %71 : vector<8x32xf32> to vector<8x32xbf16>
    %cst_36 = arith.constant dense<0.000000e+00> : vector<8x32xf32>
    %73 = tpu.matmul %72, %26, %cst_36 {dimension_numbers = #tpu.dot_dimension_numbers<[1], [0], [0], [1], [0, 0, 1, 1], [], []>} : vector<8x32xbf16>, vector<32x32xbf16>, vector<8x32xf32> -> vector<8x32xf32>
    %74 = vector.shape_cast %28 : vector<32xf32> to vector<1x32xf32>
    %75 = vector.broadcast %74 : vector<1x32xf32> to vector<8x32xf32>
    %76 = arith.addf %73, %75 : vector<8x32xf32>
    %77 = arith.addf %1, %76 : vector<8x32xf32>
    %c0_37 = arith.constant 0 : index
    %c0_38 = arith.constant 0 : index
    %78 = vector.load %arg12[%c0_37, %c0_38] : memref<1x32xf32, #tpu.memory_space<vmem>>, vector<1x32xf32>
    %79 = vector.shape_cast %78 : vector<1x32xf32> to vector<32xf32>
    %c0_39 = arith.constant 0 : index
    %c0_40 = arith.constant 0 : index
    %80 = vector.load %arg13[%c0_39, %c0_40] : memref<1x32xf32, #tpu.memory_space<vmem>>, vector<1x32xf32>
    %81 = vector.shape_cast %80 : vector<1x32xf32> to vector<32xf32>
    %cst_41 = arith.constant dense<0.000000e+00> : vector<8xf32>
    %82 = vector.multi_reduction <add>, %77, %cst_41 [1] : vector<8x32xf32> to vector<8xf32>
    %83 = vector.shape_cast %82 : vector<8xf32> to vector<8x1xf32>
    %cst_42 = arith.constant 3.200000e+01 : f32
    %84 = vector.broadcast %cst_42 : f32 to vector<8x1xf32>
    %85 = arith.divf %83, %84 : vector<8x1xf32>
    %86 = vector.broadcast %85 : vector<8x1xf32> to vector<8x32xf32>
    %87 = arith.subf %77, %86 : vector<8x32xf32>
    %88 = arith.mulf %87, %87 : vector<8x32xf32>
    %cst_43 = arith.constant dense<0.000000e+00> : vector<8xf32>
    %89 = vector.multi_reduction <add>, %88, %cst_43 [1] : vector<8x32xf32> to vector<8xf32>
    %90 = vector.shape_cast %89 : vector<8xf32> to vector<8x1xf32>
    %cst_44 = arith.constant 3.200000e+01 : f32
    %91 = vector.broadcast %cst_44 : f32 to vector<8x1xf32>
    %92 = arith.divf %90, %91 : vector<8x1xf32>
    %93 = vector.broadcast %85 : vector<8x1xf32> to vector<8x32xf32>
    %94 = arith.subf %77, %93 : vector<8x32xf32>
    %cst_45 = arith.constant 9.99999974E-6 : f32
    %95 = vector.broadcast %cst_45 : f32 to vector<8x1xf32>
    %96 = arith.addf %92, %95 : vector<8x1xf32>
    %97 = math.rsqrt %96 : vector<8x1xf32>
    %98 = vector.broadcast %97 : vector<8x1xf32> to vector<8x32xf32>
    %99 = arith.mulf %94, %98 : vector<8x32xf32>
    %100 = vector.shape_cast %79 : vector<32xf32> to vector<1x32xf32>
    %101 = vector.broadcast %100 : vector<1x32xf32> to vector<8x32xf32>
    %102 = arith.mulf %99, %101 : vector<8x32xf32>
    %103 = vector.shape_cast %81 : vector<32xf32> to vector<1x32xf32>
    %104 = vector.broadcast %103 : vector<1x32xf32> to vector<8x32xf32>
    %105 = arith.addf %102, %104 : vector<8x32xf32>
    %c0_46 = arith.constant 0 : index
    %c0_47 = arith.constant 0 : index
    %106 = vector.load %arg14[%c0_46, %c0_47] : memref<32x32xbf16, #tpu.memory_space<vmem>>, vector<32x32xbf16>
    %c0_48 = arith.constant 0 : index
    %c0_49 = arith.constant 0 : index
    %107 = vector.load %arg15[%c0_48, %c0_49] : memref<1x32xf32, #tpu.memory_space<vmem>>, vector<1x32xf32>
    %108 = vector.shape_cast %107 : vector<1x32xf32> to vector<32xf32>
    %c0_50 = arith.constant 0 : index
    %c0_51 = arith.constant 0 : index
    %109 = vector.load %arg16[%c0_50, %c0_51] : memref<32x32xbf16, #tpu.memory_space<vmem>>, vector<32x32xbf16>
    %c0_52 = arith.constant 0 : index
    %c0_53 = arith.constant 0 : index
    %110 = vector.load %arg17[%c0_52, %c0_53] : memref<1x32xf32, #tpu.memory_space<vmem>>, vector<1x32xf32>
    %111 = vector.shape_cast %110 : vector<1x32xf32> to vector<32xf32>
    %c0_54 = arith.constant 0 : index
    %c0_55 = arith.constant 0 : index
    %112 = vector.load %arg18[%c0_54, %c0_55] : memref<32x32xbf16, #tpu.memory_space<vmem>>, vector<32x32xbf16>
    %c0_56 = arith.constant 0 : index
    %c0_57 = arith.constant 0 : index
    %113 = vector.load %arg19[%c0_56, %c0_57] : memref<1x32xf32, #tpu.memory_space<vmem>>, vector<1x32xf32>
    %114 = vector.shape_cast %113 : vector<1x32xf32> to vector<32xf32>
    %c0_58 = arith.constant 0 : index
    %c0_59 = arith.constant 0 : index
    %115 = vector.load %arg20[%c0_58, %c0_59] : memref<32x32xbf16, #tpu.memory_space<vmem>>, vector<32x32xbf16>
    %c0_60 = arith.constant 0 : index
    %c0_61 = arith.constant 0 : index
    %116 = vector.load %arg21[%c0_60, %c0_61] : memref<1x32xf32, #tpu.memory_space<vmem>>, vector<1x32xf32>
    %117 = vector.shape_cast %116 : vector<1x32xf32> to vector<32xf32>
    %118 = arith.truncf %105 : vector<8x32xf32> to vector<8x32xbf16>
    %119 = arith.truncf %3 : vector<8x32xf32> to vector<8x32xbf16>
    %cst_62 = arith.constant dense<0.000000e+00> : vector<8x32xf32>
    %120 = tpu.matmul %118, %106, %cst_62 {dimension_numbers = #tpu.dot_dimension_numbers<[1], [0], [0], [1], [0, 0, 1, 1], [], []>} : vector<8x32xbf16>, vector<32x32xbf16>, vector<8x32xf32> -> vector<8x32xf32>
    %121 = vector.shape_cast %108 : vector<32xf32> to vector<1x32xf32>
    %122 = vector.broadcast %121 : vector<1x32xf32> to vector<8x32xf32>
    %123 = arith.addf %120, %122 : vector<8x32xf32>
    %cst_63 = arith.constant dense<0.000000e+00> : vector<8x32xf32>
    %124 = tpu.matmul %119, %109, %cst_63 {dimension_numbers = #tpu.dot_dimension_numbers<[1], [0], [0], [1], [0, 0, 1, 1], [], []>} : vector<8x32xbf16>, vector<32x32xbf16>, vector<8x32xf32> -> vector<8x32xf32>
    %125 = vector.shape_cast %111 : vector<32xf32> to vector<1x32xf32>
    %126 = vector.broadcast %125 : vector<1x32xf32> to vector<8x32xf32>
    %127 = arith.addf %124, %126 : vector<8x32xf32>
    %cst_64 = arith.constant dense<0.000000e+00> : vector<8x32xf32>
    %128 = tpu.matmul %119, %112, %cst_64 {dimension_numbers = #tpu.dot_dimension_numbers<[1], [0], [0], [1], [0, 0, 1, 1], [], []>} : vector<8x32xbf16>, vector<32x32xbf16>, vector<8x32xf32> -> vector<8x32xf32>
    %129 = vector.shape_cast %114 : vector<32xf32> to vector<1x32xf32>
    %130 = vector.broadcast %129 : vector<1x32xf32> to vector<8x32xf32>
    %131 = arith.addf %128, %130 : vector<8x32xf32>
    %cst_65 = arith.constant 0.353553385 : f32
    %132 = vector.broadcast %cst_65 : f32 to vector<8x32xf32>
    %133 = arith.mulf %123, %132 : vector<8x32xf32>
    %134 = vector.shape_cast %133 : vector<8x32xf32> to vector<8x4x8xf32>
    %135 = tpu.transpose %134, [1, 0, 2] : vector<8x4x8xf32> -> vector<4x8x8xf32>
    %136 = arith.truncf %135 : vector<4x8x8xf32> to vector<4x8x8xbf16>
    %137 = vector.shape_cast %127 : vector<8x32xf32> to vector<8x4x8xf32>
    %138 = tpu.transpose %137, [1, 0, 2] : vector<8x4x8xf32> -> vector<4x8x8xf32>
    %139 = arith.truncf %138 : vector<4x8x8xf32> to vector<4x8x8xbf16>
    %140 = vector.shape_cast %131 : vector<8x32xf32> to vector<8x4x8xf32>
    %141 = tpu.transpose %140, [1, 0, 2] : vector<8x4x8xf32> -> vector<4x8x8xf32>
    %142 = arith.truncf %141 : vector<4x8x8xf32> to vector<4x8x8xbf16>
    "tpu.trace_start"() <{level = 10 : i32, message = "htd,hsd->hts"}> : () -> ()
    %cst_66 = arith.constant dense<0.000000e+00> : vector<4x8x8xf32>
    %143 = tpu.matmul %136, %139, %cst_66 {dimension_numbers = #tpu.dot_dimension_numbers<[2], [2], [1], [1], [0, 0, 0, 1, 1, 1], [0], [0]>} : vector<4x8x8xbf16>, vector<4x8x8xbf16>, vector<4x8x8xf32> -> vector<4x8x8xf32>
    "tpu.trace_stop"() : () -> ()
    %144 = vector.shape_cast %16 : vector<1x8xf32> to vector<1x1x8xf32>
    %145 = vector.broadcast %144 : vector<1x1x8xf32> to vector<4x8x8xf32>
    %146 = arith.addf %143, %145 : vector<4x8x8xf32>
    %cst_67 = arith.constant dense<0xFF800000> : vector<4x8xf32>
    %147 = vector.multi_reduction <maximumf>, %146, %cst_67 [2] : vector<4x8x8xf32> to vector<4x8xf32>
    %148 = vector.shape_cast %147 : vector<4x8xf32> to vector<4x8x1xf32>
    %149 = vector.broadcast %148 : vector<4x8x1xf32> to vector<4x8x8xf32>
    %150 = arith.subf %146, %149 : vector<4x8x8xf32>
    %151 = math.exp %150 : vector<4x8x8xf32>
    %cst_68 = arith.constant dense<0.000000e+00> : vector<4x8xf32>
    %152 = vector.multi_reduction <add>, %151, %cst_68 [2] : vector<4x8x8xf32> to vector<4x8xf32>
    %153 = vector.shape_cast %152 : vector<4x8xf32> to vector<4x8x1xf32>
    %154 = vector.broadcast %153 : vector<4x8x1xf32> to vector<4x8x8xf32>
    %155 = arith.divf %151, %154 : vector<4x8x8xf32>
    %156 = arith.truncf %155 : vector<4x8x8xf32> to vector<4x8x8xbf16>
    "tpu.trace_start"() <{level = 10 : i32, message = "hts,hsd->htd"}> : () -> ()
    %cst_69 = arith.constant dense<0.000000e+00> : vector<4x8x8xf32>
    %157 = tpu.matmul %156, %142, %cst_69 {dimension_numbers = #tpu.dot_dimension_numbers<[2], [1], [1], [2], [0, 0, 0, 1, 1, 2], [0], [0]>} : vector<4x8x8xbf16>, vector<4x8x8xbf16>, vector<4x8x8xf32> -> vector<4x8x8xf32>
    "tpu.trace_stop"() : () -> ()
    %158 = tpu.transpose %157, [1, 0, 2] : vector<4x8x8xf32> -> vector<8x4x8xf32>
    %159 = vector.shape_cast %158 : vector<8x4x8xf32> to vector<8x32xf32>
    %160 = arith.truncf %159 : vector<8x32xf32> to vector<8x32xbf16>
    %cst_70 = arith.constant dense<0.000000e+00> : vector<8x32xf32>
    %161 = tpu.matmul %160, %115, %cst_70 {dimension_numbers = #tpu.dot_dimension_numbers<[1], [0], [0], [1], [0, 0, 1, 1], [], []>} : vector<8x32xbf16>, vector<32x32xbf16>, vector<8x32xf32> -> vector<8x32xf32>
    %162 = vector.shape_cast %117 : vector<32xf32> to vector<1x32xf32>
    %163 = vector.broadcast %162 : vector<1x32xf32> to vector<8x32xf32>
    %164 = arith.addf %161, %163 : vector<8x32xf32>
    %165 = arith.addf %105, %164 : vector<8x32xf32>
    %c0_71 = arith.constant 0 : index
    %c0_72 = arith.constant 0 : index
    %166 = vector.load %arg22[%c0_71, %c0_72] : memref<1x32xf32, #tpu.memory_space<vmem>>, vector<1x32xf32>
    %167 = vector.shape_cast %166 : vector<1x32xf32> to vector<32xf32>
    %c0_73 = arith.constant 0 : index
    %c0_74 = arith.constant 0 : index
    %168 = vector.load %arg23[%c0_73, %c0_74] : memref<1x32xf32, #tpu.memory_space<vmem>>, vector<1x32xf32>
    %169 = vector.shape_cast %168 : vector<1x32xf32> to vector<32xf32>
    %cst_75 = arith.constant dense<0.000000e+00> : vector<8xf32>
    %170 = vector.multi_reduction <add>, %165, %cst_75 [1] : vector<8x32xf32> to vector<8xf32>
    %171 = vector.shape_cast %170 : vector<8xf32> to vector<8x1xf32>
    %cst_76 = arith.constant 3.200000e+01 : f32
    %172 = vector.broadcast %cst_76 : f32 to vector<8x1xf32>
    %173 = arith.divf %171, %172 : vector<8x1xf32>
    %174 = vector.broadcast %173 : vector<8x1xf32> to vector<8x32xf32>
    %175 = arith.subf %165, %174 : vector<8x32xf32>
    %176 = arith.mulf %175, %175 : vector<8x32xf32>
    %cst_77 = arith.constant dense<0.000000e+00> : vector<8xf32>
    %177 = vector.multi_reduction <add>, %176, %cst_77 [1] : vector<8x32xf32> to vector<8xf32>
    %178 = vector.shape_cast %177 : vector<8xf32> to vector<8x1xf32>
    %cst_78 = arith.constant 3.200000e+01 : f32
    %179 = vector.broadcast %cst_78 : f32 to vector<8x1xf32>
    %180 = arith.divf %178, %179 : vector<8x1xf32>
    %181 = vector.broadcast %173 : vector<8x1xf32> to vector<8x32xf32>
    %182 = arith.subf %165, %181 : vector<8x32xf32>
    %cst_79 = arith.constant 9.99999974E-6 : f32
    %183 = vector.broadcast %cst_79 : f32 to vector<8x1xf32>
    %184 = arith.addf %180, %183 : vector<8x1xf32>
    %185 = math.rsqrt %184 : vector<8x1xf32>
    %186 = vector.broadcast %185 : vector<8x1xf32> to vector<8x32xf32>
    %187 = arith.mulf %182, %186 : vector<8x32xf32>
    %188 = vector.shape_cast %167 : vector<32xf32> to vector<1x32xf32>
    %189 = vector.broadcast %188 : vector<1x32xf32> to vector<8x32xf32>
    %190 = arith.mulf %187, %189 : vector<8x32xf32>
    %191 = vector.shape_cast %169 : vector<32xf32> to vector<1x32xf32>
    %192 = vector.broadcast %191 : vector<1x32xf32> to vector<8x32xf32>
    %193 = arith.addf %190, %192 : vector<8x32xf32>
    %194 = arith.truncf %193 : vector<8x32xf32> to vector<8x32xbf16>
    %c0_80 = arith.constant 0 : index
    %c0_81 = arith.constant 0 : index
    %195 = vector.load %arg24[%c0_80, %c0_81] : memref<32x64xbf16, #tpu.memory_space<vmem>>, vector<32x64xbf16>
    %cst_82 = arith.constant dense<0.000000e+00> : vector<8x64xf32>
    %196 = tpu.matmul %194, %195, %cst_82 {dimension_numbers = #tpu.dot_dimension_numbers<[1], [0], [0], [1], [0, 0, 1, 1], [], []>} : vector<8x32xbf16>, vector<32x64xbf16>, vector<8x64xf32> -> vector<8x64xf32>
    %c0_83 = arith.constant 0 : index
    %c0_84 = arith.constant 0 : index
    %197 = vector.load %arg25[%c0_83, %c0_84] : memref<1x64xf32, #tpu.memory_space<vmem>>, vector<1x64xf32>
    %198 = vector.shape_cast %197 : vector<1x64xf32> to vector<64xf32>
    %199 = vector.shape_cast %198 : vector<64xf32> to vector<1x64xf32>
    %200 = vector.broadcast %199 : vector<1x64xf32> to vector<8x64xf32>
    %201 = arith.addf %196, %200 : vector<8x64xf32>
    %cst_85 = arith.constant 0.000000e+00 : f32
    %202 = vector.broadcast %cst_85 : f32 to vector<8x64xf32>
    %203 = arith.maximumf %201, %202 : vector<8x64xf32>
    %204 = arith.truncf %203 : vector<8x64xf32> to vector<8x64xbf16>
    %c0_86 = arith.constant 0 : index
    %c0_87 = arith.constant 0 : index
    %205 = vector.load %arg26[%c0_86, %c0_87] : memref<64x32xbf16, #tpu.memory_space<vmem>>, vector<64x32xbf16>
    %cst_88 = arith.constant dense<0.000000e+00> : vector<8x32xf32>
    %206 = tpu.matmul %204, %205, %cst_88 {dimension_numbers = #tpu.dot_dimension_numbers<[1], [0], [0], [1], [0, 0, 1, 1], [], []>} : vector<8x64xbf16>, vector<64x32xbf16>, vector<8x32xf32> -> vector<8x32xf32>
    %c0_89 = arith.constant 0 : index
    %c0_90 = arith.constant 0 : index
    %207 = vector.load %arg27[%c0_89, %c0_90] : memref<1x32xf32, #tpu.memory_space<vmem>>, vector<1x32xf32>
    %208 = vector.shape_cast %207 : vector<1x32xf32> to vector<32xf32>
    %209 = vector.shape_cast %208 : vector<32xf32> to vector<1x32xf32>
    %210 = vector.broadcast %209 : vector<1x32xf32> to vector<8x32xf32>
    %211 = arith.addf %206, %210 : vector<8x32xf32>
    %212 = arith.addf %193, %211 : vector<8x32xf32>
    %c0_91 = arith.constant 0 : index
    %c0_92 = arith.constant 0 : index
    %213 = vector.load %arg28[%c0_91, %c0_92] : memref<1x32xf32, #tpu.memory_space<vmem>>, vector<1x32xf32>
    %214 = vector.shape_cast %213 : vector<1x32xf32> to vector<32xf32>
    %c0_93 = arith.constant 0 : index
    %c0_94 = arith.constant 0 : index
    %215 = vector.load %arg29[%c0_93, %c0_94] : memref<1x32xf32, #tpu.memory_space<vmem>>, vector<1x32xf32>
    %216 = vector.shape_cast %215 : vector<1x32xf32> to vector<32xf32>
    %cst_95 = arith.constant dense<0.000000e+00> : vector<8xf32>
    %217 = vector.multi_reduction <add>, %212, %cst_95 [1] : vector<8x32xf32> to vector<8xf32>
    %218 = vector.shape_cast %217 : vector<8xf32> to vector<8x1xf32>
    %cst_96 = arith.constant 3.200000e+01 : f32
    %219 = vector.broadcast %cst_96 : f32 to vector<8x1xf32>
    %220 = arith.divf %218, %219 : vector<8x1xf32>
    %221 = vector.broadcast %220 : vector<8x1xf32> to vector<8x32xf32>
    %222 = arith.subf %212, %221 : vector<8x32xf32>
    %223 = arith.mulf %222, %222 : vector<8x32xf32>
    %cst_97 = arith.constant dense<0.000000e+00> : vector<8xf32>
    %224 = vector.multi_reduction <add>, %223, %cst_97 [1] : vector<8x32xf32> to vector<8xf32>
    %225 = vector.shape_cast %224 : vector<8xf32> to vector<8x1xf32>
    %cst_98 = arith.constant 3.200000e+01 : f32
    %226 = vector.broadcast %cst_98 : f32 to vector<8x1xf32>
    %227 = arith.divf %225, %226 : vector<8x1xf32>
    %228 = vector.broadcast %220 : vector<8x1xf32> to vector<8x32xf32>
    %229 = arith.subf %212, %228 : vector<8x32xf32>
    %cst_99 = arith.constant 9.99999974E-6 : f32
    %230 = vector.broadcast %cst_99 : f32 to vector<8x1xf32>
    %231 = arith.addf %227, %230 : vector<8x1xf32>
    %232 = math.rsqrt %231 : vector<8x1xf32>
    %233 = vector.broadcast %232 : vector<8x1xf32> to vector<8x32xf32>
    %234 = arith.mulf %229, %233 : vector<8x32xf32>
    %235 = vector.shape_cast %214 : vector<32xf32> to vector<1x32xf32>
    %236 = vector.broadcast %235 : vector<1x32xf32> to vector<8x32xf32>
    %237 = arith.mulf %234, %236 : vector<8x32xf32>
    %238 = vector.shape_cast %216 : vector<32xf32> to vector<1x32xf32>
    %239 = vector.broadcast %238 : vector<1x32xf32> to vector<8x32xf32>
    %240 = arith.addf %237, %239 : vector<8x32xf32>
    %c0_100 = arith.constant 0 : index
    %c0_101 = arith.constant 0 : index
    %c0_102 = arith.constant 0 : index
    %241 = vector.load %arg30[%c0_100, %c0_101, %c0_102] : memref<1x8x32xf32, #tpu.memory_space<vmem>>, vector<1x8x32xf32>
    %242 = vector.shape_cast %241 : vector<1x8x32xf32> to vector<8x32xf32>
    %243 = vector.shape_cast %240 : vector<8x32xf32> to vector<1x8x32xf32>
    tpu.vector_store %arg30[%c0_100, %c0_101, %c0_102], %243 {strides = array<i32>} : memref<1x8x32xf32, #tpu.memory_space<vmem>>, vector<1x8x32xf32>,
    %c0_103 = arith.constant 0 : index
    %c0_104 = arith.constant 0 : index
    %c0_105 = arith.constant 0 : index
    %c0_106 = arith.constant 0 : index
    %244 = vector.load %arg31[%c0_103, %c0_104, %c0_105, %c0_106] : memref<1x4x8x8xf32, #tpu.memory_space<vmem>>, vector<1x4x8x8xf32>
    %245 = vector.shape_cast %244 : vector<1x4x8x8xf32> to vector<4x8x8xf32>
    %246 = vector.shape_cast %155 : vector<4x8x8xf32> to vector<1x4x8x8xf32>
    tpu.vector_store %arg31[%c0_103, %c0_104, %c0_105, %c0_106], %246 {strides = array<i32>} : memref<1x4x8x8xf32, #tpu.memory_space<vmem>>, vector<1x4x8x8xf32>,
    return
  }
  func.func @transform_0(%arg0: i32) -> (i32, i32, i32) {
    %c0_i32 = arith.constant 0 : i32
    %c0_i32_0 = arith.constant 0 : i32
    %c0_i32_1 = arith.constant 0 : i32
    return %arg0, %c0_i32, %c0_i32_0 : i32, i32, i32
  }
  func.func @transform_1(%arg0: i32) -> (i32, i32, i32) {
    %c0_i32 = arith.constant 0 : i32
    %c0_i32_0 = arith.constant 0 : i32
    %c0_i32_1 = arith.constant 0 : i32
    return %arg0, %c0_i32, %c0_i32_0 : i32, i32, i32
  }
  func.func @transform_2(%arg0: i32) -> (i32, i32, i32) {
    %c0_i32 = arith.constant 0 : i32
    %c0_i32_0 = arith.constant 0 : i32
    %c0_i32_1 = arith.constant 0 : i32
    return %arg0, %c0_i32, %c0_i32_0 : i32, i32, i32
  }
  func.func @transform_3(%arg0: i32) -> (i32, i32) {
    %c0_i32 = arith.constant 0 : i32
    %c0_i32_0 = arith.constant 0 : i32
    %c0_i32_1 = arith.constant 0 : i32
    return %c0_i32, %c0_i32_0 : i32, i32
  }
  func.func @transform_4(%arg0: i32) -> (i32, i32) {
    %c0_i32 = arith.constant 0 : i32
    %c0_i32_0 = arith.constant 0 : i32
    %c0_i32_1 = arith.constant 0 : i32
    return %c0_i32, %c0_i32_0 : i32, i32
  }
  func.func @transform_5(%arg0: i32) -> (i32, i32) {
    %c0_i32 = arith.constant 0 : i32
    %c0_i32_0 = arith.constant 0 : i32
    %c0_i32_1 = arith.constant 0 : i32
    return %c0_i32, %c0_i32_0 : i32, i32
  }
  func.func @transform_6(%arg0: i32) -> (i32, i32) {
    %c0_i32 = arith.constant 0 : i32
    %c0_i32_0 = arith.constant 0 : i32
    %c0_i32_1 = arith.constant 0 : i32
    return %c0_i32, %c0_i32_0 : i32, i32
  }
  func.func @transform_7(%arg0: i32) -> (i32, i32) {
    %c0_i32 = arith.constant 0 : i32
    %c0_i32_0 = arith.constant 0 : i32
    %c0_i32_1 = arith.constant 0 : i32
    return %c0_i32, %c0_i32_0 : i32, i32
  }
  func.func @transform_8(%arg0: i32) -> (i32, i32) {
    %c0_i32 = arith.constant 0 : i32
    %c0_i32_0 = arith.constant 0 : i32
    %c0_i32_1 = arith.constant 0 : i32
    return %c0_i32, %c0_i32_0 : i32, i32
  }
  func.func @transform_9(%arg0: i32) -> (i32, i32) {
    %c0_i32 = arith.constant 0 : i32
    %c0_i32_0 = arith.constant 0 : i32
    %c0_i32_1 = arith.constant 0 : i32
    return %c0_i32, %c0_i32_0 : i32, i32
  }
  func.func @transform_10(%arg0: i32) -> (i32, i32) {
    %c0_i32 = arith.constant 0 : i32
    %c0_i32_0 = arith.constant 0 : i32
    %c0_i32_1 = arith.constant 0 : i32
    return %c0_i32, %c0_i32_0 : i32, i32
  }
  func.func @transform_11(%arg0: i32) -> (i32, i32) {
    %c0_i32 = arith.constant 0 : i32
    %c0_i32_0 = arith.constant 0 : i32
    %c0_i32_1 = arith.constant 0 : i32
    return %c0_i32, %c0_i32_0 : i32, i32
  }
  func.func @transform_12(%arg0: i32) -> (i32, i32) {
    %c0_i32 = arith.constant 0 : i32
    %c0_i32_0 = arith.constant 0 : i32
    %c0_i32_1 = arith.constant 0 : i32
    return %c0_i32, %c0_i32_0 : i32, i32
  }
  func.func @transform_13(%arg0: i32) -> (i32, i32) {
    %c0_i32 = arith.constant 0 : i32
    %c0_i32_0 = arith.constant 0 : i32
    %c0_i32_1 = arith.constant 0 : i32
    return %c0_i32, %c0_i32_0 : i32, i32
  }
  func.func @transform_14(%arg0: i32) -> (i32, i32) {
    %c0_i32 = arith.constant 0 : i32
    %c0_i32_0 = arith.constant 0 : i32
    %c0_i32_1 = arith.constant 0 : i32
    return %c0_i32, %c0_i32_0 : i32, i32
  }
  func.func @transform_15(%arg0: i32) -> (i32, i32) {
    %c0_i32 = arith.constant 0 : i32
    %c0_i32_0 = arith.constant 0 : i32
    %c0_i32_1 = arith.constant 0 : i32
    return %c0_i32, %c0_i32_0 : i32, i32
  }
  func.func @transform_16(%arg0: i32) -> (i32, i32) {
    %c0_i32 = arith.constant 0 : i32
    %c0_i32_0 = arith.constant 0 : i32
    %c0_i32_1 = arith.constant 0 : i32
    return %c0_i32, %c0_i32_0 : i32, i32
  }
  func.func @transform_17(%arg0: i32) -> (i32, i32) {
    %c0_i32 = arith.constant 0 : i32
    %c0_i32_0 = arith.constant 0 : i32
    %c0_i32_1 = arith.constant 0 : i32
    return %c0_i32, %c0_i32_0 : i32, i32
  }
  func.func @transform_18(%arg0: i32) -> (i32, i32) {
    %c0_i32 = arith.constant 0 : i32
    %c0_i32_0 = arith.constant 0 : i32
    %c0_i32_1 = arith.constant 0 : i32
    return %c0_i32, %c0_i32_0 : i32, i32
  }
  func.func @transform_19(%arg0: i32) -> (i32, i32) {
    %c0_i32 = arith.constant 0 : i32
    %c0_i32_0 = arith.constant 0 : i32
    %c0_i32_1 = arith.constant 0 : i32
    return %c0_i32, %c0_i32_0 : i32, i32
  }
  func.func @transform_20(%arg0: i32) -> (i32, i32) {
    %c0_i32 = arith.constant 0 : i32
    %c0_i32_0 = arith.constant 0 : i32
    %c0_i32_1 = arith.constant 0 : i32
    return %c0_i32, %c0_i32_0 : i32, i32
  }
  func.func @transform_21(%arg0: i32) -> (i32, i32) {
    %c0_i32 = arith.constant 0 : i32
    %c0_i32_0 = arith.constant 0 : i32
    %c0_i32_1 = arith.constant 0 : i32
    return %c0_i32, %c0_i32_0 : i32, i32
  }
  func.func @transform_22(%arg0: i32) -> (i32, i32) {
    %c0_i32 = arith.constant 0 : i32
    %c0_i32_0 = arith.constant 0 : i32
    %c0_i32_1 = arith.constant 0 : i32
    return %c0_i32, %c0_i32_0 : i32, i32
  }
  func.func @transform_23(%arg0: i32) -> (i32, i32) {
    %c0_i32 = arith.constant 0 : i32
    %c0_i32_0 = arith.constant 0 : i32
    %c0_i32_1 = arith.constant 0 : i32
    return %c0_i32, %c0_i32_0 : i32, i32
  }
  func.func @transform_24(%arg0: i32) -> (i32, i32) {
    %c0_i32 = arith.constant 0 : i32
    %c0_i32_0 = arith.constant 0 : i32
    %c0_i32_1 = arith.constant 0 : i32
    return %c0_i32, %c0_i32_0 : i32, i32
  }
  func.func @transform_25(%arg0: i32) -> (i32, i32) {
    %c0_i32 = arith.constant 0 : i32
    %c0_i32_0 = arith.constant 0 : i32
    %c0_i32_1 = arith.constant 0 : i32
    return %c0_i32, %c0_i32_0 : i32, i32
  }
  func.func @transform_26(%arg0: i32) -> (i32, i32) {
    %c0_i32 = arith.constant 0 : i32
    %c0_i32_0 = arith.constant 0 : i32
    %c0_i32_1 = arith.constant 0 : i32
    return %c0_i32, %c0_i32_0 : i32, i32
  }
  func.func @transform_27(%arg0: i32) -> (i32, i32) {
    %c0_i32 = arith.constant 0 : i32
    %c0_i32_0 = arith.constant 0 : i32
    %c0_i32_1 = arith.constant 0 : i32
    return %c0_i32, %c0_i32_0 : i32, i32
  }
  func.func @transform_28(%arg0: i32) -> (i32, i32) {
    %c0_i32 = arith.constant 0 : i32
    %c0_i32_0 = arith.constant 0 : i32
    %c0_i32_1 = arith.constant 0 : i32
    return %c0_i32, %c0_i32_0 : i32, i32
  }
  func.func @transform_29(%arg0: i32) -> (i32, i32, i32) {
    %c0_i32 = arith.constant 0 : i32
    %c0_i32_0 = arith.constant 0 : i32
    %c0_i32_1 = arith.constant 0 : i32
    return %arg0, %c0_i32, %c0_i32_0 : i32, i32, i32
  }
  func.func @transform_30(%arg0: i32) -> (i32, i32, i32, i32) {
    %c0_i32 = arith.constant 0 : i32
    %c0_i32_0 = arith.constant 0 : i32
    %c0_i32_1 = arith.constant 0 : i32
    %c0_i32_2 = arith.constant 0 : i32
    return %arg0, %c0_i32, %c0_i32_0, %c0_i32_1 : i32, i32, i32, i32
  }
}

</mosaic_0001>

<llo_original>
// kernel: tpu_custom_call.1
$region0: #{tpu_custom_call.1}
  #allocation0 [shape = 'u32[]', space=smem, size = 0x4, offset = 0x4, fixed_abs, tag = 'smem constant byte address 0x4 - core index']
  #allocation1 [shape = 'u32[144,128]{1,0:T(1,128)}', space=vmem, size = 0x12000, scoped, tag = 'internal scratch']
  %s0 = inlined_call_operand.smem [shape: u32[31], index: -1, kind: input, shape index: {}]
  %s1 = sld [smem:[%s0]]
  %s2 = scalar_lea.smem %s0, 1
  %s3 = sld [smem:[%s2]]
  %s4 = scalar_lea.smem %s0, 2
  %s5 = sld [smem:[%s4]]
  %s6 = scalar_lea.smem %s0, 3
  %s7 = sld [smem:[%s6]]
  %s8 = scalar_lea.smem %s0, 4
  %s9 = sld [smem:[%s8]]
  %s10 = scalar_lea.smem %s0, 5
  %s11 = sld [smem:[%s10]]
  %s12 = scalar_lea.smem %s0, 6
  %s13 = sld [smem:[%s12]]
  %s14 = scalar_lea.smem %s0, 7
  %s15 = sld [smem:[%s14]]
  %s16 = scalar_lea.smem %s0, 8
  %s17 = sld [smem:[%s16]]
  %s18 = scalar_lea.smem %s0, 9
  %s19 = sld [smem:[%s18]]
  %s20 = scalar_lea.smem %s0, 10
  %s21 = sld [smem:[%s20]]
  %s22 = scalar_lea.smem %s0, 11
  %s23 = sld [smem:[%s22]]
  %s24 = scalar_lea.smem %s0, 12
  %s25 = sld [smem:[%s24]]
  %s26 = scalar_lea.smem %s0, 13
  %s27 = sld [smem:[%s26]]
  %s28 = scalar_lea.smem %s0, 14
  %s29 = sld [smem:[%s28]]
  %s30 = scalar_lea.smem %s0, 15
  %s31 = sld [smem:[%s30]]
  %s32 = scalar_lea.smem %s0, 16
  %s33 = sld [smem:[%s32]]
  %s34 = scalar_lea.smem %s0, 17
  %s35 = sld [smem:[%s34]]
  %s36 = scalar_lea.smem %s0, 18
  %s37 = sld [smem:[%s36]]
  %s38 = scalar_lea.smem %s0, 19
  %s39 = sld [smem:[%s38]]
  %s40 = scalar_lea.smem %s0, 20
  %s41 = sld [smem:[%s40]]
  %s42 = scalar_lea.smem %s0, 21
  %s43 = sld [smem:[%s42]]
  %s44 = scalar_lea.smem %s0, 22
  %s45 = sld [smem:[%s44]]
  %s46 = scalar_lea.smem %s0, 23
  %s47 = sld [smem:[%s46]]
  %s48 = scalar_lea.smem %s0, 24
  %s49 = sld [smem:[%s48]]
  %s50 = scalar_lea.smem %s0, 25
  %s51 = sld [smem:[%s50]]
  %s52 = scalar_lea.smem %s0, 26
  %s53 = sld [smem:[%s52]]
  %s54 = scalar_lea.smem %s0, 27
  %s55 = sld [smem:[%s54]]
  %s56 = scalar_lea.smem %s0, 28
  %s57 = sld [smem:[%s56]]
  %s58 = scalar_lea.smem %s0, 29
  %s59 = sld [smem:[%s58]]
  %s60 = scalar_lea.smem %s0, 30
  %s61 = sld [smem:[%s60]]
  %62 = xla_tuple %s59, %s61
  %s63 = sld [smem:[#allocation0]]
  $region225: #{tpu_custom_call.1} parent=0
    _
  %s65 = ssub.s32 1, %s63
  %s66 = scalar_select 0, %s65, %s63
  $region1: #{tpu_custom_call.1} parent=0
    #allocation2 [shape = 'u8[1024]{0}', space=vmem, size = 0x400, scoped, tag = 'input window, operand 2']
    #allocation3 [shape = 's32[2]{0}', space=sflag, size = 0x8, scoped, tag = 'scoped memory for tpu_custom_call.1']
    #allocation4 [shape = 's32[2]{0}', space=sflag, size = 0x8, scoped, tag = 'scoped memory for tpu_custom_call.1']
    #allocation5 [shape = 'u8[512]{0}', space=vmem, size = 0x400, scoped, tag = 'input window, operand 4, single buffered']
    #allocation6 [shape = 's32[1]{0}', space=sflag, size = 0x4, scoped, tag = 'scoped memory for tpu_custom_call.1']
    #allocation7 [shape = 'u8[8192]{0}', space=vmem, size = 0x2000, scoped, tag = 'input window, operand 5, single buffered']
    #allocation8 [shape = 'u8[512]{0}', space=vmem, size = 0x400, scoped, tag = 'input window, operand 6, single buffered']
    #allocation9 [shape = 's32[1]{0}', space=sflag, size = 0x4, scoped, tag = 'scoped memory for tpu_custom_call.1']
    #allocation10 [shape = 'u8[8192]{0}', space=vmem, size = 0x2000, scoped, tag = 'input window, operand 7, single buffered']
    #allocation11 [shape = 'u8[512]{0}', space=vmem, size = 0x400, scoped, tag = 'input window, operand 8, single buffered']
    #allocation12 [shape = 's32[1]{0}', space=sflag, size = 0x4, scoped, tag = 'scoped memory for tpu_custom_call.1']
    #allocation13 [shape = 'u8[512]{0}', space=vmem, size = 0x400, scoped, tag = 'input window, operand 10, single buffered']
    #allocation14 [shape = 'u8[512]{0}', space=vmem, size = 0x400, scoped, tag = 'input window, operand 11, single buffered']
    #allocation15 [shape = 's32[1]{0}', space=sflag, size = 0x4, scoped, tag = 'scoped memory for tpu_custom_call.1']
    #allocation16 [shape = 'u8[512]{0}', space=vmem, size = 0x400, scoped, tag = 'input window, operand 12, single buffered']
    #allocation17 [shape = 'u8[8192]{0}', space=vmem, size = 0x2000, scoped, tag = 'input window, operand 13, single buffered']
    #allocation18 [shape = 's32[1]{0}', space=sflag, size = 0x4, scoped, tag = 'scoped memory for tpu_custom_call.1']
    #allocation19 [shape = 'u8[512]{0}', space=vmem, size = 0x400, scoped, tag = 'input window, operand 14, single buffered']
    #allocation20 [shape = 'u8[8192]{0}', space=vmem, size = 0x2000, scoped, tag = 'input window, operand 15, single buffered']
    #allocation21 [shape = 's32[1]{0}', space=sflag, size = 0x4, scoped, tag = 'scoped memory for tpu_custom_call.1']
    #allocation22 [shape = 'u8[512]{0}', space=vmem, size = 0x400, scoped, tag = 'input window, operand 16, single buffered']
    #allocation23 [shape = 'u8[8192]{0}', space=vmem, size = 0x2000, scoped, tag = 'input window, operand 17, single buffered']
    #allocation24 [shape = 's32[1]{0}', space=sflag, size = 0x4, scoped, tag = 'scoped memory for tpu_custom_call.1']
    #allocation25 [shape = 'u8[512]{0}', space=vmem, size = 0x400, scoped, tag = 'input window, operand 18, single buffered']
    #allocation26 [shape = 'u8[8192]{0}', space=vmem, size = 0x2000, scoped, tag = 'input window, operand 19, single buffered']
    #allocation27 [shape = 's32[1]{0}', space=sflag, size = 0x4, scoped, tag = 'scoped memory for tpu_custom_call.1']
    #allocation28 [shape = 'u8[8192]{0}', space=vmem, size = 0x2000, scoped, tag = 'input window, operand 23, single buffered']
    #allocation29 [shape = 'u8[8192]{0}', space=vmem, size = 0x2000, scoped, tag = 'output window, operand 0']
    #allocation30 [shape = 'u8[32768]{0}', space=vmem, size = 0x8000, scoped, tag = 'output window, operand 1']
    #allocation31 [shape = 's32[2]{0}', space=sflag, size = 0x8, scoped, tag = 'scoped memory for tpu_custom_call.1']
    %67 = vsyncpa [#allocation3], 0
    %s68 = scalar_lea.sflag [#allocation3], 1
    %69 = vsyncpa %s68, 0
    %70 = vsyncpa [#allocation6], 0
    %71 = vsyncpa [#allocation9], 0
    %72 = vsyncpa [#allocation12], 0
    %73 = vsyncpa [#allocation15], 0
    %74 = vsyncpa [#allocation18], 0
    %75 = vsyncpa [#allocation21], 0
    %76 = vsyncpa [#allocation24], 0
    %77 = vsyncpa [#allocation27], 0
    %78 = vsyncpa [#allocation4], 0
    %s79 = scalar_lea.sflag [#allocation4], 1
    %80 = vsyncpa %s79, 0
    %81 = vsyncpa [#allocation31], 0
    %s82 = scalar_lea.sflag [#allocation31], 1
    %83 = vsyncpa %s82, 0
    loop: start=0, step=1, limit=4
    $region2: #{tpu_custom_call.1} parent=1 // loop_pre_header
      _
    $region3: #{tpu_custom_call.1} parent=1 // loop_header
      %s85 = sphi 0, %s89
      %p86 = scmp.ge.s32.totalorder %s85, 4
      %s95 = sphi 0, %s97
      %s98 = sphi 0, %s95
      %s99 = sphi 0, %s98
      %s115 = sphi 0, %s99
      %s121 = sphi 0, %s123
      %s124 = sphi 0, %s121
      %s125 = sphi 0, %s124
      %s141 = sphi 0, %s125
      %s147 = sphi 0, %s149
      %s150 = sphi 0, %s147
      %s151 = sphi 0, %s150
      %s167 = sphi 0, %s151
      %s171 = sphi 0, %s171
      %s173 = sphi 0, %s171
      %s174 = sphi 0, %s173
      %s188 = sphi 0, %s174
      %s192 = sphi 0, %s192
      %s194 = sphi 0, %s192
      %s195 = sphi 0, %s194
      %s209 = sphi 0, %s195
      %s213 = sphi 0, %s213
      %s215 = sphi 0, %s213
      %s216 = sphi 0, %s215
      %s230 = sphi 0, %s216
      %s234 = sphi 0, %s234
      %s236 = sphi 0, %s234
      %s237 = sphi 0, %s236
      %s251 = sphi 0, %s237
      %s255 = sphi 0, %s255
      %s257 = sphi 0, %s255
      %s258 = sphi 0, %s257
      %s272 = sphi 0, %s258
      %s276 = sphi 0, %s276
      %s278 = sphi 0, %s276
      %s279 = sphi 0, %s278
      %s293 = sphi 0, %s279
      %s297 = sphi 0, %s297
      %s299 = sphi 0, %s297
      %s300 = sphi 0, %s299
      %s314 = sphi 0, %s300
      %s318 = sphi 0, %s318
      %s320 = sphi 0, %s318
      %s321 = sphi 0, %s320
      %s335 = sphi 0, %s321
      %s339 = sphi 0, %s339
      %s341 = sphi 0, %s339
      %s342 = sphi 0, %s341
      %s356 = sphi 0, %s342
      %s360 = sphi 0, %s360
      %s362 = sphi 0, %s360
      %s363 = sphi 0, %s362
      %s377 = sphi 0, %s363
      %s381 = sphi 0, %s381
      %s383 = sphi 0, %s381
      %s384 = sphi 0, %s383
      %s398 = sphi 0, %s384
      %s402 = sphi 0, %s402
      %s404 = sphi 0, %s402
      %s405 = sphi 0, %s404
      %s419 = sphi 0, %s405
      %s423 = sphi 0, %s423
      %s425 = sphi 0, %s423
      %s426 = sphi 0, %s425
      %s440 = sphi 0, %s426
      %s444 = sphi 0, %s444
      %s446 = sphi 0, %s444
      %s447 = sphi 0, %s446
      %s461 = sphi 0, %s447
      %s465 = sphi 0, %s465
      %s467 = sphi 0, %s465
      %s468 = sphi 0, %s467
      %s482 = sphi 0, %s468
      %s486 = sphi 0, %s486
      %s488 = sphi 0, %s486
      %s489 = sphi 0, %s488
      %s503 = sphi 0, %s489
      %s507 = sphi 0, %s507
      %s509 = sphi 0, %s507
      %s510 = sphi 0, %s509
      %s524 = sphi 0, %s510
      %s528 = sphi 0, %s528
      %s530 = sphi 0, %s528
      %s531 = sphi 0, %s530
      %s545 = sphi 0, %s531
      %s549 = sphi 0, %s549
      %s551 = sphi 0, %s549
      %s552 = sphi 0, %s551
      %s566 = sphi 0, %s552
      %s570 = sphi 0, %s570
      %s572 = sphi 0, %s570
      %s573 = sphi 0, %s572
      %s587 = sphi 0, %s573
      %s591 = sphi 0, %s591
      %s593 = sphi 0, %s591
      %s594 = sphi 0, %s593
      %s608 = sphi 0, %s594
      %s612 = sphi 0, %s612
      %s614 = sphi 0, %s612
      %s615 = sphi 0, %s614
      %s629 = sphi 0, %s615
      %s633 = sphi 0, %s633
      %s635 = sphi 0, %s633
      %s636 = sphi 0, %s635
      %s650 = sphi 0, %s636
      %s654 = sphi 0, %s654
      %s656 = sphi 0, %s654
      %s657 = sphi 0, %s656
      %s671 = sphi 0, %s657
      %s675 = sphi 0, %s675
      %s677 = sphi 0, %s675
      %s678 = sphi 0, %s677
      %s692 = sphi 0, %s678
      %s696 = sphi 0, %s696
      %s698 = sphi 0, %s696
      %s699 = sphi 0, %s698
      %s713 = sphi 0, %s699
      %s719 = sphi 0, %s721
      %s722 = sphi 0, %s719
      %s723 = sphi 0, %s722
      %s739 = sphi 0, %s723
      %s745 = sphi 0, %s747
      %s748 = sphi 0, %s745
      %s749 = sphi 0, %s748
      %s765 = sphi 0, %s749
    $region4: #{tpu_custom_call.1} parent=1 // loop_header_branch
      %88 = sbr.rel (%p86) target = $region8
    $region5: #{tpu_custom_call.1} parent=1 // loop_body
      %s90 = ssub.s32 %s85, 1
      %s91 = ssub.s32 %s85, 2
      %s92 = sadd.s32 %s85, 1
      %s93 = ssub.s32 %s85, %s92
      %p94 = scmp.eq.s32.totalorder %s93, 0
      %s96 = sadd.s32 %s95, 1
      %s97 = scalar_select %p94, %s95, %s96
      %p100 = pneg %p94
      %p101 = scmp.eq.s32.totalorder %s85, 1
      %p102 = por %p100, %p101
      %p103 = scmp.ne.s32.totalorder %s95, %s98
      %p104 = scmp.eq.s32.totalorder %s85, 0
      %p105 = por %p103, %p104
      %p106 = scmp.ne.s32.totalorder %s95, %s98
      %p107 = scmp.eq.s32.totalorder %s90, 1
      %p108 = por %p106, %p107
      %p109 = scmp.ne.s32.totalorder %s98, %s99
      %p110 = scmp.eq.s32.totalorder %s90, 0
      %p111 = por %p109, %p110
      %p112 = scmp.ne.s32.totalorder %s98, %s99
      %p113 = scmp.eq.s32.totalorder %s91, 1
      %p114 = por %p112, %p113
      %p116 = scmp.ne.s32.totalorder %s99, %s115
      %p117 = scmp.eq.s32.totalorder %s91, 0
      %p118 = por %p116, %p117
      %s119 = ssub.s32 %s85, %s92
      %p120 = scmp.eq.s32.totalorder %s119, 0
      %s122 = sadd.s32 %s121, 1
      %s123 = scalar_select %p120, %s121, %s122
      %p126 = pneg %p120
      %p127 = scmp.eq.s32.totalorder %s85, 1
      %p128 = por %p126, %p127
      %p129 = scmp.ne.s32.totalorder %s121, %s124
      %p130 = scmp.eq.s32.totalorder %s85, 0
      %p131 = por %p129, %p130
      %p132 = scmp.ne.s32.totalorder %s121, %s124
      %p133 = scmp.eq.s32.totalorder %s90, 1
      %p134 = por %p132, %p133
      %p135 = scmp.ne.s32.totalorder %s124, %s125
      %p136 = scmp.eq.s32.totalorder %s90, 0
      %p137 = por %p135, %p136
      %p138 = scmp.ne.s32.totalorder %s124, %s125
      %p139 = scmp.eq.s32.totalorder %s91, 1
      %p140 = por %p138, %p139
      %p142 = scmp.ne.s32.totalorder %s125, %s141
      %p143 = scmp.eq.s32.totalorder %s91, 0
      %p144 = por %p142, %p143
      %s145 = ssub.s32 %s85, %s92
      %p146 = scmp.eq.s32.totalorder %s145, 0
      %s148 = sadd.s32 %s147, 1
      %s149 = scalar_select %p146, %s147, %s148
      %p152 = pneg %p146
      %p153 = scmp.eq.s32.totalorder %s85, 1
      %p154 = por %p152, %p153
      %p155 = scmp.ne.s32.totalorder %s147, %s150
      %p156 = scmp.eq.s32.totalorder %s85, 0
      %p157 = por %p155, %p156
      %p158 = scmp.ne.s32.totalorder %s147, %s150
      %p159 = scmp.eq.s32.totalorder %s90, 1
      %p160 = por %p158, %p159
      %p161 = scmp.ne.s32.totalorder %s150, %s151
      %p162 = scmp.eq.s32.totalorder %s90, 0
      %p163 = por %p161, %p162
      %p164 = scmp.ne.s32.totalorder %s150, %s151
      %p165 = scmp.eq.s32.totalorder %s91, 1
      %p166 = por %p164, %p165
      %p168 = scmp.ne.s32.totalorder %s151, %s167
      %p169 = scmp.eq.s32.totalorder %s91, 0
      %p170 = por %p168, %p169
      %s172 = sadd.s32 %s171, 1
      %p175 = scmp.eq.s32.totalorder %s85, 1
      %p176 = scmp.ne.s32.totalorder %s171, %s173
      %p177 = scmp.eq.s32.totalorder %s85, 0
      %p178 = por %p176, %p177
      %p179 = scmp.ne.s32.totalorder %s171, %s173
      %p180 = scmp.eq.s32.totalorder %s90, 1
      %p181 = por %p179, %p180
      %p182 = scmp.ne.s32.totalorder %s173, %s174
      %p183 = scmp.eq.s32.totalorder %s90, 0
      %p184 = por %p182, %p183
      %p185 = scmp.ne.s32.totalorder %s173, %s174
      %p186 = scmp.eq.s32.totalorder %s91, 1
      %p187 = por %p185, %p186
      %p189 = scmp.ne.s32.totalorder %s174, %s188
      %p190 = scmp.eq.s32.totalorder %s91, 0
      %p191 = por %p189, %p190
      %s193 = sadd.s32 %s192, 1
      %p196 = scmp.eq.s32.totalorder %s85, 1
      %p197 = scmp.ne.s32.totalorder %s192, %s194
      %p198 = scmp.eq.s32.totalorder %s85, 0
      %p199 = por %p197, %p198
      %p200 = scmp.ne.s32.totalorder %s192, %s194
      %p201 = scmp.eq.s32.totalorder %s90, 1
      %p202 = por %p200, %p201
      %p203 = scmp.ne.s32.totalorder %s194, %s195
      %p204 = scmp.eq.s32.totalorder %s90, 0
      %p205 = por %p203, %p204
      %p206 = scmp.ne.s32.totalorder %s194, %s195
      %p207 = scmp.eq.s32.totalorder %s91, 1
      %p208 = por %p206, %p207
      %p210 = scmp.ne.s32.totalorder %s195, %s209
      %p211 = scmp.eq.s32.totalorder %s91, 0
      %p212 = por %p210, %p211
      %s214 = sadd.s32 %s213, 1
      %p217 = scmp.eq.s32.totalorder %s85, 1
      %p218 = scmp.ne.s32.totalorder %s213, %s215
      %p219 = scmp.eq.s32.totalorder %s85, 0
      %p220 = por %p218, %p219
      %p221 = scmp.ne.s32.totalorder %s213, %s215
      %p222 = scmp.eq.s32.totalorder %s90, 1
      %p223 = por %p221, %p222
      %p224 = scmp.ne.s32.totalorder %s215, %s216
      %p225 = scmp.eq.s32.totalorder %s90, 0
      %p226 = por %p224, %p225
      %p227 = scmp.ne.s32.totalorder %s215, %s216
      %p228 = scmp.eq.s32.totalorder %s91, 1
      %p229 = por %p227, %p228
      %p231 = scmp.ne.s32.totalorder %s216, %s230
      %p232 = scmp.eq.s32.totalorder %s91, 0
      %p233 = por %p231, %p232
      %s235 = sadd.s32 %s234, 1
      %p238 = scmp.eq.s32.totalorder %s85, 1
      %p239 = scmp.ne.s32.totalorder %s234, %s236
      %p240 = scmp.eq.s32.totalorder %s85, 0
      %p241 = por %p239, %p240
      %p242 = scmp.ne.s32.totalorder %s234, %s236
      %p243 = scmp.eq.s32.totalorder %s90, 1
      %p244 = por %p242, %p243
      %p245 = scmp.ne.s32.totalorder %s236, %s237
      %p246 = scmp.eq.s32.totalorder %s90, 0
      %p247 = por %p245, %p246
      %p248 = scmp.ne.s32.totalorder %s236, %s237
      %p249 = scmp.eq.s32.totalorder %s91, 1
      %p250 = por %p248, %p249
      %p252 = scmp.ne.s32.totalorder %s237, %s251
      %p253 = scmp.eq.s32.totalorder %s91, 0
      %p254 = por %p252, %p253
      %s256 = sadd.s32 %s255, 1
      %p259 = scmp.eq.s32.totalorder %s85, 1
      %p260 = scmp.ne.s32.totalorder %s255, %s257
      %p261 = scmp.eq.s32.totalorder %s85, 0
      %p262 = por %p260, %p261
      %p263 = scmp.ne.s32.totalorder %s255, %s257
      %p264 = scmp.eq.s32.totalorder %s90, 1
      %p265 = por %p263, %p264
      %p266 = scmp.ne.s32.totalorder %s257, %s258
      %p267 = scmp.eq.s32.totalorder %s90, 0
      %p268 = por %p266, %p267
      %p269 = scmp.ne.s32.totalorder %s257, %s258
      %p270 = scmp.eq.s32.totalorder %s91, 1
      %p271 = por %p269, %p270
      %p273 = scmp.ne.s32.totalorder %s258, %s272
      %p274 = scmp.eq.s32.totalorder %s91, 0
      %p275 = por %p273, %p274
      %s277 = sadd.s32 %s276, 1
      %p280 = scmp.eq.s32.totalorder %s85, 1
      %p281 = scmp.ne.s32.totalorder %s276, %s278
      %p282 = scmp.eq.s32.totalorder %s85, 0
      %p283 = por %p281, %p282
      %p284 = scmp.ne.s32.totalorder %s276, %s278
      %p285 = scmp.eq.s32.totalorder %s90, 1
      %p286 = por %p284, %p285
      %p287 = scmp.ne.s32.totalorder %s278, %s279
      %p288 = scmp.eq.s32.totalorder %s90, 0
      %p289 = por %p287, %p288
      %p290 = scmp.ne.s32.totalorder %s278, %s279
      %p291 = scmp.eq.s32.totalorder %s91, 1
      %p292 = por %p290, %p291
      %p294 = scmp.ne.s32.totalorder %s279, %s293
      %p295 = scmp.eq.s32.totalorder %s91, 0
      %p296 = por %p294, %p295
      %s298 = sadd.s32 %s297, 1
      %p301 = scmp.eq.s32.totalorder %s85, 1
      %p302 = scmp.ne.s32.totalorder %s297, %s299
      %p303 = scmp.eq.s32.totalorder %s85, 0
      %p304 = por %p302, %p303
      %p305 = scmp.ne.s32.totalorder %s297, %s299
      %p306 = scmp.eq.s32.totalorder %s90, 1
      %p307 = por %p305, %p306
      %p308 = scmp.ne.s32.totalorder %s299, %s300
      %p309 = scmp.eq.s32.totalorder %s90, 0
      %p310 = por %p308, %p309
      %p311 = scmp.ne.s32.totalorder %s299, %s300
      %p312 = scmp.eq.s32.totalorder %s91, 1
      %p313 = por %p311, %p312
      %p315 = scmp.ne.s32.totalorder %s300, %s314
      %p316 = scmp.eq.s32.totalorder %s91, 0
      %p317 = por %p315, %p316
      %s319 = sadd.s32 %s318, 1
      %p322 = scmp.eq.s32.totalorder %s85, 1
      %p323 = scmp.ne.s32.totalorder %s318, %s320
      %p324 = scmp.eq.s32.totalorder %s85, 0
      %p325 = por %p323, %p324
      %p326 = scmp.ne.s32.totalorder %s318, %s320
      %p327 = scmp.eq.s32.totalorder %s90, 1
      %p328 = por %p326, %p327
      %p329 = scmp.ne.s32.totalorder %s320, %s321
      %p330 = scmp.eq.s32.totalorder %s90, 0
      %p331 = por %p329, %p330
      %p332 = scmp.ne.s32.totalorder %s320, %s321
      %p333 = scmp.eq.s32.totalorder %s91, 1
      %p334 = por %p332, %p333
      %p336 = scmp.ne.s32.totalorder %s321, %s335
      %p337 = scmp.eq.s32.totalorder %s91, 0
      %p338 = por %p336, %p337
      %s340 = sadd.s32 %s339, 1
      %p343 = scmp.eq.s32.totalorder %s85, 1
      %p344 = scmp.ne.s32.totalorder %s339, %s341
      %p345 = scmp.eq.s32.totalorder %s85, 0
      %p346 = por %p344, %p345
      %p347 = scmp.ne.s32.totalorder %s339, %s341
      %p348 = scmp.eq.s32.totalorder %s90, 1
      %p349 = por %p347, %p348
      %p350 = scmp.ne.s32.totalorder %s341, %s342
      %p351 = scmp.eq.s32.totalorder %s90, 0
      %p352 = por %p350, %p351
      %p353 = scmp.ne.s32.totalorder %s341, %s342
      %p354 = scmp.eq.s32.totalorder %s91, 1
      %p355 = por %p353, %p354
      %p357 = scmp.ne.s32.totalorder %s342, %s356
      %p358 = scmp.eq.s32.totalorder %s91, 0
      %p359 = por %p357, %p358
      %s361 = sadd.s32 %s360, 1
      %p364 = scmp.eq.s32.totalorder %s85, 1
      %p365 = scmp.ne.s32.totalorder %s360, %s362
      %p366 = scmp.eq.s32.totalorder %s85, 0
      %p367 = por %p365, %p366
      %p368 = scmp.ne.s32.totalorder %s360, %s362
      %p369 = scmp.eq.s32.totalorder %s90, 1
      %p370 = por %p368, %p369
      %p371 = scmp.ne.s32.totalorder %s362, %s363
      %p372 = scmp.eq.s32.totalorder %s90, 0
      %p373 = por %p371, %p372
      %p374 = scmp.ne.s32.totalorder %s362, %s363
      %p375 = scmp.eq.s32.totalorder %s91, 1
      %p376 = por %p374, %p375
      %p378 = scmp.ne.s32.totalorder %s363, %s377
      %p379 = scmp.eq.s32.totalorder %s91, 0
      %p380 = por %p378, %p379
      %s382 = sadd.s32 %s381, 1
      %p385 = scmp.eq.s32.totalorder %s85, 1
      %p386 = scmp.ne.s32.totalorder %s381, %s383
      %p387 = scmp.eq.s32.totalorder %s85, 0
      %p388 = por %p386, %p387
      %p389 = scmp.ne.s32.totalorder %s381, %s383
      %p390 = scmp.eq.s32.totalorder %s90, 1
      %p391 = por %p389, %p390
      %p392 = scmp.ne.s32.totalorder %s383, %s384
      %p393 = scmp.eq.s32.totalorder %s90, 0
      %p394 = por %p392, %p393
      %p395 = scmp.ne.s32.totalorder %s383, %s384
      %p396 = scmp.eq.s32.totalorder %s91, 1
      %p397 = por %p395, %p396
      %p399 = scmp.ne.s32.totalorder %s384, %s398
      %p400 = scmp.eq.s32.totalorder %s91, 0
      %p401 = por %p399, %p400
      %s403 = sadd.s32 %s402, 1
      %p406 = scmp.eq.s32.totalorder %s85, 1
      %p407 = scmp.ne.s32.totalorder %s402, %s404
      %p408 = scmp.eq.s32.totalorder %s85, 0
      %p409 = por %p407, %p408
      %p410 = scmp.ne.s32.totalorder %s402, %s404
      %p411 = scmp.eq.s32.totalorder %s90, 1
      %p412 = por %p410, %p411
      %p413 = scmp.ne.s32.totalorder %s404, %s405
      %p414 = scmp.eq.s32.totalorder %s90, 0
      %p415 = por %p413, %p414
      %p416 = scmp.ne.s32.totalorder %s404, %s405
      %p417 = scmp.eq.s32.totalorder %s91, 1
      %p418 = por %p416, %p417
      %p420 = scmp.ne.s32.totalorder %s405, %s419
      %p421 = scmp.eq.s32.totalorder %s91, 0
      %p422 = por %p420, %p421
      %s424 = sadd.s32 %s423, 1
      %p427 = scmp.eq.s32.totalorder %s85, 1
      %p428 = scmp.ne.s32.totalorder %s423, %s425
      %p429 = scmp.eq.s32.totalorder %s85, 0
      %p430 = por %p428, %p429
      %p431 = scmp.ne.s32.totalorder %s423, %s425
      %p432 = scmp.eq.s32.totalorder %s90, 1
      %p433 = por %p431, %p432
      %p434 = scmp.ne.s32.totalorder %s425, %s426
      %p435 = scmp.eq.s32.totalorder %s90, 0
      %p436 = por %p434, %p435
      %p437 = scmp.ne.s32.totalorder %s425, %s426
      %p438 = scmp.eq.s32.totalorder %s91, 1
      %p439 = por %p437, %p438
      %p441 = scmp.ne.s32.totalorder %s426, %s440
      %p442 = scmp.eq.s32.totalorder %s91, 0
      %p443 = por %p441, %p442
      %s445 = sadd.s32 %s444, 1
      %p448 = scmp.eq.s32.totalorder %s85, 1
      %p449 = scmp.ne.s32.totalorder %s444, %s446
      %p450 = scmp.eq.s32.totalorder %s85, 0
      %p451 = por %p449, %p450
      %p452 = scmp.ne.s32.totalorder %s444, %s446
      %p453 = scmp.eq.s32.totalorder %s90, 1
      %p454 = por %p452, %p453
      %p455 = scmp.ne.s32.totalorder %s446, %s447
      %p456 = scmp.eq.s32.totalorder %s90, 0
      %p457 = por %p455, %p456
      %p458 = scmp.ne.s32.totalorder %s446, %s447
      %p459 = scmp.eq.s32.totalorder %s91, 1
      %p460 = por %p458, %p459
      %p462 = scmp.ne.s32.totalorder %s447, %s461
      %p463 = scmp.eq.s32.totalorder %s91, 0
      %p464 = por %p462, %p463
      %s466 = sadd.s32 %s465, 1
      %p469 = scmp.eq.s32.totalorder %s85, 1
      %p470 = scmp.ne.s32.totalorder %s465, %s467
      %p471 = scmp.eq.s32.totalorder %s85, 0
      %p472 = por %p470, %p471
      %p473 = scmp.ne.s32.totalorder %s465, %s467
      %p474 = scmp.eq.s32.totalorder %s90, 1
      %p475 = por %p473, %p474
      %p476 = scmp.ne.s32.totalorder %s467, %s468
      %p477 = scmp.eq.s32.totalorder %s90, 0
      %p478 = por %p476, %p477
      %p479 = scmp.ne.s32.totalorder %s467, %s468
      %p480 = scmp.eq.s32.totalorder %s91, 1
      %p481 = por %p479, %p480
      %p483 = scmp.ne.s32.totalorder %s468, %s482
      %p484 = scmp.eq.s32.totalorder %s91, 0
      %p485 = por %p483, %p484
      %s487 = sadd.s32 %s486, 1
      %p490 = scmp.eq.s32.totalorder %s85, 1
      %p491 = scmp.ne.s32.totalorder %s486, %s488
      %p492 = scmp.eq.s32.totalorder %s85, 0
      %p493 = por %p491, %p492
      %p494 = scmp.ne.s32.totalorder %s486, %s488
      %p495 = scmp.eq.s32.totalorder %s90, 1
      %p496 = por %p494, %p495
      %p497 = scmp.ne.s32.totalorder %s488, %s489
      %p498 = scmp.eq.s32.totalorder %s90, 0
      %p499 = por %p497, %p498
      %p500 = scmp.ne.s32.totalorder %s488, %s489
      %p501 = scmp.eq.s32.totalorder %s91, 1
      %p502 = por %p500, %p501
      %p504 = scmp.ne.s32.totalorder %s489, %s503
      %p505 = scmp.eq.s32.totalorder %s91, 0
      %p506 = por %p504, %p505
      %s508 = sadd.s32 %s507, 1
      %p511 = scmp.eq.s32.totalorder %s85, 1
      %p512 = scmp.ne.s32.totalorder %s507, %s509
      %p513 = scmp.eq.s32.totalorder %s85, 0
      %p514 = por %p512, %p513
      %p515 = scmp.ne.s32.totalorder %s507, %s509
      %p516 = scmp.eq.s32.totalorder %s90, 1
      %p517 = por %p515, %p516
      %p518 = scmp.ne.s32.totalorder %s509, %s510
      %p519 = scmp.eq.s32.totalorder %s90, 0
      %p520 = por %p518, %p519
      %p521 = scmp.ne.s32.totalorder %s509, %s510
      %p522 = scmp.eq.s32.totalorder %s91, 1
      %p523 = por %p521, %p522
      %p525 = scmp.ne.s32.totalorder %s510, %s524
      %p526 = scmp.eq.s32.totalorder %s91, 0
      %p527 = por %p525, %p526
      %s529 = sadd.s32 %s528, 1
      %p532 = scmp.eq.s32.totalorder %s85, 1
      %p533 = scmp.ne.s32.totalorder %s528, %s530
      %p534 = scmp.eq.s32.totalorder %s85, 0
      %p535 = por %p533, %p534
      %p536 = scmp.ne.s32.totalorder %s528, %s530
      %p537 = scmp.eq.s32.totalorder %s90, 1
      %p538 = por %p536, %p537
      %p539 = scmp.ne.s32.totalorder %s530, %s531
      %p540 = scmp.eq.s32.totalorder %s90, 0
      %p541 = por %p539, %p540
      %p542 = scmp.ne.s32.totalorder %s530, %s531
      %p543 = scmp.eq.s32.totalorder %s91, 1
      %p544 = por %p542, %p543
      %p546 = scmp.ne.s32.totalorder %s531, %s545
      %p547 = scmp.eq.s32.totalorder %s91, 0
      %p548 = por %p546, %p547
      %s550 = sadd.s32 %s549, 1
      %p553 = scmp.eq.s32.totalorder %s85, 1
      %p554 = scmp.ne.s32.totalorder %s549, %s551
      %p555 = scmp.eq.s32.totalorder %s85, 0
      %p556 = por %p554, %p555
      %p557 = scmp.ne.s32.totalorder %s549, %s551
      %p558 = scmp.eq.s32.totalorder %s90, 1
      %p559 = por %p557, %p558
      %p560 = scmp.ne.s32.totalorder %s551, %s552
      %p561 = scmp.eq.s32.totalorder %s90, 0
      %p562 = por %p560, %p561
      %p563 = scmp.ne.s32.totalorder %s551, %s552
      %p564 = scmp.eq.s32.totalorder %s91, 1
      %p565 = por %p563, %p564
      %p567 = scmp.ne.s32.totalorder %s552, %s566
      %p568 = scmp.eq.s32.totalorder %s91, 0
      %p569 = por %p567, %p568
      %s571 = sadd.s32 %s570, 1
      %p574 = scmp.eq.s32.totalorder %s85, 1
      %p575 = scmp.ne.s32.totalorder %s570, %s572
      %p576 = scmp.eq.s32.totalorder %s85, 0
      %p577 = por %p575, %p576
      %p578 = scmp.ne.s32.totalorder %s570, %s572
      %p579 = scmp.eq.s32.totalorder %s90, 1
      %p580 = por %p578, %p579
      %p581 = scmp.ne.s32.totalorder %s572, %s573
      %p582 = scmp.eq.s32.totalorder %s90, 0
      %p583 = por %p581, %p582
      %p584 = scmp.ne.s32.totalorder %s572, %s573
      %p585 = scmp.eq.s32.totalorder %s91, 1
      %p586 = por %p584, %p585
      %p588 = scmp.ne.s32.totalorder %s573, %s587
      %p589 = scmp.eq.s32.totalorder %s91, 0
      %p590 = por %p588, %p589
      %s592 = sadd.s32 %s591, 1
      %p595 = scmp.eq.s32.totalorder %s85, 1
      %p596 = scmp.ne.s32.totalorder %s591, %s593
      %p597 = scmp.eq.s32.totalorder %s85, 0
      %p598 = por %p596, %p597
      %p599 = scmp.ne.s32.totalorder %s591, %s593
      %p600 = scmp.eq.s32.totalorder %s90, 1
      %p601 = por %p599, %p600
      %p602 = scmp.ne.s32.totalorder %s593, %s594
      %p603 = scmp.eq.s32.totalorder %s90, 0
      %p604 = por %p602, %p603
      %p605 = scmp.ne.s32.totalorder %s593, %s594
      %p606 = scmp.eq.s32.totalorder %s91, 1
      %p607 = por %p605, %p606
      %p609 = scmp.ne.s32.totalorder %s594, %s608
      %p610 = scmp.eq.s32.totalorder %s91, 0
      %p611 = por %p609, %p610
      %s613 = sadd.s32 %s612, 1
      %p616 = scmp.eq.s32.totalorder %s85, 1
      %p617 = scmp.ne.s32.totalorder %s612, %s614
      %p618 = scmp.eq.s32.totalorder %s85, 0
      %p619 = por %p617, %p618
      %p620 = scmp.ne.s32.totalorder %s612, %s614
      %p621 = scmp.eq.s32.totalorder %s90, 1
      %p622 = por %p620, %p621
      %p623 = scmp.ne.s32.totalorder %s614, %s615
      %p624 = scmp.eq.s32.totalorder %s90, 0
      %p625 = por %p623, %p624
      %p626 = scmp.ne.s32.totalorder %s614, %s615
      %p627 = scmp.eq.s32.totalorder %s91, 1
      %p628 = por %p626, %p627
      %p630 = scmp.ne.s32.totalorder %s615, %s629
      %p631 = scmp.eq.s32.totalorder %s91, 0
      %p632 = por %p630, %p631
      %s634 = sadd.s32 %s633, 1
      %p637 = scmp.eq.s32.totalorder %s85, 1
      %p638 = scmp.ne.s32.totalorder %s633, %s635
      %p639 = scmp.eq.s32.totalorder %s85, 0
      %p640 = por %p638, %p639
      %p641 = scmp.ne.s32.totalorder %s633, %s635
      %p642 = scmp.eq.s32.totalorder %s90, 1
      %p643 = por %p641, %p642
      %p644 = scmp.ne.s32.totalorder %s635, %s636
      %p645 = scmp.eq.s32.totalorder %s90, 0
      %p646 = por %p644, %p645
      %p647 = scmp.ne.s32.totalorder %s635, %s636
      %p648 = scmp.eq.s32.totalorder %s91, 1
      %p649 = por %p647, %p648
      %p651 = scmp.ne.s32.totalorder %s636, %s650
      %p652 = scmp.eq.s32.totalorder %s91, 0
      %p653 = por %p651, %p652
      %s655 = sadd.s32 %s654, 1
      %p658 = scmp.eq.s32.totalorder %s85, 1
      %p659 = scmp.ne.s32.totalorder %s654, %s656
      %p660 = scmp.eq.s32.totalorder %s85, 0
      %p661 = por %p659, %p660
      %p662 = scmp.ne.s32.totalorder %s654, %s656
      %p663 = scmp.eq.s32.totalorder %s90, 1
      %p664 = por %p662, %p663
      %p665 = scmp.ne.s32.totalorder %s656, %s657
      %p666 = scmp.eq.s32.totalorder %s90, 0
      %p667 = por %p665, %p666
      %p668 = scmp.ne.s32.totalorder %s656, %s657
      %p669 = scmp.eq.s32.totalorder %s91, 1
      %p670 = por %p668, %p669
      %p672 = scmp.ne.s32.totalorder %s657, %s671
      %p673 = scmp.eq.s32.totalorder %s91, 0
      %p674 = por %p672, %p673
      %s676 = sadd.s32 %s675, 1
      %p679 = scmp.eq.s32.totalorder %s85, 1
      %p680 = scmp.ne.s32.totalorder %s675, %s677
      %p681 = scmp.eq.s32.totalorder %s85, 0
      %p682 = por %p680, %p681
      %p683 = scmp.ne.s32.totalorder %s675, %s677
      %p684 = scmp.eq.s32.totalorder %s90, 1
      %p685 = por %p683, %p684
      %p686 = scmp.ne.s32.totalorder %s677, %s678
      %p687 = scmp.eq.s32.totalorder %s90, 0
      %p688 = por %p686, %p687
      %p689 = scmp.ne.s32.totalorder %s677, %s678
      %p690 = scmp.eq.s32.totalorder %s91, 1
      %p691 = por %p689, %p690
      %p693 = scmp.ne.s32.totalorder %s678, %s692
      %p694 = scmp.eq.s32.totalorder %s91, 0
      %p695 = por %p693, %p694
      %s697 = sadd.s32 %s696, 1
      %p700 = scmp.eq.s32.totalorder %s85, 1
      %p701 = scmp.ne.s32.totalorder %s696, %s698
      %p702 = scmp.eq.s32.totalorder %s85, 0
      %p703 = por %p701, %p702
      %p704 = scmp.ne.s32.totalorder %s696, %s698
      %p705 = scmp.eq.s32.totalorder %s90, 1
      %p706 = por %p704, %p705
      %p707 = scmp.ne.s32.totalorder %s698, %s699
      %p708 = scmp.eq.s32.totalorder %s90, 0
      %p709 = por %p707, %p708
      %p710 = scmp.ne.s32.totalorder %s698, %s699
      %p711 = scmp.eq.s32.totalorder %s91, 1
      %p712 = por %p710, %p711
      %p714 = scmp.ne.s32.totalorder %s699, %s713
      %p715 = scmp.eq.s32.totalorder %s91, 0
      %p716 = por %p714, %p715
      %s717 = ssub.s32 %s85, %s92
      %p718 = scmp.eq.s32.totalorder %s717, 0
      %s720 = sadd.s32 %s719, 1
      %s721 = scalar_select %p718, %s719, %s720
      %p724 = pneg %p718
      %p725 = scmp.eq.s32.totalorder %s85, 1
      %p726 = por %p724, %p725
      %p727 = scmp.ne.s32.totalorder %s719, %s722
      %p728 = scmp.eq.s32.totalorder %s85, 0
      %p729 = por %p727, %p728
      %p730 = scmp.ne.s32.totalorder %s719, %s722
      %p731 = scmp.eq.s32.totalorder %s90, 1
      %p732 = por %p730, %p731
      %p733 = scmp.ne.s32.totalorder %s722, %s723
      %p734 = scmp.eq.s32.totalorder %s90, 0
      %p735 = por %p733, %p734
      %p736 = scmp.ne.s32.totalorder %s722, %s723
      %p737 = scmp.eq.s32.totalorder %s91, 1
      %p738 = por %p736, %p737
      %p740 = scmp.ne.s32.totalorder %s723, %s739
      %p741 = scmp.eq.s32.totalorder %s91, 0
      %p742 = por %p740, %p741
      %s743 = ssub.s32 %s85, %s92
      %p744 = scmp.eq.s32.totalorder %s743, 0
      %s746 = sadd.s32 %s745, 1
      %s747 = scalar_select %p744, %s745, %s746
      %p750 = pneg %p744
      %p751 = scmp.eq.s32.totalorder %s85, 1
      %p752 = por %p750, %p751
      %p753 = scmp.ne.s32.totalorder %s745, %s748
      %p754 = scmp.eq.s32.totalorder %s85, 0
      %p755 = por %p753, %p754
      %p756 = scmp.ne.s32.totalorder %s745, %s748
      %p757 = scmp.eq.s32.totalorder %s90, 1
      %p758 = por %p756, %p757
      %p759 = scmp.ne.s32.totalorder %s748, %s749
      %p760 = scmp.eq.s32.totalorder %s90, 0
      %p761 = por %p759, %p760
      %p762 = scmp.ne.s32.totalorder %s748, %s749
      %p763 = scmp.eq.s32.totalorder %s91, 1
      %p764 = por %p762, %p763
      %p766 = scmp.ne.s32.totalorder %s749, %s765
      %p767 = scmp.eq.s32.totalorder %s91, 0
      %p768 = por %p766, %p767
      %p769 = scmp.le.s32.totalorder 1, %s85
      %p770 = scmp.lt.s32.totalorder %s85, 3
      %p771 = pnand %p769, %p770
      %p772 = pneg %p771
      // Predicated region
      $region9: #{tpu_custom_call.1} parent=5 // pred_check
        _
      $region10: #{tpu_custom_call.1} parent=5 // pred_check_branch
        %774 = sbr.rel (%p771) target = $region12
      $region11: #{tpu_custom_call.1} parent=5 // pred_region
        %s775 = ssub.s32 %s85, 1
        // Predicated region
        $region13: #{tpu_custom_call.1} parent=11 // pred_check
          %p776 = pneg %p184
        $region14: #{tpu_custom_call.1} parent=11 // pred_check_branch
          %778 = sbr.rel (%p776) target = $region16
        $region15: #{tpu_custom_call.1} parent=11 // pred_region
          _
        $region16: #{tpu_custom_call.1} parent=11 // pred_fallthru
          _
        // Predicated region
        $region17: #{tpu_custom_call.1} parent=11 // pred_check
          %p779 = pneg %p205
        $region18: #{tpu_custom_call.1} parent=11 // pred_check_branch
          %781 = sbr.rel (%p779) target = $region20
        $region19: #{tpu_custom_call.1} parent=11 // pred_region
          %s783 = ssub.s32 16, 16
          %784 = vsyncadd [#allocation6], %s783
          %s786 = sshll.u32 [#allocation5], 4
          %s787 = int_to_ptr.vmem [resolvable:$true] %s786
          %789 = dma.hbm_to_vmem [thread:$0]  %s9, 16, %s787, [#allocation6]
        $region20: #{tpu_custom_call.1} parent=11 // pred_fallthru
          _
        // Predicated region
        $region21: #{tpu_custom_call.1} parent=11 // pred_check
          %p790 = pneg %p226
        $region22: #{tpu_custom_call.1} parent=11 // pred_check_branch
          %792 = sbr.rel (%p790) target = $region24
        $region23: #{tpu_custom_call.1} parent=11 // pred_region
          %s794 = ssub.s32 256, 256
          %795 = vsyncadd [#allocation6], %s794
          %s796 = sshll.u32 [#allocation7], 4
          %s797 = int_to_ptr.vmem [resolvable:$true] %s796
          %802 = dma.hbm_to_vmem [thread:$0]  %s11, 256, %s797, [#allocation6], 64, 64, 4
        $region24: #{tpu_custom_call.1} parent=11 // pred_fallthru
          _
        // Predicated region
        $region25: #{tpu_custom_call.1} parent=11 // pred_check
          %p803 = pneg %p247
        $region26: #{tpu_custom_call.1} parent=11 // pred_check_branch
          %805 = sbr.rel (%p803) target = $region28
        $region27: #{tpu_custom_call.1} parent=11 // pred_region
          %s807 = ssub.s32 16, 16
          %808 = vsyncadd [#allocation9], %s807
          %s810 = sshll.u32 [#allocation8], 4
          %s811 = int_to_ptr.vmem [resolvable:$true] %s810
          %813 = dma.hbm_to_vmem [thread:$0]  %s13, 16, %s811, [#allocation9]
        $region28: #{tpu_custom_call.1} parent=11 // pred_fallthru
          _
        // Predicated region
        $region29: #{tpu_custom_call.1} parent=11 // pred_check
          %p814 = pneg %p268
        $region30: #{tpu_custom_call.1} parent=11 // pred_check_branch
          %816 = sbr.rel (%p814) target = $region32
        $region31: #{tpu_custom_call.1} parent=11 // pred_region
          %s818 = ssub.s32 256, 256
          %819 = vsyncadd [#allocation9], %s818
          %s820 = sshll.u32 [#allocation10], 4
          %s821 = int_to_ptr.vmem [resolvable:$true] %s820
          %826 = dma.hbm_to_vmem [thread:$0]  %s15, 256, %s821, [#allocation9], 64, 64, 4
        $region32: #{tpu_custom_call.1} parent=11 // pred_fallthru
          _
        // Predicated region
        $region33: #{tpu_custom_call.1} parent=11 // pred_check
          %p827 = pneg %p289
        $region34: #{tpu_custom_call.1} parent=11 // pred_check_branch
          %829 = sbr.rel (%p827) target = $region36
        $region35: #{tpu_custom_call.1} parent=11 // pred_region
          %s831 = ssub.s32 16, 16
          %832 = vsyncadd [#allocation12], %s831
          %s834 = sshll.u32 [#allocation11], 4
          %s835 = int_to_ptr.vmem [resolvable:$true] %s834
          %837 = dma.hbm_to_vmem [thread:$0]  %s17, 16, %s835, [#allocation12]
        $region36: #{tpu_custom_call.1} parent=11 // pred_fallthru
          _
        // Predicated region
        $region37: #{tpu_custom_call.1} parent=11 // pred_check
          %p838 = pneg %p310
        $region38: #{tpu_custom_call.1} parent=11 // pred_check_branch
          %840 = sbr.rel (%p838) target = $region40
        $region39: #{tpu_custom_call.1} parent=11 // pred_region
          _
        $region40: #{tpu_custom_call.1} parent=11 // pred_fallthru
          _
        // Predicated region
        $region41: #{tpu_custom_call.1} parent=11 // pred_check
          %p841 = pneg %p331
        $region42: #{tpu_custom_call.1} parent=11 // pred_check_branch
          %843 = sbr.rel (%p841) target = $region44
        $region43: #{tpu_custom_call.1} parent=11 // pred_region
          %s845 = ssub.s32 16, 16
          %846 = vsyncadd [#allocation12], %s845
          %s848 = sshll.u32 [#allocation13], 4
          %s849 = int_to_ptr.vmem [resolvable:$true] %s848
          %851 = dma.hbm_to_vmem [thread:$0]  %s21, 16, %s849, [#allocation12]
        $region44: #{tpu_custom_call.1} parent=11 // pred_fallthru
          _
        // Predicated region
        $region45: #{tpu_custom_call.1} parent=11 // pred_check
          %p852 = pneg %p352
        $region46: #{tpu_custom_call.1} parent=11 // pred_check_branch
          %854 = sbr.rel (%p852) target = $region48
        $region47: #{tpu_custom_call.1} parent=11 // pred_region
          %s856 = ssub.s32 16, 16
          %857 = vsyncadd [#allocation15], %s856
          %s859 = sshll.u32 [#allocation14], 4
          %s860 = int_to_ptr.vmem [resolvable:$true] %s859
          %862 = dma.hbm_to_vmem [thread:$0]  %s23, 16, %s860, [#allocation15]
        $region48: #{tpu_custom_call.1} parent=11 // pred_fallthru
          _
        // Predicated region
        $region49: #{tpu_custom_call.1} parent=11 // pred_check
          %p863 = pneg %p373
        $region50: #{tpu_custom_call.1} parent=11 // pred_check_branch
          %865 = sbr.rel (%p863) target = $region52
        $region51: #{tpu_custom_call.1} parent=11 // pred_region
          %s867 = ssub.s32 16, 16
          %868 = vsyncadd [#allocation15], %s867
          %s870 = sshll.u32 [#allocation16], 4
          %s871 = int_to_ptr.vmem [resolvable:$true] %s870
          %873 = dma.hbm_to_vmem [thread:$0]  %s25, 16, %s871, [#allocation15]
        $region52: #{tpu_custom_call.1} parent=11 // pred_fallthru
          _
        // Predicated region
        $region53: #{tpu_custom_call.1} parent=11 // pred_check
          %p874 = pneg %p394
        $region54: #{tpu_custom_call.1} parent=11 // pred_check_branch
          %876 = sbr.rel (%p874) target = $region56
        $region55: #{tpu_custom_call.1} parent=11 // pred_region
          %s878 = ssub.s32 256, 256
          %879 = vsyncadd [#allocation18], %s878
          %s880 = sshll.u32 [#allocation17], 4
          %s881 = int_to_ptr.vmem [resolvable:$true] %s880
          %886 = dma.hbm_to_vmem [thread:$0]  %s27, 256, %s881, [#allocation18], 64, 64, 4
        $region56: #{tpu_custom_call.1} parent=11 // pred_fallthru
          _
        // Predicated region
        $region57: #{tpu_custom_call.1} parent=11 // pred_check
          %p887 = pneg %p415
        $region58: #{tpu_custom_call.1} parent=11 // pred_check_branch
          %889 = sbr.rel (%p887) target = $region60
        $region59: #{tpu_custom_call.1} parent=11 // pred_region
          %s891 = ssub.s32 16, 16
          %892 = vsyncadd [#allocation18], %s891
          %s894 = sshll.u32 [#allocation19], 4
          %s895 = int_to_ptr.vmem [resolvable:$true] %s894
          %897 = dma.hbm_to_vmem [thread:$0]  %s29, 16, %s895, [#allocation18]
        $region60: #{tpu_custom_call.1} parent=11 // pred_fallthru
          _
        // Predicated region
        $region61: #{tpu_custom_call.1} parent=11 // pred_check
          %p898 = pneg %p436
        $region62: #{tpu_custom_call.1} parent=11 // pred_check_branch
          %900 = sbr.rel (%p898) target = $region64
        $region63: #{tpu_custom_call.1} parent=11 // pred_region
          %s902 = ssub.s32 256, 256
          %903 = vsyncadd [#allocation21], %s902
          %s904 = sshll.u32 [#allocation20], 4
          %s905 = int_to_ptr.vmem [resolvable:$true] %s904
          %910 = dma.hbm_to_vmem [thread:$0]  %s31, 256, %s905, [#allocation21], 64, 64, 4
        $region64: #{tpu_custom_call.1} parent=11 // pred_fallthru
          _
        // Predicated region
        $region65: #{tpu_custom_call.1} parent=11 // pred_check
          %p911 = pneg %p457
        $region66: #{tpu_custom_call.1} parent=11 // pred_check_branch
          %913 = sbr.rel (%p911) target = $region68
        $region67: #{tpu_custom_call.1} parent=11 // pred_region
          %s915 = ssub.s32 16, 16
          %916 = vsyncadd [#allocation21], %s915
          %s918 = sshll.u32 [#allocation22], 4
          %s919 = int_to_ptr.vmem [resolvable:$true] %s918
          %921 = dma.hbm_to_vmem [thread:$0]  %s33, 16, %s919, [#allocation21]
        $region68: #{tpu_custom_call.1} parent=11 // pred_fallthru
          _
        // Predicated region
        $region69: #{tpu_custom_call.1} parent=11 // pred_check
          %p922 = pneg %p478
        $region70: #{tpu_custom_call.1} parent=11 // pred_check_branch
          %924 = sbr.rel (%p922) target = $region72
        $region71: #{tpu_custom_call.1} parent=11 // pred_region
          %s926 = ssub.s32 256, 256
          %927 = vsyncadd [#allocation24], %s926
          %s928 = sshll.u32 [#allocation23], 4
          %s929 = int_to_ptr.vmem [resolvable:$true] %s928
          %934 = dma.hbm_to_vmem [thread:$0]  %s35, 256, %s929, [#allocation24], 64, 64, 4
        $region72: #{tpu_custom_call.1} parent=11 // pred_fallthru
          _
        // Predicated region
        $region73: #{tpu_custom_call.1} parent=11 // pred_check
          %p935 = pneg %p499
        $region74: #{tpu_custom_call.1} parent=11 // pred_check_branch
          %937 = sbr.rel (%p935) target = $region76
        $region75: #{tpu_custom_call.1} parent=11 // pred_region
          %s939 = ssub.s32 16, 16
          %940 = vsyncadd [#allocation24], %s939
          %s942 = sshll.u32 [#allocation25], 4
          %s943 = int_to_ptr.vmem [resolvable:$true] %s942
          %945 = dma.hbm_to_vmem [thread:$0]  %s37, 16, %s943, [#allocation24]
        $region76: #{tpu_custom_call.1} parent=11 // pred_fallthru
          _
        // Predicated region
        $region77: #{tpu_custom_call.1} parent=11 // pred_check
          %p946 = pneg %p520
        $region78: #{tpu_custom_call.1} parent=11 // pred_check_branch
          %948 = sbr.rel (%p946) target = $region80
        $region79: #{tpu_custom_call.1} parent=11 // pred_region
          %s950 = ssub.s32 256, 256
          %951 = vsyncadd [#allocation27], %s950
          %s952 = sshll.u32 [#allocation26], 4
          %s953 = int_to_ptr.vmem [resolvable:$true] %s952
          %958 = dma.hbm_to_vmem [thread:$0]  %s39, 256, %s953, [#allocation27], 64, 64, 4
        $region80: #{tpu_custom_call.1} parent=11 // pred_fallthru
          _
        // Predicated region
        $region81: #{tpu_custom_call.1} parent=11 // pred_check
          %p959 = pneg %p541
        $region82: #{tpu_custom_call.1} parent=11 // pred_check_branch
          %961 = sbr.rel (%p959) target = $region84
        $region83: #{tpu_custom_call.1} parent=11 // pred_region
          _
        $region84: #{tpu_custom_call.1} parent=11 // pred_fallthru
          _
        // Predicated region
        $region85: #{tpu_custom_call.1} parent=11 // pred_check
          %p962 = pneg %p562
        $region86: #{tpu_custom_call.1} parent=11 // pred_check_branch
          %964 = sbr.rel (%p962) target = $region88
        $region87: #{tpu_custom_call.1} parent=11 // pred_region
          _
        $region88: #{tpu_custom_call.1} parent=11 // pred_fallthru
          _
        // Predicated region
        $region89: #{tpu_custom_call.1} parent=11 // pred_check
          %p965 = pneg %p583
        $region90: #{tpu_custom_call.1} parent=11 // pred_check_branch
          %967 = sbr.rel (%p965) target = $region92
        $region91: #{tpu_custom_call.1} parent=11 // pred_region
          _
        $region92: #{tpu_custom_call.1} parent=11 // pred_fallthru
          _
        // Predicated region
        $region93: #{tpu_custom_call.1} parent=11 // pred_check
          %p968 = pneg %p604
        $region94: #{tpu_custom_call.1} parent=11 // pred_check_branch
          %970 = sbr.rel (%p968) target = $region96
        $region95: #{tpu_custom_call.1} parent=11 // pred_region
          %s972 = ssub.s32 256, 256
          %973 = vsyncadd [#allocation27], %s972
          %s974 = sshll.u32 [#allocation28], 4
          %s975 = int_to_ptr.vmem [resolvable:$true] %s974
          %980 = dma.hbm_to_vmem [thread:$0]  %s47, 256, %s975, [#allocation27], 64, 64, 4
        $region96: #{tpu_custom_call.1} parent=11 // pred_fallthru
          _
        // Predicated region
        $region97: #{tpu_custom_call.1} parent=11 // pred_check
          %p981 = pneg %p625
        $region98: #{tpu_custom_call.1} parent=11 // pred_check_branch
          %983 = sbr.rel (%p981) target = $region100
        $region99: #{tpu_custom_call.1} parent=11 // pred_region
          _
        $region100: #{tpu_custom_call.1} parent=11 // pred_fallthru
          _
        // Predicated region
        $region101: #{tpu_custom_call.1} parent=11 // pred_check
          %p984 = pneg %p646
        $region102: #{tpu_custom_call.1} parent=11 // pred_check_branch
          %986 = sbr.rel (%p984) target = $region104
        $region103: #{tpu_custom_call.1} parent=11 // pred_region
          _
        $region104: #{tpu_custom_call.1} parent=11 // pred_fallthru
          _
        // Predicated region
        $region105: #{tpu_custom_call.1} parent=11 // pred_check
          %p987 = pneg %p667
        $region106: #{tpu_custom_call.1} parent=11 // pred_check_branch
          %989 = sbr.rel (%p987) target = $region108
        $region107: #{tpu_custom_call.1} parent=11 // pred_region
          _
        $region108: #{tpu_custom_call.1} parent=11 // pred_fallthru
          _
        // Predicated region
        $region109: #{tpu_custom_call.1} parent=11 // pred_check
          %p990 = pneg %p688
        $region110: #{tpu_custom_call.1} parent=11 // pred_check_branch
          %992 = sbr.rel (%p990) target = $region112
        $region111: #{tpu_custom_call.1} parent=11 // pred_region
          _
        $region112: #{tpu_custom_call.1} parent=11 // pred_fallthru
          _
        // Predicated region
        $region113: #{tpu_custom_call.1} parent=11 // pred_check
          %p993 = pneg %p709
        $region114: #{tpu_custom_call.1} parent=11 // pred_check_branch
          %995 = sbr.rel (%p993) target = $region116
        $region115: #{tpu_custom_call.1} parent=11 // pred_region
          _
        $region116: #{tpu_custom_call.1} parent=11 // pred_fallthru
          _
      $region12: #{tpu_custom_call.1} parent=5 // pred_fallthru
        _
      %p996 = scmp.lt.s32.totalorder %s85, 2
      // Predicated region
      $region117: #{tpu_custom_call.1} parent=5 // pred_check
        %p997 = pneg %p996
      $region118: #{tpu_custom_call.1} parent=5 // pred_check_branch
        %999 = sbr.rel (%p997) target = $region120
      $region119: #{tpu_custom_call.1} parent=5 // pred_region
        // Predicated region
        $region121: #{tpu_custom_call.1} parent=119 // pred_check
          %p1000 = pneg %p105
        $region122: #{tpu_custom_call.1} parent=119 // pred_check_branch
          %1002 = sbr.rel (%p1000) target = $region124
        $region123: #{tpu_custom_call.1} parent=119 // pred_region
          %p1003 = scmp.lt.s32.totalorder %s85, 1
          %s1004 = scalar_select %p1003, %s85, 1
          %s1005 = smul.addr %s1004, 8
          %s1006 = scalar_lea.vmem %s1, %s1005
        $region124: #{tpu_custom_call.1} parent=119 // pred_fallthru
          _
        // Predicated region
        $region125: #{tpu_custom_call.1} parent=119 // pred_check
          %p1007 = pneg %p131
        $region126: #{tpu_custom_call.1} parent=119 // pred_check_branch
          %1009 = sbr.rel (%p1007) target = $region128
        $region127: #{tpu_custom_call.1} parent=119 // pred_region
          %p1010 = scmp.lt.s32.totalorder %s85, 1
          %s1011 = scalar_select %p1010, %s85, 1
          %s1012 = smul.addr %s1011, 8
          %s1013 = scalar_lea.vmem %s3, %s1012
        $region128: #{tpu_custom_call.1} parent=119 // pred_fallthru
          _
        // Predicated region
        $region129: #{tpu_custom_call.1} parent=119 // pred_check
          %p1014 = pneg %p157
        $region130: #{tpu_custom_call.1} parent=119 // pred_check_branch
          %1016 = sbr.rel (%p1014) target = $region132
        $region131: #{tpu_custom_call.1} parent=119 // pred_region
          %s1017 = sand.u32 %s147, 1
          %s1018 = scalar_lea.sflag [#allocation3], %s1017
          %s1019 = sand.u32 %s147, 1
          %s1020 = scalar_lea.vmem [#allocation2], %s1019
          %s1022 = ssub.s32 16, 16
          %1023 = vsyncadd %s1018, %s1022
          %s1024 = smul.addr %s85, 16
          %s1025 = scalar_lea.hbm %s5, %s1024
          %s1027 = sshll.u32 %s1020, 4
          %s1028 = int_to_ptr.vmem [resolvable:$true] %s1027
          %1030 = dma.hbm_to_vmem [thread:$0]  %s1025, 16, %s1028, %s1018
        $region132: #{tpu_custom_call.1} parent=119 // pred_fallthru
          _
      $region120: #{tpu_custom_call.1} parent=5 // pred_fallthru
        _
      %p1031 = scmp.le.s32.totalorder 1, %s85
      %p1032 = scmp.lt.s32.totalorder %s85, 3
      %p1033 = pnand %p1031, %p1032
      %p1034 = pneg %p1033
      // Predicated region
      $region133: #{tpu_custom_call.1} parent=5 // pred_check
        _
      $region134: #{tpu_custom_call.1} parent=5 // pred_check_branch
        %1036 = sbr.rel (%p1033) target = $region136
      $region135: #{tpu_custom_call.1} parent=5 // pred_region
        %s1037 = ssub.s32 %s85, 1
        %s1038 = sand.u32 %s150, 1
        %s1039 = scalar_lea.sflag [#allocation3], %s1038
        %s1040 = sand.u32 %s150, 1
        %s1041 = scalar_lea.vmem [#allocation2], %s1040
        // Predicated region
        $region137: #{tpu_custom_call.1} parent=135 // pred_check
          %p1042 = pneg %p163
        $region138: #{tpu_custom_call.1} parent=135 // pred_check_branch
          %1044 = sbr.rel (%p1042) target = $region140
        $region139: #{tpu_custom_call.1} parent=135 // pred_region
          %1045 = dma.done %s1039, 16
        $region140: #{tpu_custom_call.1} parent=135 // pred_fallthru
          _
        // Predicated region
        $region141: #{tpu_custom_call.1} parent=135 // pred_check
          %p1046 = pneg %p205
        $region142: #{tpu_custom_call.1} parent=135 // pred_check_branch
          %1048 = sbr.rel (%p1046) target = $region144
        $region143: #{tpu_custom_call.1} parent=135 // pred_region
          %1049 = dma.done [#allocation6], 16
        $region144: #{tpu_custom_call.1} parent=135 // pred_fallthru
          _
        // Predicated region
        $region145: #{tpu_custom_call.1} parent=135 // pred_check
          %p1050 = pneg %p226
        $region146: #{tpu_custom_call.1} parent=135 // pred_check_branch
          %1052 = sbr.rel (%p1050) target = $region148
        $region147: #{tpu_custom_call.1} parent=135 // pred_region
          %1053 = dma.done [#allocation6], 256
        $region148: #{tpu_custom_call.1} parent=135 // pred_fallthru
          _
        // Predicated region
        $region149: #{tpu_custom_call.1} parent=135 // pred_check
          %p1054 = pneg %p247
        $region150: #{tpu_custom_call.1} parent=135 // pred_check_branch
          %1056 = sbr.rel (%p1054) target = $region152
        $region151: #{tpu_custom_call.1} parent=135 // pred_region
          %1057 = dma.done [#allocation9], 16
        $region152: #{tpu_custom_call.1} parent=135 // pred_fallthru
          _
        // Predicated region
        $region153: #{tpu_custom_call.1} parent=135 // pred_check
          %p1058 = pneg %p268
        $region154: #{tpu_custom_call.1} parent=135 // pred_check_branch
          %1060 = sbr.rel (%p1058) target = $region156
        $region155: #{tpu_custom_call.1} parent=135 // pred_region
          %1061 = dma.done [#allocation9], 256
        $region156: #{tpu_custom_call.1} parent=135 // pred_fallthru
          _
        // Predicated region
        $region157: #{tpu_custom_call.1} parent=135 // pred_check
          %p1062 = pneg %p289
        $region158: #{tpu_custom_call.1} parent=135 // pred_check_branch
          %1064 = sbr.rel (%p1062) target = $region160
        $region159: #{tpu_custom_call.1} parent=135 // pred_region
          %1065 = dma.done [#allocation12], 16
        $region160: #{tpu_custom_call.1} parent=135 // pred_fallthru
          _
        // Predicated region
        $region161: #{tpu_custom_call.1} parent=135 // pred_check
          %p1066 = pneg %p331
        $region162: #{tpu_custom_call.1} parent=135 // pred_check_branch
          %1068 = sbr.rel (%p1066) target = $region164
        $region163: #{tpu_custom_call.1} parent=135 // pred_region
          %1069 = dma.done [#allocation12], 16
        $region164: #{tpu_custom_call.1} parent=135 // pred_fallthru
          _
        // Predicated region
        $region165: #{tpu_custom_call.1} parent=135 // pred_check
          %p1070 = pneg %p352
        $region166: #{tpu_custom_call.1} parent=135 // pred_check_branch
          %1072 = sbr.rel (%p1070) target = $region168
        $region167: #{tpu_custom_call.1} parent=135 // pred_region
          %1073 = dma.done [#allocation15], 16
        $region168: #{tpu_custom_call.1} parent=135 // pred_fallthru
          _
        // Predicated region
        $region169: #{tpu_custom_call.1} parent=135 // pred_check
          %p1074 = pneg %p373
        $region170: #{tpu_custom_call.1} parent=135 // pred_check_branch
          %1076 = sbr.rel (%p1074) target = $region172
        $region171: #{tpu_custom_call.1} parent=135 // pred_region
          %1077 = dma.done [#allocation15], 16
        $region172: #{tpu_custom_call.1} parent=135 // pred_fallthru
          _
        // Predicated region
        $region173: #{tpu_custom_call.1} parent=135 // pred_check
          %p1078 = pneg %p394
        $region174: #{tpu_custom_call.1} parent=135 // pred_check_branch
          %1080 = sbr.rel (%p1078) target = $region176
        $region175: #{tpu_custom_call.1} parent=135 // pred_region
          %1081 = dma.done [#allocation18], 256
        $region176: #{tpu_custom_call.1} parent=135 // pred_fallthru
          _
        // Predicated region
        $region177: #{tpu_custom_call.1} parent=135 // pred_check
          %p1082 = pneg %p415
        $region178: #{tpu_custom_call.1} parent=135 // pred_check_branch
          %1084 = sbr.rel (%p1082) target = $region180
        $region179: #{tpu_custom_call.1} parent=135 // pred_region
          %1085 = dma.done [#allocation18], 16
        $region180: #{tpu_custom_call.1} parent=135 // pred_fallthru
          _
        // Predicated region
        $region181: #{tpu_custom_call.1} parent=135 // pred_check
          %p1086 = pneg %p436
        $region182: #{tpu_custom_call.1} parent=135 // pred_check_branch
          %1088 = sbr.rel (%p1086) target = $region184
        $region183: #{tpu_custom_call.1} parent=135 // pred_region
          %1089 = dma.done [#allocation21], 256
        $region184: #{tpu_custom_call.1} parent=135 // pred_fallthru
          _
        // Predicated region
        $region185: #{tpu_custom_call.1} parent=135 // pred_check
          %p1090 = pneg %p457
        $region186: #{tpu_custom_call.1} parent=135 // pred_check_branch
          %1092 = sbr.rel (%p1090) target = $region188
        $region187: #{tpu_custom_call.1} parent=135 // pred_region
          %1093 = dma.done [#allocation21], 16
        $region188: #{tpu_custom_call.1} parent=135 // pred_fallthru
          _
        // Predicated region
        $region189: #{tpu_custom_call.1} parent=135 // pred_check
          %p1094 = pneg %p478
        $region190: #{tpu_custom_call.1} parent=135 // pred_check_branch
          %1096 = sbr.rel (%p1094) target = $region192
        $region191: #{tpu_custom_call.1} parent=135 // pred_region
          %1097 = dma.done [#allocation24], 256
        $region192: #{tpu_custom_call.1} parent=135 // pred_fallthru
          _
        // Predicated region
        $region193: #{tpu_custom_call.1} parent=135 // pred_check
          %p1098 = pneg %p499
        $region194: #{tpu_custom_call.1} parent=135 // pred_check_branch
          %1100 = sbr.rel (%p1098) target = $region196
        $region195: #{tpu_custom_call.1} parent=135 // pred_region
          %1101 = dma.done [#allocation24], 16
        $region196: #{tpu_custom_call.1} parent=135 // pred_fallthru
          _
        // Predicated region
        $region197: #{tpu_custom_call.1} parent=135 // pred_check
          %p1102 = pneg %p520
        $region198: #{tpu_custom_call.1} parent=135 // pred_check_branch
          %1104 = sbr.rel (%p1102) target = $region200
        $region199: #{tpu_custom_call.1} parent=135 // pred_region
          %1105 = dma.done [#allocation27], 256
        $region200: #{tpu_custom_call.1} parent=135 // pred_fallthru
          _
        // Predicated region
        $region201: #{tpu_custom_call.1} parent=135 // pred_check
          %p1106 = pneg %p604
        $region202: #{tpu_custom_call.1} parent=135 // pred_check_branch
          %1108 = sbr.rel (%p1106) target = $region204
        $region203: #{tpu_custom_call.1} parent=135 // pred_region
          %1109 = dma.done [#allocation27], 256
        $region204: #{tpu_custom_call.1} parent=135 // pred_fallthru
          _
        %p1110 = scmp.lt.s32.totalorder %s90, 1
        %s1111 = scalar_select %p1110, %s90, 1
        %s1112 = smul.addr %s1111, 8
        %s1113 = scalar_lea.vmem %s1, %s1112
        %p1114 = pneg %p111
        %p1115 = pneg %p108
        %p1116 = scmp.lt.s32.totalorder %s90, 1
        %s1117 = scalar_select %p1116, %s90, 1
        %s1118 = smul.addr %s1117, 8
        %s1119 = scalar_lea.vmem %s3, %s1118
        %p1120 = pneg %p137
        %p1121 = pneg %p134
        %s1122 = sand.u32 %s150, 1
        %s1123 = scalar_lea.sflag [#allocation3], %s1122
        %s1124 = sand.u32 %s150, 1
        %s1125 = scalar_lea.vmem [#allocation2], %s1124
        %p1126 = pneg %p163
        %p1127 = pneg %p160
        %p1128 = pneg %p184
        %p1129 = pneg %p181
        %p1130 = pneg %p205
        %p1131 = pneg %p202
        %p1132 = pneg %p226
        %p1133 = pneg %p223
        %p1134 = pneg %p247
        %p1135 = pneg %p244
        %p1136 = pneg %p268
        %p1137 = pneg %p265
        %p1138 = pneg %p289
        %p1139 = pneg %p286
        %p1140 = pneg %p310
        %p1141 = pneg %p307
        %p1142 = pneg %p331
        %p1143 = pneg %p328
        %p1144 = pneg %p352
        %p1145 = pneg %p349
        %p1146 = pneg %p373
        %p1147 = pneg %p370
        %p1148 = pneg %p394
        %p1149 = pneg %p391
        %p1150 = pneg %p415
        %p1151 = pneg %p412
        %p1152 = pneg %p436
        %p1153 = pneg %p433
        %p1154 = pneg %p457
        %p1155 = pneg %p454
        %p1156 = pneg %p478
        %p1157 = pneg %p475
        %p1158 = pneg %p499
        %p1159 = pneg %p496
        %p1160 = pneg %p520
        %p1161 = pneg %p517
        %p1162 = pneg %p541
        %p1163 = pneg %p538
        %p1164 = pneg %p562
        %p1165 = pneg %p559
        %p1166 = pneg %p583
        %p1167 = pneg %p580
        %p1168 = pneg %p604
        %p1169 = pneg %p601
        %p1170 = pneg %p625
        %p1171 = pneg %p622
        %p1172 = pneg %p646
        %p1173 = pneg %p643
        %p1174 = pneg %p667
        %p1175 = pneg %p664
        %p1176 = pneg %p688
        %p1177 = pneg %p685
        %p1178 = pneg %p709
        %p1179 = pneg %p706
        %p1180 = pneg %p735
        %p1181 = pneg %p732
        %s1182 = sand.u32 %s722, 1
        %s1183 = scalar_lea.sflag [#allocation4], %s1182
        %s1184 = sand.u32 %s722, 1
        %s1185 = smul.addr %s1184, 8
        %s1186 = scalar_lea.vmem [#allocation29], %s1185
        %p1187 = pneg %p761
        %p1188 = pneg %p758
        %s1189 = sand.u32 %s748, 1
        %s1190 = scalar_lea.sflag [#allocation31], %s1189
        %s1191 = sand.u32 %s748, 1
        %s1192 = smul.addr %s1191, 32
        %s1193 = scalar_lea.vmem [#allocation30], %s1192
        %p1194 = scmp.lt.s32.totalorder %s90, 1
        %s1195 = scalar_select %p1194, %s90, 1
        %s1196 = smul.addr %s1195, 8
        %s1197 = scalar_lea.vmem %s1, %s1196
        %p1198 = scmp.lt.s32.totalorder %s90, 1
        %s1199 = scalar_select %p1198, %s90, 1
        %s1200 = smul.addr %s1199, 8
        %s1201 = scalar_lea.vmem %s3, %s1200
        %v1203 = vld [vmem:[%s1197] sm:$0xff]
        %v1204 = vld [vmem:[%s1201] sm:$0xff]
        %v1205 = vlaneseq
        %v1206 = vshrl.u32 %v1205, 7
        %v1207 = vlaneseq
        %v1208 = vand.u32 %v1207, 127
        %vm1209 = vcmp.ge.s32.totalorder %v1206, %v1208
        %v1210 = vsel %vm1209, 0.0, -1e+10
        %v1211 = vld [vmem:[%s1041] sm:$0x1]
        %vm1212 = vcmp.eq.f32.partialorder %v1211, 0.0
        %v1213 = vsel %vm1212, -1e+10, 0.0
        %v1214 = vld [vmem:[%s7] sm:$0xf]
        %v1215 = vld [vmem:[%s7 + $0x4] sm:$0xf]
        %v1216 = vld [vmem:[%s7 + $0x8] sm:$0xf]
        %v1217 = vld [vmem:[%s7 + $0xc] sm:$0xf]
        %v1218 = vld [vmem:[#allocation5] sm:$0x1]
        %v1219 = vld [vmem:[#allocation7] sm:$0xf]
        %v1220 = vld [vmem:[#allocation7 + $0x4] sm:$0xf]
        %v1221 = vld [vmem:[#allocation7 + $0x8] sm:$0xf]
        %v1222 = vld [vmem:[#allocation7 + $0xc] sm:$0xf]
        %v1223 = vld [vmem:[#allocation8] sm:$0x1]
        %v1224 = vld [vmem:[#allocation10] sm:$0xf]
        %v1225 = vld [vmem:[#allocation10 + $0x4] sm:$0xf]
        %v1226 = vld [vmem:[#allocation10 + $0x8] sm:$0xf]
        %v1227 = vld [vmem:[#allocation10 + $0xc] sm:$0xf]
        %v1228 = vld [vmem:[#allocation11] sm:$0x1]
        %v1229 = vld [vmem:[%s19] sm:$0xf]
        %v1230 = vld [vmem:[%s19 + $0x4] sm:$0xf]
        %v1231 = vld [vmem:[%s19 + $0x8] sm:$0xf]
        %v1232 = vld [vmem:[%s19 + $0xc] sm:$0xf]
        %v1233 = vld [vmem:[#allocation13] sm:$0x1]
        %v1234 = vpack.c.bf16 %v1203, %v1203
        %v1236 = vlaneseq
        %v1237 = vshrl.u32 %v1236, 7
        %v1238 = vsub.s32 0, %v1237
        %v1239 = vrot.slane %v1218, %v1238
        %v1245 = vunpack.c.l.b16 %v1214
        %v1246 = vunpack.c.l.b16 %v1215
        %v1247 = vunpack.c.l.b16 %v1216
        %v1248 = vunpack.c.l.b16 %v1217
        %v1249 = vpack.c.b16 %v1246, %v1245
        %v1250 = vpack.c.b16 %v1248, %v1247
        %vm1253 = vcmask 261120
        %v1255 = vsel %vm1253, %v1234, 0
        %1257 = vmatprep.subr.bf16.mxu0 0
        %1258 = vmatpush1.bf16.msra.mxu0 0
        %1259 = vmatprep.subr.bf16.mxu0 0
        %1260 = vmatpush1.bf16.msra.mxu0 0
        %1261 = vmatprep.subr.bf16.mxu0 0
        %1262 = vmatpush1.bf16.msra.mxu0 0
        %1263 = vmatprep.subr.bf16.mxu0 0
        %1264 = vmatpush1.bf16.msra.mxu0 0
        %1265 = vmatprep.subr.bf16.mxu0 0
        %1266 = vmatpush1.bf16.msra.mxu0 0
        %1267 = vmatprep.subr.bf16.mxu0 0
        %1268 = vmatpush1.bf16.msra.mxu0 0
        %1269 = vmatprep.subr.bf16.mxu0 0
        %1270 = vmatpush1.bf16.msra.mxu0 %v1250
        %1271 = vmatprep.subr.bf16.mxu0 0
        %1272 = vmatpush1.bf16.msra.mxu0 %v1249
        %1273 = vmatprep.subr.bf16.mxu0 0
        %1274 = vmatpush2.bf16.msra.mxu0 0
        %1275 = vmatprep.subr.bf16.mxu0 0
        %1276 = vmatpush2.bf16.msra.mxu0 0
        %1277 = vmatprep.subr.bf16.mxu0 0
        %1278 = vmatpush2.bf16.msra.mxu0 0
        %1279 = vmatprep.subr.bf16.mxu0 0
        %1280 = vmatpush2.bf16.msra.mxu0 0
        %1281 = vmatprep.subr.bf16.mxu0 0
        %1282 = vmatpush2.bf16.msra.mxu0 0
        %1283 = vmatprep.subr.bf16.mxu0 0
        %1284 = vmatpush2.bf16.msra.mxu0 0
        %1285 = vmatprep.subr.bf16.mxu0 0
        %1286 = vmatpush2.bf16.msra.mxu0 0
        %1287 = vmatprep.subr.bf16.mxu0 0
        %1288 = vmatpush2.bf16.msra.mxu0 0
        %1289 = vmatprep.mubr.bf16.mxu0 0
        %1290 = vmatmul.mubr.bf16.gmra.mxu0 %v1255
        %v1291 = vpop.f32.mrf.mxu0
        %v1292 = vadd.f32 %v1239, %v1291
        %v1293 = vpop.f32.mrf.mxu0
        %v1294 = vpop.f32.mrf.mxu0
        %v1295 = vpop.f32.mrf.mxu0
        %1296 = vdwg.mxu0
        %v1298 = vlaneseq
        %v1299 = vshrl.u32 %v1298, 7
        %v1300 = vsub.s32 0, %v1299
        %v1301 = vrot.slane %v1223, %v1300
        %v1307 = vunpack.c.l.b16 %v1219
        %v1308 = vunpack.c.l.b16 %v1220
        %v1309 = vunpack.c.l.b16 %v1221
        %v1310 = vunpack.c.l.b16 %v1222
        %v1311 = vpack.c.b16 %v1308, %v1307
        %v1312 = vpack.c.b16 %v1310, %v1309
        %1315 = vmatprep.subr.bf16.mxu0 0
        %1316 = vmatpush1.bf16.msra.mxu0 0
        %1317 = vmatprep.subr.bf16.mxu0 0
        %1318 = vmatpush1.bf16.msra.mxu0 0
        %1319 = vmatprep.subr.bf16.mxu0 0
        %1320 = vmatpush1.bf16.msra.mxu0 0
        %1321 = vmatprep.subr.bf16.mxu0 0
        %1322 = vmatpush1.bf16.msra.mxu0 0
        %1323 = vmatprep.subr.bf16.mxu0 0
        %1324 = vmatpush1.bf16.msra.mxu0 0
        %1325 = vmatprep.subr.bf16.mxu0 0
        %1326 = vmatpush1.bf16.msra.mxu0 0
        %1327 = vmatprep.subr.bf16.mxu0 0
        %1328 = vmatpush1.bf16.msra.mxu0 %v1312
        %1329 = vmatprep.subr.bf16.mxu0 0
        %1330 = vmatpush1.bf16.msra.mxu0 %v1311
        %1331 = vmatprep.subr.bf16.mxu0 0
        %1332 = vmatpush2.bf16.msra.mxu0 0
        %1333 = vmatprep.subr.bf16.mxu0 0
        %1334 = vmatpush2.bf16.msra.mxu0 0
        %1335 = vmatprep.subr.bf16.mxu0 0
        %1336 = vmatpush2.bf16.msra.mxu0 0
        %1337 = vmatprep.subr.bf16.mxu0 0
        %1338 = vmatpush2.bf16.msra.mxu0 0
        %1339 = vmatprep.subr.bf16.mxu0 0
        %1340 = vmatpush2.bf16.msra.mxu0 0
        %1341 = vmatprep.subr.bf16.mxu0 0
        %1342 = vmatpush2.bf16.msra.mxu0 0
        %1343 = vmatprep.subr.bf16.mxu0 0
        %1344 = vmatpush2.bf16.msra.mxu0 0
        %1345 = vmatprep.subr.bf16.mxu0 0
        %1346 = vmatpush2.bf16.msra.mxu0 0
        %1347 = vmatprep.mubr.bf16.mxu0 0
        %1348 = vmatmul.mubr.bf16.gmra.mxu0 %v1255
        %v1349 = vpop.f32.mrf.mxu0
        %v1350 = vadd.f32 %v1301, %v1349
        %v1351 = vpop.f32.mrf.mxu0
        %v1352 = vpop.f32.mrf.mxu0
        %v1353 = vpop.f32.mrf.mxu0
        %1354 = vdwg.mxu0
        %v1356 = vlaneseq
        %v1357 = vshrl.u32 %v1356, 7
        %v1358 = vsub.s32 0, %v1357
        %v1359 = vrot.slane %v1228, %v1358
        %v1365 = vunpack.c.l.b16 %v1224
        %v1366 = vunpack.c.l.b16 %v1225
        %v1367 = vunpack.c.l.b16 %v1226
        %v1368 = vunpack.c.l.b16 %v1227
        %v1369 = vpack.c.b16 %v1366, %v1365
        %v1370 = vpack.c.b16 %v1368, %v1367
        %1373 = vmatprep.subr.bf16.mxu0 0
        %1374 = vmatpush1.bf16.msra.mxu0 0
        %1375 = vmatprep.subr.bf16.mxu0 0
        %1376 = vmatpush1.bf16.msra.mxu0 0
        %1377 = vmatprep.subr.bf16.mxu0 0
        %1378 = vmatpush1.bf16.msra.mxu0 0
        %1379 = vmatprep.subr.bf16.mxu0 0
        %1380 = vmatpush1.bf16.msra.mxu0 0
        %1381 = vmatprep.subr.bf16.mxu0 0
        %1382 = vmatpush1.bf16.msra.mxu0 0
        %1383 = vmatprep.subr.bf16.mxu0 0
        %1384 = vmatpush1.bf16.msra.mxu0 0
        %1385 = vmatprep.subr.bf16.mxu0 0
        %1386 = vmatpush1.bf16.msra.mxu0 %v1370
        %1387 = vmatprep.subr.bf16.mxu0 0
        %1388 = vmatpush1.bf16.msra.mxu0 %v1369
        %1389 = vmatprep.subr.bf16.mxu0 0
        %1390 = vmatpush2.bf16.msra.mxu0 0
        %1391 = vmatprep.subr.bf16.mxu0 0
        %1392 = vmatpush2.bf16.msra.mxu0 0
        %1393 = vmatprep.subr.bf16.mxu0 0
        %1394 = vmatpush2.bf16.msra.mxu0 0
        %1395 = vmatprep.subr.bf16.mxu0 0
        %1396 = vmatpush2.bf16.msra.mxu0 0
        %1397 = vmatprep.subr.bf16.mxu0 0
        %1398 = vmatpush2.bf16.msra.mxu0 0
        %1399 = vmatprep.subr.bf16.mxu0 0
        %1400 = vmatpush2.bf16.msra.mxu0 0
        %1401 = vmatprep.subr.bf16.mxu0 0
        %1402 = vmatpush2.bf16.msra.mxu0 0
        %1403 = vmatprep.subr.bf16.mxu0 0
        %1404 = vmatpush2.bf16.msra.mxu0 0
        %1405 = vmatprep.mubr.bf16.mxu0 0
        %1406 = vmatmul.mubr.bf16.gmra.mxu0 %v1255
        %v1407 = vpop.f32.mrf.mxu0
        %v1408 = vadd.f32 %v1359, %v1407
        %v1409 = vpop.f32.mrf.mxu0
        %v1410 = vpop.f32.mrf.mxu0
        %v1411 = vpop.f32.mrf.mxu0
        %1412 = vdwg.mxu0
        %v1413 = vmul.f32 %v1292, 0.35355338
        %1415 = vrot.lane.b32.xlu0 %v1413, 120
        %v1416 = vpop.permute.xlu0 %1415
        %1418 = vrot.lane.b32.xlu0 %v1413, 112
        %v1419 = vpop.permute.xlu0 %1418
        %1421 = vrot.lane.b32.xlu0 %v1413, 104
        %v1422 = vpop.permute.xlu0 %1421
        %v1424 = vcombine.low %v1413, %v1419
        %v1425 = vcombine.high %v1413, %v1419
        %v1427 = vunpack.c.l.s4 1983009808
        %v1428 = vunpack.c.0.s8 %v1427
        %v1429 = vlaneseq
        %v1430 = vshrl.u32 %v1429, 7
        %v1431 = vsub.s32 %v1428, %v1430
        %v1432 = vrot.slane %v1424, %v1431
        %v1434 = vunpack.c.l.s4 1983009808
        %v1435 = vunpack.c.0.s8 %v1434
        %v1436 = vlaneseq
        %v1437 = vshrl.u32 %v1436, 7
        %v1438 = vsub.s32 %v1435, %v1437
        %v1439 = vrot.slane %v1425, %v1438
        %v1440 = vcombine.low %v1416, %v1422
        %v1441 = vcombine.high %v1416, %v1422
        %v1443 = vunpack.c.l.s4 1983009808
        %v1444 = vunpack.c.0.s8 %v1443
        %v1445 = vlaneseq
        %v1446 = vshrl.u32 %v1445, 7
        %v1447 = vsub.s32 %v1444, %v1446
        %v1448 = vrot.slane %v1440, %v1447
        %v1450 = vunpack.c.l.s4 1983009808
        %v1451 = vunpack.c.0.s8 %v1450
        %v1452 = vlaneseq
        %v1453 = vshrl.u32 %v1452, 7
        %v1454 = vsub.s32 %v1451, %v1453
        %v1455 = vrot.slane %v1441, %v1454
        %v1456 = vcombine.low %v1432, %v1448
        %v1457 = vcombine.high %v1432, %v1448
        %v1459 = vunpack.c.l.s4 1934713408
        %v1460 = vunpack.c.0.s8 %v1459
        %v1461 = vlaneseq
        %v1462 = vshrl.u32 %v1461, 7
        %v1463 = vsub.s32 %v1460, %v1462
        %v1464 = vrot.slane %v1456, %v1463
        %v1466 = vunpack.c.l.s4 1934713408
        %v1467 = vunpack.c.0.s8 %v1466
        %v1468 = vlaneseq
        %v1469 = vshrl.u32 %v1468, 7
        %v1470 = vsub.s32 %v1467, %v1469
        %v1471 = vrot.slane %v1457, %v1470
        %v1472 = vcombine.low %v1439, %v1455
        %v1473 = vcombine.high %v1439, %v1455
        %v1475 = vunpack.c.l.s4 1934713408
        %v1476 = vunpack.c.0.s8 %v1475
        %v1477 = vlaneseq
        %v1478 = vshrl.u32 %v1477, 7
        %v1479 = vsub.s32 %v1476, %v1478
        %v1480 = vrot.slane %v1472, %v1479
        %v1482 = vunpack.c.l.s4 1934713408
        %v1483 = vunpack.c.0.s8 %v1482
        %v1484 = vlaneseq
        %v1485 = vshrl.u32 %v1484, 7
        %v1486 = vsub.s32 %v1483, %v1485
        %v1487 = vrot.slane %v1473, %v1486
        %v1488 = vcombine.high %v1464, 0.0
        %v1489 = vcombine.high %v1471, 0.0
        %v1490 = vcombine.high %v1480, 0.0
        %v1491 = vcombine.high %v1487, 0.0
        %v1492 = vcombine.low %v1464, %v1471
        %v1494 = vunpack.c.l.s4 1983009808
        %v1495 = vunpack.c.0.s8 %v1494
        %v1496 = vlaneseq
        %v1497 = vshrl.u32 %v1496, 7
        %v1498 = vsub.s32 %v1495, %v1497
        %v1499 = vrot.slane %v1492, %v1498
        %v1500 = vcombine.low %v1488, %v1489
        %v1502 = vunpack.c.l.s4 1983009808
        %v1503 = vunpack.c.0.s8 %v1502
        %v1504 = vlaneseq
        %v1505 = vshrl.u32 %v1504, 7
        %v1506 = vsub.s32 %v1503, %v1505
        %v1507 = vrot.slane %v1500, %v1506
        %v1508 = vcombine.low %v1480, %v1487
        %v1510 = vunpack.c.l.s4 1983009808
        %v1511 = vunpack.c.0.s8 %v1510
        %v1512 = vlaneseq
        %v1513 = vshrl.u32 %v1512, 7
        %v1514 = vsub.s32 %v1511, %v1513
        %v1515 = vrot.slane %v1508, %v1514
        %v1516 = vcombine.low %v1490, %v1491
        %v1518 = vunpack.c.l.s4 1983009808
        %v1519 = vunpack.c.0.s8 %v1518
        %v1520 = vlaneseq
        %v1521 = vshrl.u32 %v1520, 7
        %v1522 = vsub.s32 %v1519, %v1521
        %v1523 = vrot.slane %v1516, %v1522
        %v1524 = vcombine.low %v1499, %v1507
        %v1525 = vcombine.high %v1499, %v1507
        %v1527 = vunpack.c.l.s4 1934713408
        %v1528 = vunpack.c.0.s8 %v1527
        %v1529 = vlaneseq
        %v1530 = vshrl.u32 %v1529, 7
        %v1531 = vsub.s32 %v1528, %v1530
        %v1532 = vrot.slane %v1524, %v1531
        %v1534 = vunpack.c.l.s4 1934713408
        %v1535 = vunpack.c.0.s8 %v1534
        %v1536 = vlaneseq
        %v1537 = vshrl.u32 %v1536, 7
        %v1538 = vsub.s32 %v1535, %v1537
        %v1539 = vrot.slane %v1525, %v1538
        %v1540 = vcombine.low %v1515, %v1523
        %v1541 = vcombine.high %v1515, %v1523
        %v1543 = vunpack.c.l.s4 1934713408
        %v1544 = vunpack.c.0.s8 %v1543
        %v1545 = vlaneseq
        %v1546 = vshrl.u32 %v1545, 7
        %v1547 = vsub.s32 %v1544, %v1546
        %v1548 = vrot.slane %v1540, %v1547
        %v1550 = vunpack.c.l.s4 1934713408
        %v1551 = vunpack.c.0.s8 %v1550
        %v1552 = vlaneseq
        %v1553 = vshrl.u32 %v1552, 7
        %v1554 = vsub.s32 %v1551, %v1553
        %v1555 = vrot.slane %v1541, %v1554
        %v1556 = vcombine.low %v1532, %v1548
        %v1557 = vcombine.high %v1532, %v1548
        %v1558 = vcombine.low %v1539, %v1555
        %v1559 = vcombine.high %v1539, %v1555
        %v1560 = vpack.c.bf16 %v1556, %v1556
        %v1561 = vpack.c.bf16 %v1557, %v1557
        %v1562 = vpack.c.bf16 %v1558, %v1558
        %v1563 = vpack.c.bf16 %v1559, %v1559
        %1565 = vrot.lane.b32.xlu0 %v1350, 120
        %v1566 = vpop.permute.xlu0 %1565
        %1568 = vrot.lane.b32.xlu0 %v1350, 112
        %v1569 = vpop.permute.xlu0 %1568
        %1571 = vrot.lane.b32.xlu0 %v1350, 104
        %v1572 = vpop.permute.xlu0 %1571
        %v1574 = vcombine.low %v1350, %v1569
        %v1575 = vcombine.high %v1350, %v1569
        %v1577 = vunpack.c.l.s4 1983009808
        %v1578 = vunpack.c.0.s8 %v1577
        %v1579 = vlaneseq
        %v1580 = vshrl.u32 %v1579, 7
        %v1581 = vsub.s32 %v1578, %v1580
        %v1582 = vrot.slane %v1574, %v1581
        %v1584 = vunpack.c.l.s4 1983009808
        %v1585 = vunpack.c.0.s8 %v1584
        %v1586 = vlaneseq
        %v1587 = vshrl.u32 %v1586, 7
        %v1588 = vsub.s32 %v1585, %v1587
        %v1589 = vrot.slane %v1575, %v1588
        %v1590 = vcombine.low %v1566, %v1572
        %v1591 = vcombine.high %v1566, %v1572
        %v1593 = vunpack.c.l.s4 1983009808
        %v1594 = vunpack.c.0.s8 %v1593
        %v1595 = vlaneseq
        %v1596 = vshrl.u32 %v1595, 7
        %v1597 = vsub.s32 %v1594, %v1596
        %v1598 = vrot.slane %v1590, %v1597
        %v1600 = vunpack.c.l.s4 1983009808
        %v1601 = vunpack.c.0.s8 %v1600
        %v1602 = vlaneseq
        %v1603 = vshrl.u32 %v1602, 7
        %v1604 = vsub.s32 %v1601, %v1603
        %v1605 = vrot.slane %v1591, %v1604
        %v1606 = vcombine.low %v1582, %v1598
        %v1607 = vcombine.high %v1582, %v1598
        %v1609 = vunpack.c.l.s4 1934713408
        %v1610 = vunpack.c.0.s8 %v1609
        %v1611 = vlaneseq
        %v1612 = vshrl.u32 %v1611, 7
        %v1613 = vsub.s32 %v1610, %v1612
        %v1614 = vrot.slane %v1606, %v1613
        %v1616 = vunpack.c.l.s4 1934713408
        %v1617 = vunpack.c.0.s8 %v1616
        %v1618 = vlaneseq
        %v1619 = vshrl.u32 %v1618, 7
        %v1620 = vsub.s32 %v1617, %v1619
        %v1621 = vrot.slane %v1607, %v1620
        %v1622 = vcombine.low %v1589, %v1605
        %v1623 = vcombine.high %v1589, %v1605
        %v1625 = vunpack.c.l.s4 1934713408
        %v1626 = vunpack.c.0.s8 %v1625
        %v1627 = vlaneseq
        %v1628 = vshrl.u32 %v1627, 7
        %v1629 = vsub.s32 %v1626, %v1628
        %v1630 = vrot.slane %v1622, %v1629
        %v1632 = vunpack.c.l.s4 1934713408
        %v1633 = vunpack.c.0.s8 %v1632
        %v1634 = vlaneseq
        %v1635 = vshrl.u32 %v1634, 7
        %v1636 = vsub.s32 %v1633, %v1635
        %v1637 = vrot.slane %v1623, %v1636
        %v1638 = vcombine.high %v1614, 0.0
        %v1639 = vcombine.high %v1621, 0.0
        %v1640 = vcombine.high %v1630, 0.0
        %v1641 = vcombine.high %v1637, 0.0
        %v1642 = vcombine.low %v1614, %v1621
        %v1644 = vunpack.c.l.s4 1983009808
        %v1645 = vunpack.c.0.s8 %v1644
        %v1646 = vlaneseq
        %v1647 = vshrl.u32 %v1646, 7
        %v1648 = vsub.s32 %v1645, %v1647
        %v1649 = vrot.slane %v1642, %v1648
        %v1650 = vcombine.low %v1638, %v1639
        %v1652 = vunpack.c.l.s4 1983009808
        %v1653 = vunpack.c.0.s8 %v1652
        %v1654 = vlaneseq
        %v1655 = vshrl.u32 %v1654, 7
        %v1656 = vsub.s32 %v1653, %v1655
        %v1657 = vrot.slane %v1650, %v1656
        %v1658 = vcombine.low %v1630, %v1637
        %v1660 = vunpack.c.l.s4 1983009808
        %v1661 = vunpack.c.0.s8 %v1660
        %v1662 = vlaneseq
        %v1663 = vshrl.u32 %v1662, 7
        %v1664 = vsub.s32 %v1661, %v1663
        %v1665 = vrot.slane %v1658, %v1664
        %v1666 = vcombine.low %v1640, %v1641
        %v1668 = vunpack.c.l.s4 1983009808
        %v1669 = vunpack.c.0.s8 %v1668
        %v1670 = vlaneseq
        %v1671 = vshrl.u32 %v1670, 7
        %v1672 = vsub.s32 %v1669, %v1671
        %v1673 = vrot.slane %v1666, %v1672
        %v1674 = vcombine.low %v1649, %v1657
        %v1675 = vcombine.high %v1649, %v1657
        %v1677 = vunpack.c.l.s4 1934713408
        %v1678 = vunpack.c.0.s8 %v1677
        %v1679 = vlaneseq
        %v1680 = vshrl.u32 %v1679, 7
        %v1681 = vsub.s32 %v1678, %v1680
        %v1682 = vrot.slane %v1674, %v1681
        %v1684 = vunpack.c.l.s4 1934713408
        %v1685 = vunpack.c.0.s8 %v1684
        %v1686 = vlaneseq
        %v1687 = vshrl.u32 %v1686, 7
        %v1688 = vsub.s32 %v1685, %v1687
        %v1689 = vrot.slane %v1675, %v1688
        %v1690 = vcombine.low %v1665, %v1673
        %v1691 = vcombine.high %v1665, %v1673
        %v1693 = vunpack.c.l.s4 1934713408
        %v1694 = vunpack.c.0.s8 %v1693
        %v1695 = vlaneseq
        %v1696 = vshrl.u32 %v1695, 7
        %v1697 = vsub.s32 %v1694, %v1696
        %v1698 = vrot.slane %v1690, %v1697
        %v1700 = vunpack.c.l.s4 1934713408
        %v1701 = vunpack.c.0.s8 %v1700
        %v1702 = vlaneseq
        %v1703 = vshrl.u32 %v1702, 7
        %v1704 = vsub.s32 %v1701, %v1703
        %v1705 = vrot.slane %v1691, %v1704
        %v1706 = vcombine.low %v1682, %v1698
        %v1707 = vcombine.high %v1682, %v1698
        %v1708 = vcombine.low %v1689, %v1705
        %v1709 = vcombine.high %v1689, %v1705
        %v1710 = vpack.c.bf16 %v1706, %v1706
        %v1711 = vpack.c.bf16 %v1707, %v1707
        %v1712 = vpack.c.bf16 %v1708, %v1708
        %v1713 = vpack.c.bf16 %v1709, %v1709
        %1715 = vrot.lane.b32.xlu0 %v1408, 120
        %v1716 = vpop.permute.xlu0 %1715
        %1718 = vrot.lane.b32.xlu0 %v1408, 112
        %v1719 = vpop.permute.xlu0 %1718
        %1721 = vrot.lane.b32.xlu0 %v1408, 104
        %v1722 = vpop.permute.xlu0 %1721
        %v1724 = vcombine.low %v1408, %v1719
        %v1725 = vcombine.high %v1408, %v1719
        %v1727 = vunpack.c.l.s4 1983009808
        %v1728 = vunpack.c.0.s8 %v1727
        %v1729 = vlaneseq
        %v1730 = vshrl.u32 %v1729, 7
        %v1731 = vsub.s32 %v1728, %v1730
        %v1732 = vrot.slane %v1724, %v1731
        %v1734 = vunpack.c.l.s4 1983009808
        %v1735 = vunpack.c.0.s8 %v1734
        %v1736 = vlaneseq
        %v1737 = vshrl.u32 %v1736, 7
        %v1738 = vsub.s32 %v1735, %v1737
        %v1739 = vrot.slane %v1725, %v1738
        %v1740 = vcombine.low %v1716, %v1722
        %v1741 = vcombine.high %v1716, %v1722
        %v1743 = vunpack.c.l.s4 1983009808
        %v1744 = vunpack.c.0.s8 %v1743
        %v1745 = vlaneseq
        %v1746 = vshrl.u32 %v1745, 7
        %v1747 = vsub.s32 %v1744, %v1746
        %v1748 = vrot.slane %v1740, %v1747
        %v1750 = vunpack.c.l.s4 1983009808
        %v1751 = vunpack.c.0.s8 %v1750
        %v1752 = vlaneseq
        %v1753 = vshrl.u32 %v1752, 7
        %v1754 = vsub.s32 %v1751, %v1753
        %v1755 = vrot.slane %v1741, %v1754
        %v1756 = vcombine.low %v1732, %v1748
        %v1757 = vcombine.high %v1732, %v1748
        %v1759 = vunpack.c.l.s4 1934713408
        %v1760 = vunpack.c.0.s8 %v1759
        %v1761 = vlaneseq
        %v1762 = vshrl.u32 %v1761, 7
        %v1763 = vsub.s32 %v1760, %v1762
        %v1764 = vrot.slane %v1756, %v1763
        %v1766 = vunpack.c.l.s4 1934713408
        %v1767 = vunpack.c.0.s8 %v1766
        %v1768 = vlaneseq
        %v1769 = vshrl.u32 %v1768, 7
        %v1770 = vsub.s32 %v1767, %v1769
        %v1771 = vrot.slane %v1757, %v1770
        %v1772 = vcombine.low %v1739, %v1755
        %v1773 = vcombine.high %v1739, %v1755
        %v1775 = vunpack.c.l.s4 1934713408
        %v1776 = vunpack.c.0.s8 %v1775
        %v1777 = vlaneseq
        %v1778 = vshrl.u32 %v1777, 7
        %v1779 = vsub.s32 %v1776, %v1778
        %v1780 = vrot.slane %v1772, %v1779
        %v1782 = vunpack.c.l.s4 1934713408
        %v1783 = vunpack.c.0.s8 %v1782
        %v1784 = vlaneseq
        %v1785 = vshrl.u32 %v1784, 7
        %v1786 = vsub.s32 %v1783, %v1785
        %v1787 = vrot.slane %v1773, %v1786
        %v1788 = vcombine.high %v1764, 0.0
        %v1789 = vcombine.high %v1771, 0.0
        %v1790 = vcombine.high %v1780, 0.0
        %v1791 = vcombine.high %v1787, 0.0
        %v1792 = vcombine.low %v1764, %v1771
        %v1794 = vunpack.c.l.s4 1983009808
        %v1795 = vunpack.c.0.s8 %v1794
        %v1796 = vlaneseq
        %v1797 = vshrl.u32 %v1796, 7
        %v1798 = vsub.s32 %v1795, %v1797
        %v1799 = vrot.slane %v1792, %v1798
        %v1800 = vcombine.low %v1788, %v1789
        %v1802 = vunpack.c.l.s4 1983009808
        %v1803 = vunpack.c.0.s8 %v1802
        %v1804 = vlaneseq
        %v1805 = vshrl.u32 %v1804, 7
        %v1806 = vsub.s32 %v1803, %v1805
        %v1807 = vrot.slane %v1800, %v1806
        %v1808 = vcombine.low %v1780, %v1787
        %v1810 = vunpack.c.l.s4 1983009808
        %v1811 = vunpack.c.0.s8 %v1810
        %v1812 = vlaneseq
        %v1813 = vshrl.u32 %v1812, 7
        %v1814 = vsub.s32 %v1811, %v1813
        %v1815 = vrot.slane %v1808, %v1814
        %v1816 = vcombine.low %v1790, %v1791
        %v1818 = vunpack.c.l.s4 1983009808
        %v1819 = vunpack.c.0.s8 %v1818
        %v1820 = vlaneseq
        %v1821 = vshrl.u32 %v1820, 7
        %v1822 = vsub.s32 %v1819, %v1821
        %v1823 = vrot.slane %v1816, %v1822
        %v1824 = vcombine.low %v1799, %v1807
        %v1825 = vcombine.high %v1799, %v1807
        %v1827 = vunpack.c.l.s4 1934713408
        %v1828 = vunpack.c.0.s8 %v1827
        %v1829 = vlaneseq
        %v1830 = vshrl.u32 %v1829, 7
        %v1831 = vsub.s32 %v1828, %v1830
        %v1832 = vrot.slane %v1824, %v1831
        %v1834 = vunpack.c.l.s4 1934713408
        %v1835 = vunpack.c.0.s8 %v1834
        %v1836 = vlaneseq
        %v1837 = vshrl.u32 %v1836, 7
        %v1838 = vsub.s32 %v1835, %v1837
        %v1839 = vrot.slane %v1825, %v1838
        %v1840 = vcombine.low %v1815, %v1823
        %v1841 = vcombine.high %v1815, %v1823
        %v1843 = vunpack.c.l.s4 1934713408
        %v1844 = vunpack.c.0.s8 %v1843
        %v1845 = vlaneseq
        %v1846 = vshrl.u32 %v1845, 7
        %v1847 = vsub.s32 %v1844, %v1846
        %v1848 = vrot.slane %v1840, %v1847
        %v1850 = vunpack.c.l.s4 1934713408
        %v1851 = vunpack.c.0.s8 %v1850
        %v1852 = vlaneseq
        %v1853 = vshrl.u32 %v1852, 7
        %v1854 = vsub.s32 %v1851, %v1853
        %v1855 = vrot.slane %v1841, %v1854
        %v1856 = vcombine.low %v1832, %v1848
        %v1857 = vcombine.high %v1832, %v1848
        %v1858 = vcombine.low %v1839, %v1855
        %v1859 = vcombine.high %v1839, %v1855
        %v1860 = vpack.c.bf16 %v1856, %v1856
        %v1861 = vpack.c.bf16 %v1857, %v1857
        %v1862 = vpack.c.bf16 %v1858, %v1858
        %v1863 = vpack.c.bf16 %v1859, %v1859
        %vm1864 = vcmask 64512
        %v1866 = vsel %vm1864, %v1560, 0
        %v1869 = vsel %vm1864, %v1710, 0
        %1871 = vmatprep.subr.bf16.mxu0 0
        %1872 = vmatpush1.bf16.xpose.msra.mxu0 0
        %1873 = vmatprep.subr.bf16.mxu0 0
        %1874 = vmatpush1.bf16.xpose.msra.mxu0 0
        %1875 = vmatprep.subr.bf16.mxu0 0
        %1876 = vmatpush1.bf16.xpose.msra.mxu0 0
        %1877 = vmatprep.subr.bf16.mxu0 0
        %1878 = vmatpush1.bf16.xpose.msra.mxu0 0
        %1879 = vmatprep.subr.bf16.mxu0 0
        %1880 = vmatpush1.bf16.xpose.msra.mxu0 0
        %1881 = vmatprep.subr.bf16.mxu0 0
        %1882 = vmatpush1.bf16.xpose.msra.mxu0 0
        %1883 = vmatprep.subr.bf16.mxu0 0
        %1884 = vmatpush1.bf16.xpose.msra.mxu0 0
        %1885 = vmatprep.subr.bf16.mxu0 0
        %1886 = vmatpush1.bf16.xpose.msra.mxu0 %v1869
        %1887 = vmatprep.subr.bf16.mxu0 0
        %1888 = vmatpush2.bf16.xpose.msra.mxu0 0
        %1889 = vmatprep.subr.bf16.mxu0 0
        %1890 = vmatpush2.bf16.xpose.msra.mxu0 0
        %1891 = vmatprep.subr.bf16.mxu0 0
        %1892 = vmatpush2.bf16.xpose.msra.mxu0 0
        %1893 = vmatprep.subr.bf16.mxu0 0
        %1894 = vmatpush2.bf16.xpose.msra.mxu0 0
        %1895 = vmatprep.subr.bf16.mxu0 0
        %1896 = vmatpush2.bf16.xpose.msra.mxu0 0
        %1897 = vmatprep.subr.bf16.mxu0 0
        %1898 = vmatpush2.bf16.xpose.msra.mxu0 0
        %1899 = vmatprep.subr.bf16.mxu0 0
        %1900 = vmatpush2.bf16.xpose.msra.mxu0 0
        %1901 = vmatprep.subr.bf16.mxu0 0
        %1902 = vmatpush2.bf16.xpose.msra.mxu0 0
        %1903 = vmatprep.mubr.bf16.mxu0 0
        %1904 = vmatmul.mubr.bf16.gmra.mxu0 %v1866
        %v1905 = vpop.f32.mrf.mxu0
        %v1906 = vadd.f32 %v1210, %v1905
        %v1907 = vpop.f32.mrf.mxu0
        %v1908 = vpop.f32.mrf.mxu0
        %v1909 = vpop.f32.mrf.mxu0
        %1910 = vdwg.mxu0
        %v1912 = vsel %vm1864, %v1561, 0
        %v1915 = vsel %vm1864, %v1711, 0
        %1917 = vmatprep.subr.bf16.mxu0 0
        %1918 = vmatpush1.bf16.xpose.msra.mxu0 0
        %1919 = vmatprep.subr.bf16.mxu0 0
        %1920 = vmatpush1.bf16.xpose.msra.mxu0 0
        %1921 = vmatprep.subr.bf16.mxu0 0
        %1922 = vmatpush1.bf16.xpose.msra.mxu0 0
        %1923 = vmatprep.subr.bf16.mxu0 0
        %1924 = vmatpush1.bf16.xpose.msra.mxu0 0
        %1925 = vmatprep.subr.bf16.mxu0 0
        %1926 = vmatpush1.bf16.xpose.msra.mxu0 0
        %1927 = vmatprep.subr.bf16.mxu0 0
        %1928 = vmatpush1.bf16.xpose.msra.mxu0 0
        %1929 = vmatprep.subr.bf16.mxu0 0
        %1930 = vmatpush1.bf16.xpose.msra.mxu0 0
        %1931 = vmatprep.subr.bf16.mxu0 0
        %1932 = vmatpush1.bf16.xpose.msra.mxu0 %v1915
        %1933 = vmatprep.subr.bf16.mxu0 0
        %1934 = vmatpush2.bf16.xpose.msra.mxu0 0
        %1935 = vmatprep.subr.bf16.mxu0 0
        %1936 = vmatpush2.bf16.xpose.msra.mxu0 0
        %1937 = vmatprep.subr.bf16.mxu0 0
        %1938 = vmatpush2.bf16.xpose.msra.mxu0 0
        %1939 = vmatprep.subr.bf16.mxu0 0
        %1940 = vmatpush2.bf16.xpose.msra.mxu0 0
        %1941 = vmatprep.subr.bf16.mxu0 0
        %1942 = vmatpush2.bf16.xpose.msra.mxu0 0
        %1943 = vmatprep.subr.bf16.mxu0 0
        %1944 = vmatpush2.bf16.xpose.msra.mxu0 0
        %1945 = vmatprep.subr.bf16.mxu0 0
        %1946 = vmatpush2.bf16.xpose.msra.mxu0 0
        %1947 = vmatprep.subr.bf16.mxu0 0
        %1948 = vmatpush2.bf16.xpose.msra.mxu0 0
        %1949 = vmatprep.mubr.bf16.mxu0 0
        %1950 = vmatmul.mubr.bf16.gmra.mxu0 %v1912
        %v1951 = vpop.f32.mrf.mxu0
        %v1952 = vadd.f32 %v1210, %v1951
        %v1953 = vpop.f32.mrf.mxu0
        %v1954 = vpop.f32.mrf.mxu0
        %v1955 = vpop.f32.mrf.mxu0
        %1956 = vdwg.mxu0
        %v1958 = vsel %vm1864, %v1562, 0
        %v1961 = vsel %vm1864, %v1712, 0
        %1963 = vmatprep.subr.bf16.mxu0 0
        %1964 = vmatpush1.bf16.xpose.msra.mxu0 0
        %1965 = vmatprep.subr.bf16.mxu0 0
        %1966 = vmatpush1.bf16.xpose.msra.mxu0 0
        %1967 = vmatprep.subr.bf16.mxu0 0
        %1968 = vmatpush1.bf16.xpose.msra.mxu0 0
        %1969 = vmatprep.subr.bf16.mxu0 0
        %1970 = vmatpush1.bf16.xpose.msra.mxu0 0
        %1971 = vmatprep.subr.bf16.mxu0 0
        %1972 = vmatpush1.bf16.xpose.msra.mxu0 0
        %1973 = vmatprep.subr.bf16.mxu0 0
        %1974 = vmatpush1.bf16.xpose.msra.mxu0 0
        %1975 = vmatprep.subr.bf16.mxu0 0
        %1976 = vmatpush1.bf16.xpose.msra.mxu0 0
        %1977 = vmatprep.subr.bf16.mxu0 0
        %1978 = vmatpush1.bf16.xpose.msra.mxu0 %v1961
        %1979 = vmatprep.subr.bf16.mxu0 0
        %1980 = vmatpush2.bf16.xpose.msra.mxu0 0
        %1981 = vmatprep.subr.bf16.mxu0 0
        %1982 = vmatpush2.bf16.xpose.msra.mxu0 0
        %1983 = vmatprep.subr.bf16.mxu0 0
        %1984 = vmatpush2.bf16.xpose.msra.mxu0 0
        %1985 = vmatprep.subr.bf16.mxu0 0
        %1986 = vmatpush2.bf16.xpose.msra.mxu0 0
        %1987 = vmatprep.subr.bf16.mxu0 0
        %1988 = vmatpush2.bf16.xpose.msra.mxu0 0
        %1989 = vmatprep.subr.bf16.mxu0 0
        %1990 = vmatpush2.bf16.xpose.msra.mxu0 0
        %1991 = vmatprep.subr.bf16.mxu0 0
        %1992 = vmatpush2.bf16.xpose.msra.mxu0 0
        %1993 = vmatprep.subr.bf16.mxu0 0
        %1994 = vmatpush2.bf16.xpose.msra.mxu0 0
        %1995 = vmatprep.mubr.bf16.mxu0 0
        %1996 = vmatmul.mubr.bf16.gmra.mxu0 %v1958
        %v1997 = vpop.f32.mrf.mxu0
        %v1998 = vadd.f32 %v1210, %v1997
        %v1999 = vpop.f32.mrf.mxu0
        %v2000 = vpop.f32.mrf.mxu0
        %v2001 = vpop.f32.mrf.mxu0
        %2002 = vdwg.mxu0
        %v2004 = vsel %vm1864, %v1563, 0
        %v2007 = vsel %vm1864, %v1713, 0
        %2009 = vmatprep.subr.bf16.mxu0 0
        %2010 = vmatpush1.bf16.xpose.msra.mxu0 0
        %2011 = vmatprep.subr.bf16.mxu0 0
        %2012 = vmatpush1.bf16.xpose.msra.mxu0 0
        %2013 = vmatprep.subr.bf16.mxu0 0
        %2014 = vmatpush1.bf16.xpose.msra.mxu0 0
        %2015 = vmatprep.subr.bf16.mxu0 0
        %2016 = vmatpush1.bf16.xpose.msra.mxu0 0
        %2017 = vmatprep.subr.bf16.mxu0 0
        %2018 = vmatpush1.bf16.xpose.msra.mxu0 0
        %2019 = vmatprep.subr.bf16.mxu0 0
        %2020 = vmatpush1.bf16.xpose.msra.mxu0 0
        %2021 = vmatprep.subr.bf16.mxu0 0
        %2022 = vmatpush1.bf16.xpose.msra.mxu0 0
        %2023 = vmatprep.subr.bf16.mxu0 0
        %2024 = vmatpush1.bf16.xpose.msra.mxu0 %v2007
        %2025 = vmatprep.subr.bf16.mxu0 0
        %2026 = vmatpush2.bf16.xpose.msra.mxu0 0
        %2027 = vmatprep.subr.bf16.mxu0 0
        %2028 = vmatpush2.bf16.xpose.msra.mxu0 0
        %2029 = vmatprep.subr.bf16.mxu0 0
        %2030 = vmatpush2.bf16.xpose.msra.mxu0 0
        %2031 = vmatprep.subr.bf16.mxu0 0
        %2032 = vmatpush2.bf16.xpose.msra.mxu0 0
        %2033 = vmatprep.subr.bf16.mxu0 0
        %2034 = vmatpush2.bf16.xpose.msra.mxu0 0
        %2035 = vmatprep.subr.bf16.mxu0 0
        %2036 = vmatpush2.bf16.xpose.msra.mxu0 0
        %2037 = vmatprep.subr.bf16.mxu0 0
        %2038 = vmatpush2.bf16.xpose.msra.mxu0 0
        %2039 = vmatprep.subr.bf16.mxu0 0
        %2040 = vmatpush2.bf16.xpose.msra.mxu0 0
        %2041 = vmatprep.mubr.bf16.mxu0 0
        %2042 = vmatmul.mubr.bf16.gmra.mxu0 %v2004
        %v2043 = vpop.f32.mrf.mxu0
        %v2044 = vadd.f32 %v1210, %v2043
        %v2045 = vpop.f32.mrf.mxu0
        %v2046 = vpop.f32.mrf.mxu0
        %v2047 = vpop.f32.mrf.mxu0
        %2048 = vdwg.mxu0
        %v2049 = vsel %vm1864, %v1906, -inf
        %2050 = vmax.xlane.f32.xlu0 %v2049
        %v2051 = vpop.xlane.xlu0 %2050
        %v2052 = vsel %vm1864, %v1952, -inf
        %2053 = vmax.xlane.f32.xlu0 %v2052
        %v2054 = vpop.xlane.xlu0 %2053
        %v2055 = vsel %vm1864, %v1998, -inf
        %2056 = vmax.xlane.f32.xlu0 %v2055
        %v2057 = vpop.xlane.xlu0 %2056
        %v2058 = vsel %vm1864, %v2044, -inf
        %2059 = vmax.xlane.f32.xlu0 %v2058
        %v2060 = vpop.xlane.xlu0 %2059
        %v2061 = vsub.f32 %v1906, %v2051
        %v2062 = vsub.f32 %v1952, %v2054
        %v2063 = vsub.f32 %v1998, %v2057
        %v2064 = vsub.f32 %v2044, %v2060
        %v2065 = vmul.f32 %v2061, 1.442695
        %v2066 = vpow.pop %v2065
        %v2067 = vmul.f32 %v2062, 1.442695
        %v2068 = vpow.pop %v2067
        %v2069 = vmul.f32 %v2063, 1.442695
        %v2070 = vpow.pop %v2069
        %v2071 = vmul.f32 %v2064, 1.442695
        %v2072 = vpow.pop %v2071
        %v2073 = vsel %vm1864, %v2066, 0.0
        %2074 = vadd.xlane.f32.xlu0 %v2073
        %v2075 = vpop.xlane.xlu0 %2074
        %v2076 = vsel %vm1864, %v2068, 0.0
        %2077 = vadd.xlane.f32.xlu0 %v2076
        %v2078 = vpop.xlane.xlu0 %2077
        %v2079 = vsel %vm1864, %v2070, 0.0
        %2080 = vadd.xlane.f32.xlu0 %v2079
        %v2081 = vpop.xlane.xlu0 %2080
        %v2082 = vsel %vm1864, %v2072, 0.0
        %2083 = vadd.xlane.f32.xlu0 %v2082
        %v2084 = vpop.xlane.xlu0 %2083
        %v2085 = vrcp.pop %v2075
        %v2086 = vrcp.pop %v2078
        %v2087 = vrcp.pop %v2081
        %v2088 = vrcp.pop %v2084
        %v2089 = vmul.f32 %v2066, %v2085
        %v2090 = vmul.f32 %v2068, %v2086
        %v2091 = vmul.f32 %v2070, %v2087
        %v2092 = vmul.f32 %v2072, %v2088
        %v2093 = vpack.c.bf16 %v2089, %v2089
        %v2094 = vpack.c.bf16 %v2090, %v2090
        %v2095 = vpack.c.bf16 %v2091, %v2091
        %v2096 = vpack.c.bf16 %v2092, %v2092
        %v2098 = vsel %vm1864, %v2093, 0
        %vm2100 = vcmask 1043456
        %v2102 = vsel %vm2100, %v1860, 0
        %2104 = vmatprep.subr.bf16.mxu0 0
        %2105 = vmatpush1.bf16.msra.mxu0 0
        %2106 = vmatprep.subr.bf16.mxu0 0
        %2107 = vmatpush1.bf16.msra.mxu0 0
        %2108 = vmatprep.subr.bf16.mxu0 0
        %2109 = vmatpush1.bf16.msra.mxu0 0
        %2110 = vmatprep.subr.bf16.mxu0 0
        %2111 = vmatpush1.bf16.msra.mxu0 0
        %2112 = vmatprep.subr.bf16.mxu0 0
        %2113 = vmatpush1.bf16.msra.mxu0 0
        %2114 = vmatprep.subr.bf16.mxu0 0
        %2115 = vmatpush1.bf16.msra.mxu0 0
        %2116 = vmatprep.subr.bf16.mxu0 0
        %2117 = vmatpush1.bf16.msra.mxu0 0
        %2118 = vmatprep.subr.bf16.mxu0 0
        %2119 = vmatpush1.bf16.msra.mxu0 %v2102
        %2120 = vmatprep.subr.bf16.mxu0 0
        %2121 = vmatpush2.bf16.msra.mxu0 0
        %2122 = vmatprep.subr.bf16.mxu0 0
        %2123 = vmatpush2.bf16.msra.mxu0 0
        %2124 = vmatprep.subr.bf16.mxu0 0
        %2125 = vmatpush2.bf16.msra.mxu0 0
        %2126 = vmatprep.subr.bf16.mxu0 0
        %2127 = vmatpush2.bf16.msra.mxu0 0
        %2128 = vmatprep.subr.bf16.mxu0 0
        %2129 = vmatpush2.bf16.msra.mxu0 0
        %2130 = vmatprep.subr.bf16.mxu0 0
        %2131 = vmatpush2.bf16.msra.mxu0 0
        %2132 = vmatprep.subr.bf16.mxu0 0
        %2133 = vmatpush2.bf16.msra.mxu0 0
        %2134 = vmatprep.subr.bf16.mxu0 0
        %2135 = vmatpush2.bf16.msra.mxu0 0
        %2136 = vmatprep.mubr.bf16.mxu0 0
        %2137 = vmatmul.mubr.bf16.gmra.mxu0 %v2098
        %v2138 = vpop.f32.mrf.mxu0
        %v2139 = vadd.f32 0.0, %v2138
        %v2140 = vpop.f32.mrf.mxu0
        %v2141 = vpop.f32.mrf.mxu0
        %v2142 = vpop.f32.mrf.mxu0
        %2143 = vdwg.mxu0
        %v2145 = vsel %vm1864, %v2094, 0
        %v2148 = vsel %vm2100, %v1861, 0
        %2150 = vmatprep.subr.bf16.mxu0 0
        %2151 = vmatpush1.bf16.msra.mxu0 0
        %2152 = vmatprep.subr.bf16.mxu0 0
        %2153 = vmatpush1.bf16.msra.mxu0 0
        %2154 = vmatprep.subr.bf16.mxu0 0
        %2155 = vmatpush1.bf16.msra.mxu0 0
        %2156 = vmatprep.subr.bf16.mxu0 0
        %2157 = vmatpush1.bf16.msra.mxu0 0
        %2158 = vmatprep.subr.bf16.mxu0 0
        %2159 = vmatpush1.bf16.msra.mxu0 0
        %2160 = vmatprep.subr.bf16.mxu0 0
        %2161 = vmatpush1.bf16.msra.mxu0 0
        %2162 = vmatprep.subr.bf16.mxu0 0
        %2163 = vmatpush1.bf16.msra.mxu0 0
        %2164 = vmatprep.subr.bf16.mxu0 0
        %2165 = vmatpush1.bf16.msra.mxu0 %v2148
        %2166 = vmatprep.subr.bf16.mxu0 0
        %2167 = vmatpush2.bf16.msra.mxu0 0
        %2168 = vmatprep.subr.bf16.mxu0 0
        %2169 = vmatpush2.bf16.msra.mxu0 0
        %2170 = vmatprep.subr.bf16.mxu0 0
        %2171 = vmatpush2.bf16.msra.mxu0 0
        %2172 = vmatprep.subr.bf16.mxu0 0
        %2173 = vmatpush2.bf16.msra.mxu0 0
        %2174 = vmatprep.subr.bf16.mxu0 0
        %2175 = vmatpush2.bf16.msra.mxu0 0
        %2176 = vmatprep.subr.bf16.mxu0 0
        %2177 = vmatpush2.bf16.msra.mxu0 0
        %2178 = vmatprep.subr.bf16.mxu0 0
        %2179 = vmatpush2.bf16.msra.mxu0 0
        %2180 = vmatprep.subr.bf16.mxu0 0
        %2181 = vmatpush2.bf16.msra.mxu0 0
        %2182 = vmatprep.mubr.bf16.mxu0 0
        %2183 = vmatmul.mubr.bf16.gmra.mxu0 %v2145
        %v2184 = vpop.f32.mrf.mxu0
        %v2185 = vadd.f32 0.0, %v2184
        %v2186 = vpop.f32.mrf.mxu0
        %v2187 = vpop.f32.mrf.mxu0
        %v2188 = vpop.f32.mrf.mxu0
        %2189 = vdwg.mxu0
        %v2191 = vsel %vm1864, %v2095, 0
        %v2194 = vsel %vm2100, %v1862, 0
        %2196 = vmatprep.subr.bf16.mxu0 0
        %2197 = vmatpush1.bf16.msra.mxu0 0
        %2198 = vmatprep.subr.bf16.mxu0 0
        %2199 = vmatpush1.bf16.msra.mxu0 0
        %2200 = vmatprep.subr.bf16.mxu0 0
        %2201 = vmatpush1.bf16.msra.mxu0 0
        %2202 = vmatprep.subr.bf16.mxu0 0
        %2203 = vmatpush1.bf16.msra.mxu0 0
        %2204 = vmatprep.subr.bf16.mxu0 0
        %2205 = vmatpush1.bf16.msra.mxu0 0
        %2206 = vmatprep.subr.bf16.mxu0 0
        %2207 = vmatpush1.bf16.msra.mxu0 0
        %2208 = vmatprep.subr.bf16.mxu0 0
        %2209 = vmatpush1.bf16.msra.mxu0 0
        %2210 = vmatprep.subr.bf16.mxu0 0
        %2211 = vmatpush1.bf16.msra.mxu0 %v2194
        %2212 = vmatprep.subr.bf16.mxu0 0
        %2213 = vmatpush2.bf16.msra.mxu0 0
        %2214 = vmatprep.subr.bf16.mxu0 0
        %2215 = vmatpush2.bf16.msra.mxu0 0
        %2216 = vmatprep.subr.bf16.mxu0 0
        %2217 = vmatpush2.bf16.msra.mxu0 0
        %2218 = vmatprep.subr.bf16.mxu0 0
        %2219 = vmatpush2.bf16.msra.mxu0 0
        %2220 = vmatprep.subr.bf16.mxu0 0
        %2221 = vmatpush2.bf16.msra.mxu0 0
        %2222 = vmatprep.subr.bf16.mxu0 0
        %2223 = vmatpush2.bf16.msra.mxu0 0
        %2224 = vmatprep.subr.bf16.mxu0 0
        %2225 = vmatpush2.bf16.msra.mxu0 0
        %2226 = vmatprep.subr.bf16.mxu0 0
        %2227 = vmatpush2.bf16.msra.mxu0 0
        %2228 = vmatprep.mubr.bf16.mxu0 0
        %2229 = vmatmul.mubr.bf16.gmra.mxu0 %v2191
        %v2230 = vpop.f32.mrf.mxu0
        %v2231 = vadd.f32 0.0, %v2230
        %v2232 = vpop.f32.mrf.mxu0
        %v2233 = vpop.f32.mrf.mxu0
        %v2234 = vpop.f32.mrf.mxu0
        %2235 = vdwg.mxu0
        %v2237 = vsel %vm1864, %v2096, 0
        %v2240 = vsel %vm2100, %v1863, 0
        %2242 = vmatprep.subr.bf16.mxu0 0
        %2243 = vmatpush1.bf16.msra.mxu0 0
        %2244 = vmatprep.subr.bf16.mxu0 0
        %2245 = vmatpush1.bf16.msra.mxu0 0
        %2246 = vmatprep.subr.bf16.mxu0 0
        %2247 = vmatpush1.bf16.msra.mxu0 0
        %2248 = vmatprep.subr.bf16.mxu0 0
        %2249 = vmatpush1.bf16.msra.mxu0 0
        %2250 = vmatprep.subr.bf16.mxu0 0
        %2251 = vmatpush1.bf16.msra.mxu0 0
        %2252 = vmatprep.subr.bf16.mxu0 0
        %2253 = vmatpush1.bf16.msra.mxu0 0
        %2254 = vmatprep.subr.bf16.mxu0 0
        %2255 = vmatpush1.bf16.msra.mxu0 0
        %2256 = vmatprep.subr.bf16.mxu0 0
        %2257 = vmatpush1.bf16.msra.mxu0 %v2240
        %2258 = vmatprep.subr.bf16.mxu0 0
        %2259 = vmatpush2.bf16.msra.mxu0 0
        %2260 = vmatprep.subr.bf16.mxu0 0
        %2261 = vmatpush2.bf16.msra.mxu0 0
        %2262 = vmatprep.subr.bf16.mxu0 0
        %2263 = vmatpush2.bf16.msra.mxu0 0
        %2264 = vmatprep.subr.bf16.mxu0 0
        %2265 = vmatpush2.bf16.msra.mxu0 0
        %2266 = vmatprep.subr.bf16.mxu0 0
        %2267 = vmatpush2.bf16.msra.mxu0 0
        %2268 = vmatprep.subr.bf16.mxu0 0
        %2269 = vmatpush2.bf16.msra.mxu0 0
        %2270 = vmatprep.subr.bf16.mxu0 0
        %2271 = vmatpush2.bf16.msra.mxu0 0
        %2272 = vmatprep.subr.bf16.mxu0 0
        %2273 = vmatpush2.bf16.msra.mxu0 0
        %2274 = vmatprep.mubr.bf16.mxu0 0
        %2275 = vmatmul.mubr.bf16.gmra.mxu0 %v2237
        %v2276 = vpop.f32.mrf.mxu0
        %v2277 = vadd.f32 0.0, %v2276
        %v2278 = vpop.f32.mrf.mxu0
        %v2279 = vpop.f32.mrf.mxu0
        %v2280 = vpop.f32.mrf.mxu0
        %2281 = vdwg.mxu0
        %v2282 = vcombine.low %v2139, %v2231
        %v2283 = vcombine.high %v2139, %v2231
        %v2285 = vunpack.c.l.s4 1983009808
        %v2286 = vunpack.c.0.s8 %v2285
        %v2287 = vlaneseq
        %v2288 = vshrl.u32 %v2287, 7
        %v2289 = vsub.s32 %v2286, %v2288
        %v2290 = vrot.slane %v2282, %v2289
        %v2292 = vunpack.c.l.s4 1983009808
        %v2293 = vunpack.c.0.s8 %v2292
        %v2294 = vlaneseq
        %v2295 = vshrl.u32 %v2294, 7
        %v2296 = vsub.s32 %v2293, %v2295
        %v2297 = vrot.slane %v2283, %v2296
        %v2298 = vcombine.low %v2185, %v2277
        %v2299 = vcombine.high %v2185, %v2277
        %v2301 = vunpack.c.l.s4 1983009808
        %v2302 = vunpack.c.0.s8 %v2301
        %v2303 = vlaneseq
        %v2304 = vshrl.u32 %v2303, 7
        %v2305 = vsub.s32 %v2302, %v2304
        %v2306 = vrot.slane %v2298, %v2305
        %v2308 = vunpack.c.l.s4 1983009808
        %v2309 = vunpack.c.0.s8 %v2308
        %v2310 = vlaneseq
        %v2311 = vshrl.u32 %v2310, 7
        %v2312 = vsub.s32 %v2309, %v2311
        %v2313 = vrot.slane %v2299, %v2312
        %v2314 = vcombine.low %v2290, %v2306
        %v2315 = vcombine.high %v2290, %v2306
        %v2317 = vunpack.c.l.s4 1934713408
        %v2318 = vunpack.c.0.s8 %v2317
        %v2319 = vlaneseq
        %v2320 = vshrl.u32 %v2319, 7
        %v2321 = vsub.s32 %v2318, %v2320
        %v2322 = vrot.slane %v2314, %v2321
        %v2324 = vunpack.c.l.s4 1934713408
        %v2325 = vunpack.c.0.s8 %v2324
        %v2326 = vlaneseq
        %v2327 = vshrl.u32 %v2326, 7
        %v2328 = vsub.s32 %v2325, %v2327
        %v2329 = vrot.slane %v2315, %v2328
        %v2330 = vcombine.low %v2297, %v2313
        %v2331 = vcombine.high %v2297, %v2313
        %v2333 = vunpack.c.l.s4 1934713408
        %v2334 = vunpack.c.0.s8 %v2333
        %v2335 = vlaneseq
        %v2336 = vshrl.u32 %v2335, 7
        %v2337 = vsub.s32 %v2334, %v2336
        %v2338 = vrot.slane %v2330, %v2337
        %v2340 = vunpack.c.l.s4 1934713408
        %v2341 = vunpack.c.0.s8 %v2340
        %v2342 = vlaneseq
        %v2343 = vshrl.u32 %v2342, 7
        %v2344 = vsub.s32 %v2341, %v2343
        %v2345 = vrot.slane %v2331, %v2344
        %v2346 = vcombine.high %v2322, 0.0
        %v2347 = vcombine.high %v2329, 0.0
        %v2348 = vcombine.high %v2338, 0.0
        %v2349 = vcombine.high %v2345, 0.0
        %v2350 = vcombine.low %v2322, %v2329
        %v2352 = vunpack.c.l.s4 1983009808
        %v2353 = vunpack.c.0.s8 %v2352
        %v2354 = vlaneseq
        %v2355 = vshrl.u32 %v2354, 7
        %v2356 = vsub.s32 %v2353, %v2355
        %v2357 = vrot.slane %v2350, %v2356
        %v2358 = vcombine.low %v2346, %v2347
        %v2360 = vunpack.c.l.s4 1983009808
        %v2361 = vunpack.c.0.s8 %v2360
        %v2362 = vlaneseq
        %v2363 = vshrl.u32 %v2362, 7
        %v2364 = vsub.s32 %v2361, %v2363
        %v2365 = vrot.slane %v2358, %v2364
        %v2366 = vcombine.low %v2338, %v2345
        %v2368 = vunpack.c.l.s4 1983009808
        %v2369 = vunpack.c.0.s8 %v2368
        %v2370 = vlaneseq
        %v2371 = vshrl.u32 %v2370, 7
        %v2372 = vsub.s32 %v2369, %v2371
        %v2373 = vrot.slane %v2366, %v2372
        %v2374 = vcombine.low %v2348, %v2349
        %v2376 = vunpack.c.l.s4 1983009808
        %v2377 = vunpack.c.0.s8 %v2376
        %v2378 = vlaneseq
        %v2379 = vshrl.u32 %v2378, 7
        %v2380 = vsub.s32 %v2377, %v2379
        %v2381 = vrot.slane %v2374, %v2380
        %v2382 = vcombine.low %v2357, %v2365
        %v2383 = vcombine.high %v2357, %v2365
        %v2385 = vunpack.c.l.s4 1934713408
        %v2386 = vunpack.c.0.s8 %v2385
        %v2387 = vlaneseq
        %v2388 = vshrl.u32 %v2387, 7
        %v2389 = vsub.s32 %v2386, %v2388
        %v2390 = vrot.slane %v2382, %v2389
        %v2392 = vunpack.c.l.s4 1934713408
        %v2393 = vunpack.c.0.s8 %v2392
        %v2394 = vlaneseq
        %v2395 = vshrl.u32 %v2394, 7
        %v2396 = vsub.s32 %v2393, %v2395
        %v2397 = vrot.slane %v2383, %v2396
        %v2398 = vcombine.low %v2373, %v2381
        %v2399 = vcombine.high %v2373, %v2381
        %v2401 = vunpack.c.l.s4 1934713408
        %v2402 = vunpack.c.0.s8 %v2401
        %v2403 = vlaneseq
        %v2404 = vshrl.u32 %v2403, 7
        %v2405 = vsub.s32 %v2402, %v2404
        %v2406 = vrot.slane %v2398, %v2405
        %v2408 = vunpack.c.l.s4 1934713408
        %v2409 = vunpack.c.0.s8 %v2408
        %v2410 = vlaneseq
        %v2411 = vshrl.u32 %v2410, 7
        %v2412 = vsub.s32 %v2409, %v2411
        %v2413 = vrot.slane %v2399, %v2412
        %v2414 = vcombine.low %v2390, %v2406
        %v2415 = vcombine.high %v2390, %v2406
        %v2416 = vcombine.low %v2397, %v2413
        %v2417 = vcombine.high %v2397, %v2413
        %2419 = vrot.lane.b32.xlu0 %v2415, 8
        %v2420 = vpop.permute.xlu0 %2419
        %2423 = vrot.lane.b32.xlu0 %v2416, 16
        %v2424 = vpop.permute.xlu0 %2423
        %2427 = vrot.lane.b32.xlu0 %v2417, 24
        %v2428 = vpop.permute.xlu0 %2427
        %v2430 = vsel %vm1864, %v2414, %v2420
        %vm2431 = vcmask 130048
        %v2432 = vsel %vm2431, %v2430, %v2424
        %vm2433 = vcmask 195584
        %v2434 = vsel %vm2433, %v2432, %v2428
        %v2435 = vpack.c.bf16 %v2434, %v2434
        %v2437 = vlaneseq
        %v2438 = vshrl.u32 %v2437, 7
        %v2439 = vsub.s32 0, %v2438
        %v2440 = vrot.slane %v1233, %v2439
        %v2446 = vunpack.c.l.b16 %v1229
        %v2447 = vunpack.c.l.b16 %v1230
        %v2448 = vunpack.c.l.b16 %v1231
        %v2449 = vunpack.c.l.b16 %v1232
        %v2450 = vpack.c.b16 %v2447, %v2446
        %v2451 = vpack.c.b16 %v2449, %v2448
        %v2455 = vsel %vm1253, %v2435, 0
        %2457 = vmatprep.subr.bf16.mxu0 0
        %2458 = vmatpush1.bf16.msra.mxu0 0
        %2459 = vmatprep.subr.bf16.mxu0 0
        %2460 = vmatpush1.bf16.msra.mxu0 0
        %2461 = vmatprep.subr.bf16.mxu0 0
        %2462 = vmatpush1.bf16.msra.mxu0 0
        %2463 = vmatprep.subr.bf16.mxu0 0
        %2464 = vmatpush1.bf16.msra.mxu0 0
        %2465 = vmatprep.subr.bf16.mxu0 0
        %2466 = vmatpush1.bf16.msra.mxu0 0
        %2467 = vmatprep.subr.bf16.mxu0 0
        %2468 = vmatpush1.bf16.msra.mxu0 0
        %2469 = vmatprep.subr.bf16.mxu0 0
        %2470 = vmatpush1.bf16.msra.mxu0 %v2451
        %2471 = vmatprep.subr.bf16.mxu0 0
        %2472 = vmatpush1.bf16.msra.mxu0 %v2450
        %2473 = vmatprep.subr.bf16.mxu0 0
        %2474 = vmatpush2.bf16.msra.mxu0 0
        %2475 = vmatprep.subr.bf16.mxu0 0
        %2476 = vmatpush2.bf16.msra.mxu0 0
        %2477 = vmatprep.subr.bf16.mxu0 0
        %2478 = vmatpush2.bf16.msra.mxu0 0
        %2479 = vmatprep.subr.bf16.mxu0 0
        %2480 = vmatpush2.bf16.msra.mxu0 0
        %2481 = vmatprep.subr.bf16.mxu0 0
        %2482 = vmatpush2.bf16.msra.mxu0 0
        %2483 = vmatprep.subr.bf16.mxu0 0
        %2484 = vmatpush2.bf16.msra.mxu0 0
        %2485 = vmatprep.subr.bf16.mxu0 0
        %2486 = vmatpush2.bf16.msra.mxu0 0
        %2487 = vmatprep.subr.bf16.mxu0 0
        %2488 = vmatpush2.bf16.msra.mxu0 0
        %2489 = vmatprep.mubr.bf16.mxu0 0
        %2490 = vmatmul.mubr.bf16.gmra.mxu0 %v2455
        %v2491 = vpop.f32.mrf.mxu0
        %v2492 = vadd.f32 %v2440, %v2491
        %v2493 = vpop.f32.mrf.mxu0
        %v2494 = vpop.f32.mrf.mxu0
        %v2495 = vpop.f32.mrf.mxu0
        %2496 = vdwg.mxu0
        %v2497 = vadd.f32 %v1203, %v2492
        %v2498 = vld [vmem:[#allocation14] sm:$0x1]
        %v2499 = vld [vmem:[#allocation16] sm:$0x1]
        %v2500 = vsel %vm1253, %v2497, 0.0
        %2501 = vadd.xlane.f32.xlu0 %v2500
        %v2502 = vpop.xlane.xlu0 %2501
        %v2503 = vrcp.pop 32.0
        %v2504 = vmul.f32 %v2502, %v2503
        %v2505 = vsub.f32 %v2497, %v2504
        %v2506 = vmul.f32 %v2505, %v2505
        %v2507 = vsel %vm1253, %v2506, 0.0
        %2508 = vadd.xlane.f32.xlu0 %v2507
        %v2509 = vpop.xlane.xlu0 %2508
        %v2510 = vmul.f32 %v2509, %v2503
        %v2511 = vadd.f32 %v2510, 1e-05
        %v2512 = vrsqrt.pop %v2511
        %v2513 = vmul.f32 %v2505, %v2512
        %v2515 = vlaneseq
        %v2516 = vshrl.u32 %v2515, 7
        %v2517 = vsub.s32 0, %v2516
        %v2518 = vrot.slane %v2498, %v2517
        %v2520 = vmul.f32 %v2513, %v2518
        %v2522 = vlaneseq
        %v2523 = vshrl.u32 %v2522, 7
        %v2524 = vsub.s32 0, %v2523
        %v2525 = vrot.slane %v2499, %v2524
        %v2527 = vadd.f32 %v2520, %v2525
        %v2528 = vld [vmem:[#allocation17] sm:$0xf]
        %v2529 = vld [vmem:[#allocation17 + $0x4] sm:$0xf]
        %v2530 = vld [vmem:[#allocation17 + $0x8] sm:$0xf]
        %v2531 = vld [vmem:[#allocation17 + $0xc] sm:$0xf]
        %v2532 = vld [vmem:[#allocation19] sm:$0x1]
        %v2533 = vld [vmem:[#allocation20] sm:$0xf]
        %v2534 = vld [vmem:[#allocation20 + $0x4] sm:$0xf]
        %v2535 = vld [vmem:[#allocation20 + $0x8] sm:$0xf]
        %v2536 = vld [vmem:[#allocation20 + $0xc] sm:$0xf]
        %v2537 = vld [vmem:[#allocation22] sm:$0x1]
        %v2538 = vld [vmem:[#allocation23] sm:$0xf]
        %v2539 = vld [vmem:[#allocation23 + $0x4] sm:$0xf]
        %v2540 = vld [vmem:[#allocation23 + $0x8] sm:$0xf]
        %v2541 = vld [vmem:[#allocation23 + $0xc] sm:$0xf]
        %v2542 = vld [vmem:[#allocation25] sm:$0x1]
        %v2543 = vld [vmem:[#allocation26] sm:$0xf]
        %v2544 = vld [vmem:[#allocation26 + $0x4] sm:$0xf]
        %v2545 = vld [vmem:[#allocation26 + $0x8] sm:$0xf]
        %v2546 = vld [vmem:[#allocation26 + $0xc] sm:$0xf]
        %v2547 = vld [vmem:[%s41] sm:$0x1]
        %v2548 = vpack.c.bf16 %v2527, %v2527
        %v2549 = vpack.c.bf16 %v1204, %v1204
        %v2551 = vlaneseq
        %v2552 = vshrl.u32 %v2551, 7
        %v2553 = vsub.s32 0, %v2552
        %v2554 = vrot.slane %v2532, %v2553
        %v2560 = vunpack.c.l.b16 %v2528
        %v2561 = vunpack.c.l.b16 %v2529
        %v2562 = vunpack.c.l.b16 %v2530
        %v2563 = vunpack.c.l.b16 %v2531
        %v2564 = vpack.c.b16 %v2561, %v2560
        %v2565 = vpack.c.b16 %v2563, %v2562
        %v2569 = vsel %vm1253, %v2548, 0
        %2571 = vmatprep.subr.bf16.mxu0 0
        %2572 = vmatpush1.bf16.msra.mxu0 0
        %2573 = vmatprep.subr.bf16.mxu0 0
        %2574 = vmatpush1.bf16.msra.mxu0 0
        %2575 = vmatprep.subr.bf16.mxu0 0
        %2576 = vmatpush1.bf16.msra.mxu0 0
        %2577 = vmatprep.subr.bf16.mxu0 0
        %2578 = vmatpush1.bf16.msra.mxu0 0
        %2579 = vmatprep.subr.bf16.mxu0 0
        %2580 = vmatpush1.bf16.msra.mxu0 0
        %2581 = vmatprep.subr.bf16.mxu0 0
        %2582 = vmatpush1.bf16.msra.mxu0 0
        %2583 = vmatprep.subr.bf16.mxu0 0
        %2584 = vmatpush1.bf16.msra.mxu0 %v2565
        %2585 = vmatprep.subr.bf16.mxu0 0
        %2586 = vmatpush1.bf16.msra.mxu0 %v2564
        %2587 = vmatprep.subr.bf16.mxu0 0
        %2588 = vmatpush2.bf16.msra.mxu0 0
        %2589 = vmatprep.subr.bf16.mxu0 0
        %2590 = vmatpush2.bf16.msra.mxu0 0
        %2591 = vmatprep.subr.bf16.mxu0 0
        %2592 = vmatpush2.bf16.msra.mxu0 0
        %2593 = vmatprep.subr.bf16.mxu0 0
        %2594 = vmatpush2.bf16.msra.mxu0 0
        %2595 = vmatprep.subr.bf16.mxu0 0
        %2596 = vmatpush2.bf16.msra.mxu0 0
        %2597 = vmatprep.subr.bf16.mxu0 0
        %2598 = vmatpush2.bf16.msra.mxu0 0
        %2599 = vmatprep.subr.bf16.mxu0 0
        %2600 = vmatpush2.bf16.msra.mxu0 0
        %2601 = vmatprep.subr.bf16.mxu0 0
        %2602 = vmatpush2.bf16.msra.mxu0 0
        %2603 = vmatprep.mubr.bf16.mxu0 0
        %2604 = vmatmul.mubr.bf16.gmra.mxu0 %v2569
        %v2605 = vpop.f32.mrf.mxu0
        %v2606 = vadd.f32 %v2554, %v2605
        %v2607 = vpop.f32.mrf.mxu0
        %v2608 = vpop.f32.mrf.mxu0
        %v2609 = vpop.f32.mrf.mxu0
        %2610 = vdwg.mxu0
        %v2612 = vlaneseq
        %v2613 = vshrl.u32 %v2612, 7
        %v2614 = vsub.s32 0, %v2613
        %v2615 = vrot.slane %v2537, %v2614
        %v2621 = vunpack.c.l.b16 %v2533
        %v2622 = vunpack.c.l.b16 %v2534
        %v2623 = vunpack.c.l.b16 %v2535
        %v2624 = vunpack.c.l.b16 %v2536
        %v2625 = vpack.c.b16 %v2622, %v2621
        %v2626 = vpack.c.b16 %v2624, %v2623
        %v2630 = vsel %vm1253, %v2549, 0
        %2632 = vmatprep.subr.bf16.mxu0 0
        %2633 = vmatpush1.bf16.msra.mxu0 0
        %2634 = vmatprep.subr.bf16.mxu0 0
        %2635 = vmatpush1.bf16.msra.mxu0 0
        %2636 = vmatprep.subr.bf16.mxu0 0
        %2637 = vmatpush1.bf16.msra.mxu0 0
        %2638 = vmatprep.subr.bf16.mxu0 0
        %2639 = vmatpush1.bf16.msra.mxu0 0
        %2640 = vmatprep.subr.bf16.mxu0 0
        %2641 = vmatpush1.bf16.msra.mxu0 0
        %2642 = vmatprep.subr.bf16.mxu0 0
        %2643 = vmatpush1.bf16.msra.mxu0 0
        %2644 = vmatprep.subr.bf16.mxu0 0
        %2645 = vmatpush1.bf16.msra.mxu0 %v2626
        %2646 = vmatprep.subr.bf16.mxu0 0
        %2647 = vmatpush1.bf16.msra.mxu0 %v2625
        %2648 = vmatprep.subr.bf16.mxu0 0
        %2649 = vmatpush2.bf16.msra.mxu0 0
        %2650 = vmatprep.subr.bf16.mxu0 0
        %2651 = vmatpush2.bf16.msra.mxu0 0
        %2652 = vmatprep.subr.bf16.mxu0 0
        %2653 = vmatpush2.bf16.msra.mxu0 0
        %2654 = vmatprep.subr.bf16.mxu0 0
        %2655 = vmatpush2.bf16.msra.mxu0 0
        %2656 = vmatprep.subr.bf16.mxu0 0
        %2657 = vmatpush2.bf16.msra.mxu0 0
        %2658 = vmatprep.subr.bf16.mxu0 0
        %2659 = vmatpush2.bf16.msra.mxu0 0
        %2660 = vmatprep.subr.bf16.mxu0 0
        %2661 = vmatpush2.bf16.msra.mxu0 0
        %2662 = vmatprep.subr.bf16.mxu0 0
        %2663 = vmatpush2.bf16.msra.mxu0 0
        %2664 = vmatprep.mubr.bf16.mxu0 0
        %2665 = vmatmul.mubr.bf16.gmra.mxu0 %v2630
        %v2666 = vpop.f32.mrf.mxu0
        %v2667 = vadd.f32 %v2615, %v2666
        %v2668 = vpop.f32.mrf.mxu0
        %v2669 = vpop.f32.mrf.mxu0
        %v2670 = vpop.f32.mrf.mxu0
        %2671 = vdwg.mxu0
        %v2673 = vlaneseq
        %v2674 = vshrl.u32 %v2673, 7
        %v2675 = vsub.s32 0, %v2674
        %v2676 = vrot.slane %v2542, %v2675
        %v2682 = vunpack.c.l.b16 %v2538
        %v2683 = vunpack.c.l.b16 %v2539
        %v2684 = vunpack.c.l.b16 %v2540
        %v2685 = vunpack.c.l.b16 %v2541
        %v2686 = vpack.c.b16 %v2683, %v2682
        %v2687 = vpack.c.b16 %v2685, %v2684
        %2690 = vmatprep.subr.bf16.mxu0 0
        %2691 = vmatpush1.bf16.msra.mxu0 0
        %2692 = vmatprep.subr.bf16.mxu0 0
        %2693 = vmatpush1.bf16.msra.mxu0 0
        %2694 = vmatprep.subr.bf16.mxu0 0
        %2695 = vmatpush1.bf16.msra.mxu0 0
        %2696 = vmatprep.subr.bf16.mxu0 0
        %2697 = vmatpush1.bf16.msra.mxu0 0
        %2698 = vmatprep.subr.bf16.mxu0 0
        %2699 = vmatpush1.bf16.msra.mxu0 0
        %2700 = vmatprep.subr.bf16.mxu0 0
        %2701 = vmatpush1.bf16.msra.mxu0 0
        %2702 = vmatprep.subr.bf16.mxu0 0
        %2703 = vmatpush1.bf16.msra.mxu0 %v2687
        %2704 = vmatprep.subr.bf16.mxu0 0
        %2705 = vmatpush1.bf16.msra.mxu0 %v2686
        %2706 = vmatprep.subr.bf16.mxu0 0
        %2707 = vmatpush2.bf16.msra.mxu0 0
        %2708 = vmatprep.subr.bf16.mxu0 0
        %2709 = vmatpush2.bf16.msra.mxu0 0
        %2710 = vmatprep.subr.bf16.mxu0 0
        %2711 = vmatpush2.bf16.msra.mxu0 0
        %2712 = vmatprep.subr.bf16.mxu0 0
        %2713 = vmatpush2.bf16.msra.mxu0 0
        %2714 = vmatprep.subr.bf16.mxu0 0
        %2715 = vmatpush2.bf16.msra.mxu0 0
        %2716 = vmatprep.subr.bf16.mxu0 0
        %2717 = vmatpush2.bf16.msra.mxu0 0
        %2718 = vmatprep.subr.bf16.mxu0 0
        %2719 = vmatpush2.bf16.msra.mxu0 0
        %2720 = vmatprep.subr.bf16.mxu0 0
        %2721 = vmatpush2.bf16.msra.mxu0 0
        %2722 = vmatprep.mubr.bf16.mxu0 0
        %2723 = vmatmul.mubr.bf16.gmra.mxu0 %v2630
        %v2724 = vpop.f32.mrf.mxu0
        %v2725 = vadd.f32 %v2676, %v2724
        %v2726 = vpop.f32.mrf.mxu0
        %v2727 = vpop.f32.mrf.mxu0
        %v2728 = vpop.f32.mrf.mxu0
        %2729 = vdwg.mxu0
        %v2730 = vmul.f32 %v2606, 0.35355338
        %2732 = vrot.lane.b32.xlu0 %v2730, 120
        %v2733 = vpop.permute.xlu0 %2732
        %2735 = vrot.lane.b32.xlu0 %v2730, 112
        %v2736 = vpop.permute.xlu0 %2735
        %2738 = vrot.lane.b32.xlu0 %v2730, 104
        %v2739 = vpop.permute.xlu0 %2738
        %v2741 = vcombine.low %v2730, %v2736
        %v2742 = vcombine.high %v2730, %v2736
        %v2744 = vunpack.c.l.s4 1983009808
        %v2745 = vunpack.c.0.s8 %v2744
        %v2746 = vlaneseq
        %v2747 = vshrl.u32 %v2746, 7
        %v2748 = vsub.s32 %v2745, %v2747
        %v2749 = vrot.slane %v2741, %v2748
        %v2751 = vunpack.c.l.s4 1983009808
        %v2752 = vunpack.c.0.s8 %v2751
        %v2753 = vlaneseq
        %v2754 = vshrl.u32 %v2753, 7
        %v2755 = vsub.s32 %v2752, %v2754
        %v2756 = vrot.slane %v2742, %v2755
        %v2757 = vcombine.low %v2733, %v2739
        %v2758 = vcombine.high %v2733, %v2739
        %v2760 = vunpack.c.l.s4 1983009808
        %v2761 = vunpack.c.0.s8 %v2760
        %v2762 = vlaneseq
        %v2763 = vshrl.u32 %v2762, 7
        %v2764 = vsub.s32 %v2761, %v2763
        %v2765 = vrot.slane %v2757, %v2764
        %v2767 = vunpack.c.l.s4 1983009808
        %v2768 = vunpack.c.0.s8 %v2767
        %v2769 = vlaneseq
        %v2770 = vshrl.u32 %v2769, 7
        %v2771 = vsub.s32 %v2768, %v2770
        %v2772 = vrot.slane %v2758, %v2771
        %v2773 = vcombine.low %v2749, %v2765
        %v2774 = vcombine.high %v2749, %v2765
        %v2776 = vunpack.c.l.s4 1934713408
        %v2777 = vunpack.c.0.s8 %v2776
        %v2778 = vlaneseq
        %v2779 = vshrl.u32 %v2778, 7
        %v2780 = vsub.s32 %v2777, %v2779
        %v2781 = vrot.slane %v2773, %v2780
        %v2783 = vunpack.c.l.s4 1934713408
        %v2784 = vunpack.c.0.s8 %v2783
        %v2785 = vlaneseq
        %v2786 = vshrl.u32 %v2785, 7
        %v2787 = vsub.s32 %v2784, %v2786
        %v2788 = vrot.slane %v2774, %v2787
        %v2789 = vcombine.low %v2756, %v2772
        %v2790 = vcombine.high %v2756, %v2772
        %v2792 = vunpack.c.l.s4 1934713408
        %v2793 = vunpack.c.0.s8 %v2792
        %v2794 = vlaneseq
        %v2795 = vshrl.u32 %v2794, 7
        %v2796 = vsub.s32 %v2793, %v2795
        %v2797 = vrot.slane %v2789, %v2796
        %v2799 = vunpack.c.l.s4 1934713408
        %v2800 = vunpack.c.0.s8 %v2799
        %v2801 = vlaneseq
        %v2802 = vshrl.u32 %v2801, 7
        %v2803 = vsub.s32 %v2800, %v2802
        %v2804 = vrot.slane %v2790, %v2803
        %v2805 = vcombine.high %v2781, 0.0
        %v2806 = vcombine.high %v2788, 0.0
        %v2807 = vcombine.high %v2797, 0.0
        %v2808 = vcombine.high %v2804, 0.0
        %v2809 = vcombine.low %v2781, %v2788
        %v2811 = vunpack.c.l.s4 1983009808
        %v2812 = vunpack.c.0.s8 %v2811
        %v2813 = vlaneseq
        %v2814 = vshrl.u32 %v2813, 7
        %v2815 = vsub.s32 %v2812, %v2814
        %v2816 = vrot.slane %v2809, %v2815
        %v2817 = vcombine.low %v2805, %v2806
        %v2819 = vunpack.c.l.s4 1983009808
        %v2820 = vunpack.c.0.s8 %v2819
        %v2821 = vlaneseq
        %v2822 = vshrl.u32 %v2821, 7
        %v2823 = vsub.s32 %v2820, %v2822
        %v2824 = vrot.slane %v2817, %v2823
        %v2825 = vcombine.low %v2797, %v2804
        %v2827 = vunpack.c.l.s4 1983009808
        %v2828 = vunpack.c.0.s8 %v2827
        %v2829 = vlaneseq
        %v2830 = vshrl.u32 %v2829, 7
        %v2831 = vsub.s32 %v2828, %v2830
        %v2832 = vrot.slane %v2825, %v2831
        %v2833 = vcombine.low %v2807, %v2808
        %v2835 = vunpack.c.l.s4 1983009808
        %v2836 = vunpack.c.0.s8 %v2835
        %v2837 = vlaneseq
        %v2838 = vshrl.u32 %v2837, 7
        %v2839 = vsub.s32 %v2836, %v2838
        %v2840 = vrot.slane %v2833, %v2839
        %v2841 = vcombine.low %v2816, %v2824
        %v2842 = vcombine.high %v2816, %v2824
        %v2844 = vunpack.c.l.s4 1934713408
        %v2845 = vunpack.c.0.s8 %v2844
        %v2846 = vlaneseq
        %v2847 = vshrl.u32 %v2846, 7
        %v2848 = vsub.s32 %v2845, %v2847
        %v2849 = vrot.slane %v2841, %v2848
        %v2851 = vunpack.c.l.s4 1934713408
        %v2852 = vunpack.c.0.s8 %v2851
        %v2853 = vlaneseq
        %v2854 = vshrl.u32 %v2853, 7
        %v2855 = vsub.s32 %v2852, %v2854
        %v2856 = vrot.slane %v2842, %v2855
        %v2857 = vcombine.low %v2832, %v2840
        %v2858 = vcombine.high %v2832, %v2840
        %v2860 = vunpack.c.l.s4 1934713408
        %v2861 = vunpack.c.0.s8 %v2860
        %v2862 = vlaneseq
        %v2863 = vshrl.u32 %v2862, 7
        %v2864 = vsub.s32 %v2861, %v2863
        %v2865 = vrot.slane %v2857, %v2864
        %v2867 = vunpack.c.l.s4 1934713408
        %v2868 = vunpack.c.0.s8 %v2867
        %v2869 = vlaneseq
        %v2870 = vshrl.u32 %v2869, 7
        %v2871 = vsub.s32 %v2868, %v2870
        %v2872 = vrot.slane %v2858, %v2871
        %v2873 = vcombine.low %v2849, %v2865
        %v2874 = vcombine.high %v2849, %v2865
        %v2875 = vcombine.low %v2856, %v2872
        %v2876 = vcombine.high %v2856, %v2872
        %v2877 = vpack.c.bf16 %v2873, %v2873
        %v2878 = vpack.c.bf16 %v2874, %v2874
        %v2879 = vpack.c.bf16 %v2875, %v2875
        %v2880 = vpack.c.bf16 %v2876, %v2876
        %2882 = vrot.lane.b32.xlu0 %v2667, 120
        %v2883 = vpop.permute.xlu0 %2882
        %2885 = vrot.lane.b32.xlu0 %v2667, 112
        %v2886 = vpop.permute.xlu0 %2885
        %2888 = vrot.lane.b32.xlu0 %v2667, 104
        %v2889 = vpop.permute.xlu0 %2888
        %v2891 = vcombine.low %v2667, %v2886
        %v2892 = vcombine.high %v2667, %v2886
        %v2894 = vunpack.c.l.s4 1983009808
        %v2895 = vunpack.c.0.s8 %v2894
        %v2896 = vlaneseq
        %v2897 = vshrl.u32 %v2896, 7
        %v2898 = vsub.s32 %v2895, %v2897
        %v2899 = vrot.slane %v2891, %v2898
        %v2901 = vunpack.c.l.s4 1983009808
        %v2902 = vunpack.c.0.s8 %v2901
        %v2903 = vlaneseq
        %v2904 = vshrl.u32 %v2903, 7
        %v2905 = vsub.s32 %v2902, %v2904
        %v2906 = vrot.slane %v2892, %v2905
        %v2907 = vcombine.low %v2883, %v2889
        %v2908 = vcombine.high %v2883, %v2889
        %v2910 = vunpack.c.l.s4 1983009808
        %v2911 = vunpack.c.0.s8 %v2910
        %v2912 = vlaneseq
        %v2913 = vshrl.u32 %v2912, 7
        %v2914 = vsub.s32 %v2911, %v2913
        %v2915 = vrot.slane %v2907, %v2914
        %v2917 = vunpack.c.l.s4 1983009808
        %v2918 = vunpack.c.0.s8 %v2917
        %v2919 = vlaneseq
        %v2920 = vshrl.u32 %v2919, 7
        %v2921 = vsub.s32 %v2918, %v2920
        %v2922 = vrot.slane %v2908, %v2921
        %v2923 = vcombine.low %v2899, %v2915
        %v2924 = vcombine.high %v2899, %v2915
        %v2926 = vunpack.c.l.s4 1934713408
        %v2927 = vunpack.c.0.s8 %v2926
        %v2928 = vlaneseq
        %v2929 = vshrl.u32 %v2928, 7
        %v2930 = vsub.s32 %v2927, %v2929
        %v2931 = vrot.slane %v2923, %v2930
        %v2933 = vunpack.c.l.s4 1934713408
        %v2934 = vunpack.c.0.s8 %v2933
        %v2935 = vlaneseq
        %v2936 = vshrl.u32 %v2935, 7
        %v2937 = vsub.s32 %v2934, %v2936
        %v2938 = vrot.slane %v2924, %v2937
        %v2939 = vcombine.low %v2906, %v2922
        %v2940 = vcombine.high %v2906, %v2922
        %v2942 = vunpack.c.l.s4 1934713408
        %v2943 = vunpack.c.0.s8 %v2942
        %v2944 = vlaneseq
        %v2945 = vshrl.u32 %v2944, 7
        %v2946 = vsub.s32 %v2943, %v2945
        %v2947 = vrot.slane %v2939, %v2946
        %v2949 = vunpack.c.l.s4 1934713408
        %v2950 = vunpack.c.0.s8 %v2949
        %v2951 = vlaneseq
        %v2952 = vshrl.u32 %v2951, 7
        %v2953 = vsub.s32 %v2950, %v2952
        %v2954 = vrot.slane %v2940, %v2953
        %v2955 = vcombine.high %v2931, 0.0
        %v2956 = vcombine.high %v2938, 0.0
        %v2957 = vcombine.high %v2947, 0.0
        %v2958 = vcombine.high %v2954, 0.0
        %v2959 = vcombine.low %v2931, %v2938
        %v2961 = vunpack.c.l.s4 1983009808
        %v2962 = vunpack.c.0.s8 %v2961
        %v2963 = vlaneseq
        %v2964 = vshrl.u32 %v2963, 7
        %v2965 = vsub.s32 %v2962, %v2964
        %v2966 = vrot.slane %v2959, %v2965
        %v2967 = vcombine.low %v2955, %v2956
        %v2969 = vunpack.c.l.s4 1983009808
        %v2970 = vunpack.c.0.s8 %v2969
        %v2971 = vlaneseq
        %v2972 = vshrl.u32 %v2971, 7
        %v2973 = vsub.s32 %v2970, %v2972
        %v2974 = vrot.slane %v2967, %v2973
        %v2975 = vcombine.low %v2947, %v2954
        %v2977 = vunpack.c.l.s4 1983009808
        %v2978 = vunpack.c.0.s8 %v2977
        %v2979 = vlaneseq
        %v2980 = vshrl.u32 %v2979, 7
        %v2981 = vsub.s32 %v2978, %v2980
        %v2982 = vrot.slane %v2975, %v2981
        %v2983 = vcombine.low %v2957, %v2958
        %v2985 = vunpack.c.l.s4 1983009808
        %v2986 = vunpack.c.0.s8 %v2985
        %v2987 = vlaneseq
        %v2988 = vshrl.u32 %v2987, 7
        %v2989 = vsub.s32 %v2986, %v2988
        %v2990 = vrot.slane %v2983, %v2989
        %v2991 = vcombine.low %v2966, %v2974
        %v2992 = vcombine.high %v2966, %v2974
        %v2994 = vunpack.c.l.s4 1934713408
        %v2995 = vunpack.c.0.s8 %v2994
        %v2996 = vlaneseq
        %v2997 = vshrl.u32 %v2996, 7
        %v2998 = vsub.s32 %v2995, %v2997
        %v2999 = vrot.slane %v2991, %v2998
        %v3001 = vunpack.c.l.s4 1934713408
        %v3002 = vunpack.c.0.s8 %v3001
        %v3003 = vlaneseq
        %v3004 = vshrl.u32 %v3003, 7
        %v3005 = vsub.s32 %v3002, %v3004
        %v3006 = vrot.slane %v2992, %v3005
        %v3007 = vcombine.low %v2982, %v2990
        %v3008 = vcombine.high %v2982, %v2990
        %v3010 = vunpack.c.l.s4 1934713408
        %v3011 = vunpack.c.0.s8 %v3010
        %v3012 = vlaneseq
        %v3013 = vshrl.u32 %v3012, 7
        %v3014 = vsub.s32 %v3011, %v3013
        %v3015 = vrot.slane %v3007, %v3014
        %v3017 = vunpack.c.l.s4 1934713408
        %v3018 = vunpack.c.0.s8 %v3017
        %v3019 = vlaneseq
        %v3020 = vshrl.u32 %v3019, 7
        %v3021 = vsub.s32 %v3018, %v3020
        %v3022 = vrot.slane %v3008, %v3021
        %v3023 = vcombine.low %v2999, %v3015
        %v3024 = vcombine.high %v2999, %v3015
        %v3025 = vcombine.low %v3006, %v3022
        %v3026 = vcombine.high %v3006, %v3022
        %v3027 = vpack.c.bf16 %v3023, %v3023
        %v3028 = vpack.c.bf16 %v3024, %v3024
        %v3029 = vpack.c.bf16 %v3025, %v3025
        %v3030 = vpack.c.bf16 %v3026, %v3026
        %3032 = vrot.lane.b32.xlu0 %v2725, 120
        %v3033 = vpop.permute.xlu0 %3032
        %3035 = vrot.lane.b32.xlu0 %v2725, 112
        %v3036 = vpop.permute.xlu0 %3035
        %3038 = vrot.lane.b32.xlu0 %v2725, 104
        %v3039 = vpop.permute.xlu0 %3038
        %v3041 = vcombine.low %v2725, %v3036
        %v3042 = vcombine.high %v2725, %v3036
        %v3044 = vunpack.c.l.s4 1983009808
        %v3045 = vunpack.c.0.s8 %v3044
        %v3046 = vlaneseq
        %v3047 = vshrl.u32 %v3046, 7
        %v3048 = vsub.s32 %v3045, %v3047
        %v3049 = vrot.slane %v3041, %v3048
        %v3051 = vunpack.c.l.s4 1983009808
        %v3052 = vunpack.c.0.s8 %v3051
        %v3053 = vlaneseq
        %v3054 = vshrl.u32 %v3053, 7
        %v3055 = vsub.s32 %v3052, %v3054
        %v3056 = vrot.slane %v3042, %v3055
        %v3057 = vcombine.low %v3033, %v3039
        %v3058 = vcombine.high %v3033, %v3039
        %v3060 = vunpack.c.l.s4 1983009808
        %v3061 = vunpack.c.0.s8 %v3060
        %v3062 = vlaneseq
        %v3063 = vshrl.u32 %v3062, 7
        %v3064 = vsub.s32 %v3061, %v3063
        %v3065 = vrot.slane %v3057, %v3064
        %v3067 = vunpack.c.l.s4 1983009808
        %v3068 = vunpack.c.0.s8 %v3067
        %v3069 = vlaneseq
        %v3070 = vshrl.u32 %v3069, 7
        %v3071 = vsub.s32 %v3068, %v3070
        %v3072 = vrot.slane %v3058, %v3071
        %v3073 = vcombine.low %v3049, %v3065
        %v3074 = vcombine.high %v3049, %v3065
        %v3076 = vunpack.c.l.s4 1934713408
        %v3077 = vunpack.c.0.s8 %v3076
        %v3078 = vlaneseq
        %v3079 = vshrl.u32 %v3078, 7
        %v3080 = vsub.s32 %v3077, %v3079
        %v3081 = vrot.slane %v3073, %v3080
        %v3083 = vunpack.c.l.s4 1934713408
        %v3084 = vunpack.c.0.s8 %v3083
        %v3085 = vlaneseq
        %v3086 = vshrl.u32 %v3085, 7
        %v3087 = vsub.s32 %v3084, %v3086
        %v3088 = vrot.slane %v3074, %v3087
        %v3089 = vcombine.low %v3056, %v3072
        %v3090 = vcombine.high %v3056, %v3072
        %v3092 = vunpack.c.l.s4 1934713408
        %v3093 = vunpack.c.0.s8 %v3092
        %v3094 = vlaneseq
        %v3095 = vshrl.u32 %v3094, 7
        %v3096 = vsub.s32 %v3093, %v3095
        %v3097 = vrot.slane %v3089, %v3096
        %v3099 = vunpack.c.l.s4 1934713408
        %v3100 = vunpack.c.0.s8 %v3099
        %v3101 = vlaneseq
        %v3102 = vshrl.u32 %v3101, 7
        %v3103 = vsub.s32 %v3100, %v3102
        %v3104 = vrot.slane %v3090, %v3103
        %v3105 = vcombine.high %v3081, 0.0
        %v3106 = vcombine.high %v3088, 0.0
        %v3107 = vcombine.high %v3097, 0.0
        %v3108 = vcombine.high %v3104, 0.0
        %v3109 = vcombine.low %v3081, %v3088
        %v3111 = vunpack.c.l.s4 1983009808
        %v3112 = vunpack.c.0.s8 %v3111
        %v3113 = vlaneseq
        %v3114 = vshrl.u32 %v3113, 7
        %v3115 = vsub.s32 %v3112, %v3114
        %v3116 = vrot.slane %v3109, %v3115
        %v3117 = vcombine.low %v3105, %v3106
        %v3119 = vunpack.c.l.s4 1983009808
        %v3120 = vunpack.c.0.s8 %v3119
        %v3121 = vlaneseq
        %v3122 = vshrl.u32 %v3121, 7
        %v3123 = vsub.s32 %v3120, %v3122
        %v3124 = vrot.slane %v3117, %v3123
        %v3125 = vcombine.low %v3097, %v3104
        %v3127 = vunpack.c.l.s4 1983009808
        %v3128 = vunpack.c.0.s8 %v3127
        %v3129 = vlaneseq
        %v3130 = vshrl.u32 %v3129, 7
        %v3131 = vsub.s32 %v3128, %v3130
        %v3132 = vrot.slane %v3125, %v3131
        %v3133 = vcombine.low %v3107, %v3108
        %v3135 = vunpack.c.l.s4 1983009808
        %v3136 = vunpack.c.0.s8 %v3135
        %v3137 = vlaneseq
        %v3138 = vshrl.u32 %v3137, 7
        %v3139 = vsub.s32 %v3136, %v3138
        %v3140 = vrot.slane %v3133, %v3139
        %v3141 = vcombine.low %v3116, %v3124
        %v3142 = vcombine.high %v3116, %v3124
        %v3144 = vunpack.c.l.s4 1934713408
        %v3145 = vunpack.c.0.s8 %v3144
        %v3146 = vlaneseq
        %v3147 = vshrl.u32 %v3146, 7
        %v3148 = vsub.s32 %v3145, %v3147
        %v3149 = vrot.slane %v3141, %v3148
        %v3151 = vunpack.c.l.s4 1934713408
        %v3152 = vunpack.c.0.s8 %v3151
        %v3153 = vlaneseq
        %v3154 = vshrl.u32 %v3153, 7
        %v3155 = vsub.s32 %v3152, %v3154
        %v3156 = vrot.slane %v3142, %v3155
        %v3157 = vcombine.low %v3132, %v3140
        %v3158 = vcombine.high %v3132, %v3140
        %v3160 = vunpack.c.l.s4 1934713408
        %v3161 = vunpack.c.0.s8 %v3160
        %v3162 = vlaneseq
        %v3163 = vshrl.u32 %v3162, 7
        %v3164 = vsub.s32 %v3161, %v3163
        %v3165 = vrot.slane %v3157, %v3164
        %v3167 = vunpack.c.l.s4 1934713408
        %v3168 = vunpack.c.0.s8 %v3167
        %v3169 = vlaneseq
        %v3170 = vshrl.u32 %v3169, 7
        %v3171 = vsub.s32 %v3168, %v3170
        %v3172 = vrot.slane %v3158, %v3171
        %v3173 = vcombine.low %v3149, %v3165
        %v3174 = vcombine.high %v3149, %v3165
        %v3175 = vcombine.low %v3156, %v3172
        %v3176 = vcombine.high %v3156, %v3172
        %v3177 = vpack.c.bf16 %v3173, %v3173
        %v3178 = vpack.c.bf16 %v3174, %v3174
        %v3179 = vpack.c.bf16 %v3175, %v3175
        %v3180 = vpack.c.bf16 %v3176, %v3176
        %v3182 = vlaneseq
        %v3183 = vshrl.u32 %v3182, 7
        %v3184 = vsub.s32 0, %v3183
        %v3185 = vrot.slane %v1213, %v3184
        %v3188 = vsel %vm1864, %v2877, 0
        %v3191 = vsel %vm1864, %v3027, 0
        %3193 = vmatprep.subr.bf16.mxu0 0
        %3194 = vmatpush1.bf16.xpose.msra.mxu0 0
        %3195 = vmatprep.subr.bf16.mxu0 0
        %3196 = vmatpush1.bf16.xpose.msra.mxu0 0
        %3197 = vmatprep.subr.bf16.mxu0 0
        %3198 = vmatpush1.bf16.xpose.msra.mxu0 0
        %3199 = vmatprep.subr.bf16.mxu0 0
        %3200 = vmatpush1.bf16.xpose.msra.mxu0 0
        %3201 = vmatprep.subr.bf16.mxu0 0
        %3202 = vmatpush1.bf16.xpose.msra.mxu0 0
        %3203 = vmatprep.subr.bf16.mxu0 0
        %3204 = vmatpush1.bf16.xpose.msra.mxu0 0
        %3205 = vmatprep.subr.bf16.mxu0 0
        %3206 = vmatpush1.bf16.xpose.msra.mxu0 0
        %3207 = vmatprep.subr.bf16.mxu0 0
        %3208 = vmatpush1.bf16.xpose.msra.mxu0 %v3191
        %3209 = vmatprep.subr.bf16.mxu0 0
        %3210 = vmatpush2.bf16.xpose.msra.mxu0 0
        %3211 = vmatprep.subr.bf16.mxu0 0
        %3212 = vmatpush2.bf16.xpose.msra.mxu0 0
        %3213 = vmatprep.subr.bf16.mxu0 0
        %3214 = vmatpush2.bf16.xpose.msra.mxu0 0
        %3215 = vmatprep.subr.bf16.mxu0 0
        %3216 = vmatpush2.bf16.xpose.msra.mxu0 0
        %3217 = vmatprep.subr.bf16.mxu0 0
        %3218 = vmatpush2.bf16.xpose.msra.mxu0 0
        %3219 = vmatprep.subr.bf16.mxu0 0
        %3220 = vmatpush2.bf16.xpose.msra.mxu0 0
        %3221 = vmatprep.subr.bf16.mxu0 0
        %3222 = vmatpush2.bf16.xpose.msra.mxu0 0
        %3223 = vmatprep.subr.bf16.mxu0 0
        %3224 = vmatpush2.bf16.xpose.msra.mxu0 0
        %3225 = vmatprep.mubr.bf16.mxu0 0
        %3226 = vmatmul.mubr.bf16.gmra.mxu0 %v3188
        %v3227 = vpop.f32.mrf.mxu0
        %v3228 = vadd.f32 %v3185, %v3227
        %v3229 = vpop.f32.mrf.mxu0
        %v3230 = vpop.f32.mrf.mxu0
        %v3231 = vpop.f32.mrf.mxu0
        %3232 = vdwg.mxu0
        %v3234 = vsel %vm1864, %v2878, 0
        %v3237 = vsel %vm1864, %v3028, 0
        %3239 = vmatprep.subr.bf16.mxu0 0
        %3240 = vmatpush1.bf16.xpose.msra.mxu0 0
        %3241 = vmatprep.subr.bf16.mxu0 0
        %3242 = vmatpush1.bf16.xpose.msra.mxu0 0
        %3243 = vmatprep.subr.bf16.mxu0 0
        %3244 = vmatpush1.bf16.xpose.msra.mxu0 0
        %3245 = vmatprep.subr.bf16.mxu0 0
        %3246 = vmatpush1.bf16.xpose.msra.mxu0 0
        %3247 = vmatprep.subr.bf16.mxu0 0
        %3248 = vmatpush1.bf16.xpose.msra.mxu0 0
        %3249 = vmatprep.subr.bf16.mxu0 0
        %3250 = vmatpush1.bf16.xpose.msra.mxu0 0
        %3251 = vmatprep.subr.bf16.mxu0 0
        %3252 = vmatpush1.bf16.xpose.msra.mxu0 0
        %3253 = vmatprep.subr.bf16.mxu0 0
        %3254 = vmatpush1.bf16.xpose.msra.mxu0 %v3237
        %3255 = vmatprep.subr.bf16.mxu0 0
        %3256 = vmatpush2.bf16.xpose.msra.mxu0 0
        %3257 = vmatprep.subr.bf16.mxu0 0
        %3258 = vmatpush2.bf16.xpose.msra.mxu0 0
        %3259 = vmatprep.subr.bf16.mxu0 0
        %3260 = vmatpush2.bf16.xpose.msra.mxu0 0
        %3261 = vmatprep.subr.bf16.mxu0 0
        %3262 = vmatpush2.bf16.xpose.msra.mxu0 0
        %3263 = vmatprep.subr.bf16.mxu0 0
        %3264 = vmatpush2.bf16.xpose.msra.mxu0 0
        %3265 = vmatprep.subr.bf16.mxu0 0
        %3266 = vmatpush2.bf16.xpose.msra.mxu0 0
        %3267 = vmatprep.subr.bf16.mxu0 0
        %3268 = vmatpush2.bf16.xpose.msra.mxu0 0
        %3269 = vmatprep.subr.bf16.mxu0 0
        %3270 = vmatpush2.bf16.xpose.msra.mxu0 0
        %3271 = vmatprep.mubr.bf16.mxu0 0
        %3272 = vmatmul.mubr.bf16.gmra.mxu0 %v3234
        %v3273 = vpop.f32.mrf.mxu0
        %v3274 = vadd.f32 %v3185, %v3273
        %v3275 = vpop.f32.mrf.mxu0
        %v3276 = vpop.f32.mrf.mxu0
        %v3277 = vpop.f32.mrf.mxu0
        %3278 = vdwg.mxu0
        %v3280 = vsel %vm1864, %v2879, 0
        %v3283 = vsel %vm1864, %v3029, 0
        %3285 = vmatprep.subr.bf16.mxu0 0
        %3286 = vmatpush1.bf16.xpose.msra.mxu0 0
        %3287 = vmatprep.subr.bf16.mxu0 0
        %3288 = vmatpush1.bf16.xpose.msra.mxu0 0
        %3289 = vmatprep.subr.bf16.mxu0 0
        %3290 = vmatpush1.bf16.xpose.msra.mxu0 0
        %3291 = vmatprep.subr.bf16.mxu0 0
        %3292 = vmatpush1.bf16.xpose.msra.mxu0 0
        %3293 = vmatprep.subr.bf16.mxu0 0
        %3294 = vmatpush1.bf16.xpose.msra.mxu0 0
        %3295 = vmatprep.subr.bf16.mxu0 0
        %3296 = vmatpush1.bf16.xpose.msra.mxu0 0
        %3297 = vmatprep.subr.bf16.mxu0 0
        %3298 = vmatpush1.bf16.xpose.msra.mxu0 0
        %3299 = vmatprep.subr.bf16.mxu0 0
        %3300 = vmatpush1.bf16.xpose.msra.mxu0 %v3283
        %3301 = vmatprep.subr.bf16.mxu0 0
        %3302 = vmatpush2.bf16.xpose.msra.mxu0 0
        %3303 = vmatprep.subr.bf16.mxu0 0
        %3304 = vmatpush2.bf16.xpose.msra.mxu0 0
        %3305 = vmatprep.subr.bf16.mxu0 0
        %3306 = vmatpush2.bf16.xpose.msra.mxu0 0
        %3307 = vmatprep.subr.bf16.mxu0 0
        %3308 = vmatpush2.bf16.xpose.msra.mxu0 0
        %3309 = vmatprep.subr.bf16.mxu0 0
        %3310 = vmatpush2.bf16.xpose.msra.mxu0 0
        %3311 = vmatprep.subr.bf16.mxu0 0
        %3312 = vmatpush2.bf16.xpose.msra.mxu0 0
        %3313 = vmatprep.subr.bf16.mxu0 0
        %3314 = vmatpush2.bf16.xpose.msra.mxu0 0
        %3315 = vmatprep.subr.bf16.mxu0 0
        %3316 = vmatpush2.bf16.xpose.msra.mxu0 0
        %3317 = vmatprep.mubr.bf16.mxu0 0
        %3318 = vmatmul.mubr.bf16.gmra.mxu0 %v3280
        %v3319 = vpop.f32.mrf.mxu0
        %v3320 = vadd.f32 %v3185, %v3319
        %v3321 = vpop.f32.mrf.mxu0
        %v3322 = vpop.f32.mrf.mxu0
        %v3323 = vpop.f32.mrf.mxu0
        %3324 = vdwg.mxu0
        %v3326 = vsel %vm1864, %v2880, 0
        %v3329 = vsel %vm1864, %v3030, 0
        %3331 = vmatprep.subr.bf16.mxu0 0
        %3332 = vmatpush1.bf16.xpose.msra.mxu0 0
        %3333 = vmatprep.subr.bf16.mxu0 0
        %3334 = vmatpush1.bf16.xpose.msra.mxu0 0
        %3335 = vmatprep.subr.bf16.mxu0 0
        %3336 = vmatpush1.bf16.xpose.msra.mxu0 0
        %3337 = vmatprep.subr.bf16.mxu0 0
        %3338 = vmatpush1.bf16.xpose.msra.mxu0 0
        %3339 = vmatprep.subr.bf16.mxu0 0
        %3340 = vmatpush1.bf16.xpose.msra.mxu0 0
        %3341 = vmatprep.subr.bf16.mxu0 0
        %3342 = vmatpush1.bf16.xpose.msra.mxu0 0
        %3343 = vmatprep.subr.bf16.mxu0 0
        %3344 = vmatpush1.bf16.xpose.msra.mxu0 0
        %3345 = vmatprep.subr.bf16.mxu0 0
        %3346 = vmatpush1.bf16.xpose.msra.mxu0 %v3329
        %3347 = vmatprep.subr.bf16.mxu0 0
        %3348 = vmatpush2.bf16.xpose.msra.mxu0 0
        %3349 = vmatprep.subr.bf16.mxu0 0
        %3350 = vmatpush2.bf16.xpose.msra.mxu0 0
        %3351 = vmatprep.subr.bf16.mxu0 0
        %3352 = vmatpush2.bf16.xpose.msra.mxu0 0
        %3353 = vmatprep.subr.bf16.mxu0 0
        %3354 = vmatpush2.bf16.xpose.msra.mxu0 0
        %3355 = vmatprep.subr.bf16.mxu0 0
        %3356 = vmatpush2.bf16.xpose.msra.mxu0 0
        %3357 = vmatprep.subr.bf16.mxu0 0
        %3358 = vmatpush2.bf16.xpose.msra.mxu0 0
        %3359 = vmatprep.subr.bf16.mxu0 0
        %3360 = vmatpush2.bf16.xpose.msra.mxu0 0
        %3361 = vmatprep.subr.bf16.mxu0 0
        %3362 = vmatpush2.bf16.xpose.msra.mxu0 0
        %3363 = vmatprep.mubr.bf16.mxu0 0
        %3364 = vmatmul.mubr.bf16.gmra.mxu0 %v3326
        %v3365 = vpop.f32.mrf.mxu0
        %v3366 = vadd.f32 %v3185, %v3365
        %v3367 = vpop.f32.mrf.mxu0
        %v3368 = vpop.f32.mrf.mxu0
        %v3369 = vpop.f32.mrf.mxu0
        %3370 = vdwg.mxu0
        %v3371 = vsel %vm1864, %v3228, -inf
        %3372 = vmax.xlane.f32.xlu0 %v3371
        %v3373 = vpop.xlane.xlu0 %3372
        %v3374 = vsel %vm1864, %v3274, -inf
        %3375 = vmax.xlane.f32.xlu0 %v3374
        %v3376 = vpop.xlane.xlu0 %3375
        %v3377 = vsel %vm1864, %v3320, -inf
        %3378 = vmax.xlane.f32.xlu0 %v3377
        %v3379 = vpop.xlane.xlu0 %3378
        %v3380 = vsel %vm1864, %v3366, -inf
        %3381 = vmax.xlane.f32.xlu0 %v3380
        %v3382 = vpop.xlane.xlu0 %3381
        %v3383 = vsub.f32 %v3228, %v3373
        %v3384 = vsub.f32 %v3274, %v3376
        %v3385 = vsub.f32 %v3320, %v3379
        %v3386 = vsub.f32 %v3366, %v3382
        %v3387 = vmul.f32 %v3383, 1.442695
        %v3388 = vpow.pop %v3387
        %v3389 = vmul.f32 %v3384, 1.442695
        %v3390 = vpow.pop %v3389
        %v3391 = vmul.f32 %v3385, 1.442695
        %v3392 = vpow.pop %v3391
        %v3393 = vmul.f32 %v3386, 1.442695
        %v3394 = vpow.pop %v3393
        %v3395 = vsel %vm1864, %v3388, 0.0
        %3396 = vadd.xlane.f32.xlu0 %v3395
        %v3397 = vpop.xlane.xlu0 %3396
        %v3398 = vsel %vm1864, %v3390, 0.0
        %3399 = vadd.xlane.f32.xlu0 %v3398
        %v3400 = vpop.xlane.xlu0 %3399
        %v3401 = vsel %vm1864, %v3392, 0.0
        %3402 = vadd.xlane.f32.xlu0 %v3401
        %v3403 = vpop.xlane.xlu0 %3402
        %v3404 = vsel %vm1864, %v3394, 0.0
        %3405 = vadd.xlane.f32.xlu0 %v3404
        %v3406 = vpop.xlane.xlu0 %3405
        %v3407 = vrcp.pop %v3397
        %v3408 = vmul.f32 %v3388, %v3407
        %v3409 = vrcp.pop %v3400
        %v3410 = vmul.f32 %v3390, %v3409
        %v3411 = vrcp.pop %v3403
        %v3412 = vmul.f32 %v3392, %v3411
        %v3413 = vrcp.pop %v3406
        %v3414 = vmul.f32 %v3394, %v3413
        %v3415 = vpack.c.bf16 %v3408, %v3408
        %v3416 = vpack.c.bf16 %v3410, %v3410
        %v3417 = vpack.c.bf16 %v3412, %v3412
        %v3418 = vpack.c.bf16 %v3414, %v3414
        %v3420 = vsel %vm1864, %v3415, 0
        %v3423 = vsel %vm2100, %v3177, 0
        %3425 = vmatprep.subr.bf16.mxu0 0
        %3426 = vmatpush1.bf16.msra.mxu0 0
        %3427 = vmatprep.subr.bf16.mxu0 0
        %3428 = vmatpush1.bf16.msra.mxu0 0
        %3429 = vmatprep.subr.bf16.mxu0 0
        %3430 = vmatpush1.bf16.msra.mxu0 0
        %3431 = vmatprep.subr.bf16.mxu0 0
        %3432 = vmatpush1.bf16.msra.mxu0 0
        %3433 = vmatprep.subr.bf16.mxu0 0
        %3434 = vmatpush1.bf16.msra.mxu0 0
        %3435 = vmatprep.subr.bf16.mxu0 0
        %3436 = vmatpush1.bf16.msra.mxu0 0
        %3437 = vmatprep.subr.bf16.mxu0 0
        %3438 = vmatpush1.bf16.msra.mxu0 0
        %3439 = vmatprep.subr.bf16.mxu0 0
        %3440 = vmatpush1.bf16.msra.mxu0 %v3423
        %3441 = vmatprep.subr.bf16.mxu0 0
        %3442 = vmatpush2.bf16.msra.mxu0 0
        %3443 = vmatprep.subr.bf16.mxu0 0
        %3444 = vmatpush2.bf16.msra.mxu0 0
        %3445 = vmatprep.subr.bf16.mxu0 0
        %3446 = vmatpush2.bf16.msra.mxu0 0
        %3447 = vmatprep.subr.bf16.mxu0 0
        %3448 = vmatpush2.bf16.msra.mxu0 0
        %3449 = vmatprep.subr.bf16.mxu0 0
        %3450 = vmatpush2.bf16.msra.mxu0 0
        %3451 = vmatprep.subr.bf16.mxu0 0
        %3452 = vmatpush2.bf16.msra.mxu0 0
        %3453 = vmatprep.subr.bf16.mxu0 0
        %3454 = vmatpush2.bf16.msra.mxu0 0
        %3455 = vmatprep.subr.bf16.mxu0 0
        %3456 = vmatpush2.bf16.msra.mxu0 0
        %3457 = vmatprep.mubr.bf16.mxu0 0
        %3458 = vmatmul.mubr.bf16.gmra.mxu0 %v3420
        %v3459 = vpop.f32.mrf.mxu0
        %v3460 = vadd.f32 0.0, %v3459
        %v3461 = vpop.f32.mrf.mxu0
        %v3462 = vpop.f32.mrf.mxu0
        %v3463 = vpop.f32.mrf.mxu0
        %3464 = vdwg.mxu0
        %v3466 = vsel %vm1864, %v3416, 0
        %v3469 = vsel %vm2100, %v3178, 0
        %3471 = vmatprep.subr.bf16.mxu0 0
        %3472 = vmatpush1.bf16.msra.mxu0 0
        %3473 = vmatprep.subr.bf16.mxu0 0
        %3474 = vmatpush1.bf16.msra.mxu0 0
        %3475 = vmatprep.subr.bf16.mxu0 0
        %3476 = vmatpush1.bf16.msra.mxu0 0
        %3477 = vmatprep.subr.bf16.mxu0 0
        %3478 = vmatpush1.bf16.msra.mxu0 0
        %3479 = vmatprep.subr.bf16.mxu0 0
        %3480 = vmatpush1.bf16.msra.mxu0 0
        %3481 = vmatprep.subr.bf16.mxu0 0
        %3482 = vmatpush1.bf16.msra.mxu0 0
        %3483 = vmatprep.subr.bf16.mxu0 0
        %3484 = vmatpush1.bf16.msra.mxu0 0
        %3485 = vmatprep.subr.bf16.mxu0 0
        %3486 = vmatpush1.bf16.msra.mxu0 %v3469
        %3487 = vmatprep.subr.bf16.mxu0 0
        %3488 = vmatpush2.bf16.msra.mxu0 0
        %3489 = vmatprep.subr.bf16.mxu0 0
        %3490 = vmatpush2.bf16.msra.mxu0 0
        %3491 = vmatprep.subr.bf16.mxu0 0
        %3492 = vmatpush2.bf16.msra.mxu0 0
        %3493 = vmatprep.subr.bf16.mxu0 0
        %3494 = vmatpush2.bf16.msra.mxu0 0
        %3495 = vmatprep.subr.bf16.mxu0 0
        %3496 = vmatpush2.bf16.msra.mxu0 0
        %3497 = vmatprep.subr.bf16.mxu0 0
        %3498 = vmatpush2.bf16.msra.mxu0 0
        %3499 = vmatprep.subr.bf16.mxu0 0
        %3500 = vmatpush2.bf16.msra.mxu0 0
        %3501 = vmatprep.subr.bf16.mxu0 0
        %3502 = vmatpush2.bf16.msra.mxu0 0
        %3503 = vmatprep.mubr.bf16.mxu0 0
        %3504 = vmatmul.mubr.bf16.gmra.mxu0 %v3466
        %v3505 = vpop.f32.mrf.mxu0
        %v3506 = vadd.f32 0.0, %v3505
        %v3507 = vpop.f32.mrf.mxu0
        %v3508 = vpop.f32.mrf.mxu0
        %v3509 = vpop.f32.mrf.mxu0
        %3510 = vdwg.mxu0
        %v3512 = vsel %vm1864, %v3417, 0
        %v3515 = vsel %vm2100, %v3179, 0
        %3517 = vmatprep.subr.bf16.mxu0 0
        %3518 = vmatpush1.bf16.msra.mxu0 0
        %3519 = vmatprep.subr.bf16.mxu0 0
        %3520 = vmatpush1.bf16.msra.mxu0 0
        %3521 = vmatprep.subr.bf16.mxu0 0
        %3522 = vmatpush1.bf16.msra.mxu0 0
        %3523 = vmatprep.subr.bf16.mxu0 0
        %3524 = vmatpush1.bf16.msra.mxu0 0
        %3525 = vmatprep.subr.bf16.mxu0 0
        %3526 = vmatpush1.bf16.msra.mxu0 0
        %3527 = vmatprep.subr.bf16.mxu0 0
        %3528 = vmatpush1.bf16.msra.mxu0 0
        %3529 = vmatprep.subr.bf16.mxu0 0
        %3530 = vmatpush1.bf16.msra.mxu0 0
        %3531 = vmatprep.subr.bf16.mxu0 0
        %3532 = vmatpush1.bf16.msra.mxu0 %v3515
        %3533 = vmatprep.subr.bf16.mxu0 0
        %3534 = vmatpush2.bf16.msra.mxu0 0
        %3535 = vmatprep.subr.bf16.mxu0 0
        %3536 = vmatpush2.bf16.msra.mxu0 0
        %3537 = vmatprep.subr.bf16.mxu0 0
        %3538 = vmatpush2.bf16.msra.mxu0 0
        %3539 = vmatprep.subr.bf16.mxu0 0
        %3540 = vmatpush2.bf16.msra.mxu0 0
        %3541 = vmatprep.subr.bf16.mxu0 0
        %3542 = vmatpush2.bf16.msra.mxu0 0
        %3543 = vmatprep.subr.bf16.mxu0 0
        %3544 = vmatpush2.bf16.msra.mxu0 0
        %3545 = vmatprep.subr.bf16.mxu0 0
        %3546 = vmatpush2.bf16.msra.mxu0 0
        %3547 = vmatprep.subr.bf16.mxu0 0
        %3548 = vmatpush2.bf16.msra.mxu0 0
        %3549 = vmatprep.mubr.bf16.mxu0 0
        %3550 = vmatmul.mubr.bf16.gmra.mxu0 %v3512
        %v3551 = vpop.f32.mrf.mxu0
        %v3552 = vadd.f32 0.0, %v3551
        %v3553 = vpop.f32.mrf.mxu0
        %v3554 = vpop.f32.mrf.mxu0
        %v3555 = vpop.f32.mrf.mxu0
        %3556 = vdwg.mxu0
        %v3558 = vsel %vm1864, %v3418, 0
        %v3561 = vsel %vm2100, %v3180, 0
        %3563 = vmatprep.subr.bf16.mxu0 0
        %3564 = vmatpush1.bf16.msra.mxu0 0
        %3565 = vmatprep.subr.bf16.mxu0 0
        %3566 = vmatpush1.bf16.msra.mxu0 0
        %3567 = vmatprep.subr.bf16.mxu0 0
        %3568 = vmatpush1.bf16.msra.mxu0 0
        %3569 = vmatprep.subr.bf16.mxu0 0
        %3570 = vmatpush1.bf16.msra.mxu0 0
        %3571 = vmatprep.subr.bf16.mxu0 0
        %3572 = vmatpush1.bf16.msra.mxu0 0
        %3573 = vmatprep.subr.bf16.mxu0 0
        %3574 = vmatpush1.bf16.msra.mxu0 0
        %3575 = vmatprep.subr.bf16.mxu0 0
        %3576 = vmatpush1.bf16.msra.mxu0 0
        %3577 = vmatprep.subr.bf16.mxu0 0
        %3578 = vmatpush1.bf16.msra.mxu0 %v3561
        %3579 = vmatprep.subr.bf16.mxu0 0
        %3580 = vmatpush2.bf16.msra.mxu0 0
        %3581 = vmatprep.subr.bf16.mxu0 0
        %3582 = vmatpush2.bf16.msra.mxu0 0
        %3583 = vmatprep.subr.bf16.mxu0 0
        %3584 = vmatpush2.bf16.msra.mxu0 0
        %3585 = vmatprep.subr.bf16.mxu0 0
        %3586 = vmatpush2.bf16.msra.mxu0 0
        %3587 = vmatprep.subr.bf16.mxu0 0
        %3588 = vmatpush2.bf16.msra.mxu0 0
        %3589 = vmatprep.subr.bf16.mxu0 0
        %3590 = vmatpush2.bf16.msra.mxu0 0
        %3591 = vmatprep.subr.bf16.mxu0 0
        %3592 = vmatpush2.bf16.msra.mxu0 0
        %3593 = vmatprep.subr.bf16.mxu0 0
        %3594 = vmatpush2.bf16.msra.mxu0 0
        %3595 = vmatprep.mubr.bf16.mxu0 0
        %3596 = vmatmul.mubr.bf16.gmra.mxu0 %v3558
        %v3597 = vpop.f32.mrf.mxu0
        %v3598 = vadd.f32 0.0, %v3597
        %v3599 = vpop.f32.mrf.mxu0
        %v3600 = vpop.f32.mrf.mxu0
        %v3601 = vpop.f32.mrf.mxu0
        %3602 = vdwg.mxu0
        %v3603 = vcombine.low %v3460, %v3552
        %v3604 = vcombine.high %v3460, %v3552
        %v3606 = vunpack.c.l.s4 1983009808
        %v3607 = vunpack.c.0.s8 %v3606
        %v3608 = vlaneseq
        %v3609 = vshrl.u32 %v3608, 7
        %v3610 = vsub.s32 %v3607, %v3609
        %v3611 = vrot.slane %v3603, %v3610
        %v3613 = vunpack.c.l.s4 1983009808
        %v3614 = vunpack.c.0.s8 %v3613
        %v3615 = vlaneseq
        %v3616 = vshrl.u32 %v3615, 7
        %v3617 = vsub.s32 %v3614, %v3616
        %v3618 = vrot.slane %v3604, %v3617
        %v3619 = vcombine.low %v3506, %v3598
        %v3620 = vcombine.high %v3506, %v3598
        %v3622 = vunpack.c.l.s4 1983009808
        %v3623 = vunpack.c.0.s8 %v3622
        %v3624 = vlaneseq
        %v3625 = vshrl.u32 %v3624, 7
        %v3626 = vsub.s32 %v3623, %v3625
        %v3627 = vrot.slane %v3619, %v3626
        %v3629 = vunpack.c.l.s4 1983009808
        %v3630 = vunpack.c.0.s8 %v3629
        %v3631 = vlaneseq
        %v3632 = vshrl.u32 %v3631, 7
        %v3633 = vsub.s32 %v3630, %v3632
        %v3634 = vrot.slane %v3620, %v3633
        %v3635 = vcombine.low %v3611, %v3627
        %v3636 = vcombine.high %v3611, %v3627
        %v3638 = vunpack.c.l.s4 1934713408
        %v3639 = vunpack.c.0.s8 %v3638
        %v3640 = vlaneseq
        %v3641 = vshrl.u32 %v3640, 7
        %v3642 = vsub.s32 %v3639, %v3641
        %v3643 = vrot.slane %v3635, %v3642
        %v3645 = vunpack.c.l.s4 1934713408
        %v3646 = vunpack.c.0.s8 %v3645
        %v3647 = vlaneseq
        %v3648 = vshrl.u32 %v3647, 7
        %v3649 = vsub.s32 %v3646, %v3648
        %v3650 = vrot.slane %v3636, %v3649
        %v3651 = vcombine.low %v3618, %v3634
        %v3652 = vcombine.high %v3618, %v3634
        %v3654 = vunpack.c.l.s4 1934713408
        %v3655 = vunpack.c.0.s8 %v3654
        %v3656 = vlaneseq
        %v3657 = vshrl.u32 %v3656, 7
        %v3658 = vsub.s32 %v3655, %v3657
        %v3659 = vrot.slane %v3651, %v3658
        %v3661 = vunpack.c.l.s4 1934713408
        %v3662 = vunpack.c.0.s8 %v3661
        %v3663 = vlaneseq
        %v3664 = vshrl.u32 %v3663, 7
        %v3665 = vsub.s32 %v3662, %v3664
        %v3666 = vrot.slane %v3652, %v3665
        %v3667 = vcombine.high %v3643, 0.0
        %v3668 = vcombine.high %v3650, 0.0
        %v3669 = vcombine.high %v3659, 0.0
        %v3670 = vcombine.high %v3666, 0.0
        %v3671 = vcombine.low %v3643, %v3650
        %v3673 = vunpack.c.l.s4 1983009808
        %v3674 = vunpack.c.0.s8 %v3673
        %v3675 = vlaneseq
        %v3676 = vshrl.u32 %v3675, 7
        %v3677 = vsub.s32 %v3674, %v3676
        %v3678 = vrot.slane %v3671, %v3677
        %v3679 = vcombine.low %v3667, %v3668
        %v3681 = vunpack.c.l.s4 1983009808
        %v3682 = vunpack.c.0.s8 %v3681
        %v3683 = vlaneseq
        %v3684 = vshrl.u32 %v3683, 7
        %v3685 = vsub.s32 %v3682, %v3684
        %v3686 = vrot.slane %v3679, %v3685
        %v3687 = vcombine.low %v3659, %v3666
        %v3689 = vunpack.c.l.s4 1983009808
        %v3690 = vunpack.c.0.s8 %v3689
        %v3691 = vlaneseq
        %v3692 = vshrl.u32 %v3691, 7
        %v3693 = vsub.s32 %v3690, %v3692
        %v3694 = vrot.slane %v3687, %v3693
        %v3695 = vcombine.low %v3669, %v3670
        %v3697 = vunpack.c.l.s4 1983009808
        %v3698 = vunpack.c.0.s8 %v3697
        %v3699 = vlaneseq
        %v3700 = vshrl.u32 %v3699, 7
        %v3701 = vsub.s32 %v3698, %v3700
        %v3702 = vrot.slane %v3695, %v3701
        %v3703 = vcombine.low %v3678, %v3686
        %v3704 = vcombine.high %v3678, %v3686
        %v3706 = vunpack.c.l.s4 1934713408
        %v3707 = vunpack.c.0.s8 %v3706
        %v3708 = vlaneseq
        %v3709 = vshrl.u32 %v3708, 7
        %v3710 = vsub.s32 %v3707, %v3709
        %v3711 = vrot.slane %v3703, %v3710
        %v3713 = vunpack.c.l.s4 1934713408
        %v3714 = vunpack.c.0.s8 %v3713
        %v3715 = vlaneseq
        %v3716 = vshrl.u32 %v3715, 7
        %v3717 = vsub.s32 %v3714, %v3716
        %v3718 = vrot.slane %v3704, %v3717
        %v3719 = vcombine.low %v3694, %v3702
        %v3720 = vcombine.high %v3694, %v3702
        %v3722 = vunpack.c.l.s4 1934713408
        %v3723 = vunpack.c.0.s8 %v3722
        %v3724 = vlaneseq
        %v3725 = vshrl.u32 %v3724, 7
        %v3726 = vsub.s32 %v3723, %v3725
        %v3727 = vrot.slane %v3719, %v3726
        %v3729 = vunpack.c.l.s4 1934713408
        %v3730 = vunpack.c.0.s8 %v3729
        %v3731 = vlaneseq
        %v3732 = vshrl.u32 %v3731, 7
        %v3733 = vsub.s32 %v3730, %v3732
        %v3734 = vrot.slane %v3720, %v3733
        %v3735 = vcombine.low %v3711, %v3727
        %v3736 = vcombine.high %v3711, %v3727
        %v3737 = vcombine.low %v3718, %v3734
        %v3738 = vcombine.high %v3718, %v3734
        %3740 = vrot.lane.b32.xlu0 %v3736, 8
        %v3741 = vpop.permute.xlu0 %3740
        %3744 = vrot.lane.b32.xlu0 %v3737, 16
        %v3745 = vpop.permute.xlu0 %3744
        %3748 = vrot.lane.b32.xlu0 %v3738, 24
        %v3749 = vpop.permute.xlu0 %3748
        %v3751 = vsel %vm1864, %v3735, %v3741
        %v3752 = vsel %vm2431, %v3751, %v3745
        %v3753 = vsel %vm2433, %v3752, %v3749
        %v3754 = vpack.c.bf16 %v3753, %v3753
        %v3756 = vlaneseq
        %v3757 = vshrl.u32 %v3756, 7
        %v3758 = vsub.s32 0, %v3757
        %v3759 = vrot.slane %v2547, %v3758
        %v3765 = vunpack.c.l.b16 %v2543
        %v3766 = vunpack.c.l.b16 %v2544
        %v3767 = vunpack.c.l.b16 %v2545
        %v3768 = vunpack.c.l.b16 %v2546
        %v3769 = vpack.c.b16 %v3766, %v3765
        %v3770 = vpack.c.b16 %v3768, %v3767
        %v3774 = vsel %vm1253, %v3754, 0
        %3776 = vmatprep.subr.bf16.mxu0 0
        %3777 = vmatpush1.bf16.msra.mxu0 0
        %3778 = vmatprep.subr.bf16.mxu0 0
        %3779 = vmatpush1.bf16.msra.mxu0 0
        %3780 = vmatprep.subr.bf16.mxu0 0
        %3781 = vmatpush1.bf16.msra.mxu0 0
        %3782 = vmatprep.subr.bf16.mxu0 0
        %3783 = vmatpush1.bf16.msra.mxu0 0
        %3784 = vmatprep.subr.bf16.mxu0 0
        %3785 = vmatpush1.bf16.msra.mxu0 0
        %3786 = vmatprep.subr.bf16.mxu0 0
        %3787 = vmatpush1.bf16.msra.mxu0 0
        %3788 = vmatprep.subr.bf16.mxu0 0
        %3789 = vmatpush1.bf16.msra.mxu0 %v3770
        %3790 = vmatprep.subr.bf16.mxu0 0
        %3791 = vmatpush1.bf16.msra.mxu0 %v3769
        %3792 = vmatprep.subr.bf16.mxu0 0
        %3793 = vmatpush2.bf16.msra.mxu0 0
        %3794 = vmatprep.subr.bf16.mxu0 0
        %3795 = vmatpush2.bf16.msra.mxu0 0
        %3796 = vmatprep.subr.bf16.mxu0 0
        %3797 = vmatpush2.bf16.msra.mxu0 0
        %3798 = vmatprep.subr.bf16.mxu0 0
        %3799 = vmatpush2.bf16.msra.mxu0 0
        %3800 = vmatprep.subr.bf16.mxu0 0
        %3801 = vmatpush2.bf16.msra.mxu0 0
        %3802 = vmatprep.subr.bf16.mxu0 0
        %3803 = vmatpush2.bf16.msra.mxu0 0
        %3804 = vmatprep.subr.bf16.mxu0 0
        %3805 = vmatpush2.bf16.msra.mxu0 0
        %3806 = vmatprep.subr.bf16.mxu0 0
        %3807 = vmatpush2.bf16.msra.mxu0 0
        %3808 = vmatprep.mubr.bf16.mxu0 0
        %3809 = vmatmul.mubr.bf16.gmra.mxu0 %v3774
        %v3810 = vpop.f32.mrf.mxu0
        %v3811 = vadd.f32 %v3759, %v3810
        %v3812 = vpop.f32.mrf.mxu0
        %v3813 = vpop.f32.mrf.mxu0
        %v3814 = vpop.f32.mrf.mxu0
        %3815 = vdwg.mxu0
        %v3816 = vadd.f32 %v2527, %v3811
        %v3817 = vld [vmem:[%s43] sm:$0x1]
        %v3818 = vld [vmem:[%s45] sm:$0x1]
        %v3819 = vsel %vm1253, %v3816, 0.0
        %3820 = vadd.xlane.f32.xlu0 %v3819
        %v3821 = vpop.xlane.xlu0 %3820
        %v3822 = vmul.f32 %v3821, %v2503
        %v3823 = vsub.f32 %v3816, %v3822
        %v3824 = vmul.f32 %v3823, %v3823
        %v3825 = vsel %vm1253, %v3824, 0.0
        %3826 = vadd.xlane.f32.xlu0 %v3825
        %v3827 = vpop.xlane.xlu0 %3826
        %v3828 = vmul.f32 %v3827, %v2503
        %v3829 = vadd.f32 %v3828, 1e-05
        %v3830 = vrsqrt.pop %v3829
        %v3831 = vmul.f32 %v3823, %v3830
        %v3833 = vlaneseq
        %v3834 = vshrl.u32 %v3833, 7
        %v3835 = vsub.s32 0, %v3834
        %v3836 = vrot.slane %v3817, %v3835
        %v3838 = vmul.f32 %v3831, %v3836
        %v3840 = vlaneseq
        %v3841 = vshrl.u32 %v3840, 7
        %v3842 = vsub.s32 0, %v3841
        %v3843 = vrot.slane %v3818, %v3842
        %v3845 = vadd.f32 %v3838, %v3843
        %v3846 = vpack.c.bf16 %v3845, %v3845
        %v3847 = vld [vmem:[#allocation28] sm:$0xf]
        %v3848 = vld [vmem:[#allocation28 + $0x4] sm:$0xf]
        %v3849 = vld [vmem:[#allocation28 + $0x8] sm:$0xf]
        %v3850 = vld [vmem:[#allocation28 + $0xc] sm:$0xf]
        %v3851 = vld [vmem:[%s49] sm:$0x1]
        %v3853 = vlaneseq
        %v3854 = vshrl.u32 %v3853, 7
        %v3855 = vsub.s32 0, %v3854
        %v3856 = vrot.slane %v3851, %v3855
        %v3862 = vunpack.c.l.b16 %v3847
        %v3863 = vunpack.c.l.b16 %v3848
        %v3864 = vunpack.c.l.b16 %v3849
        %v3865 = vunpack.c.l.b16 %v3850
        %v3866 = vpack.c.b16 %v3863, %v3862
        %v3867 = vpack.c.b16 %v3865, %v3864
        %v3871 = vsel %vm1253, %v3846, 0
        %3873 = vmatprep.subr.bf16.mxu0 0
        %3874 = vmatpush1.bf16.msra.mxu0 0
        %3875 = vmatprep.subr.bf16.mxu0 0
        %3876 = vmatpush1.bf16.msra.mxu0 0
        %3877 = vmatprep.subr.bf16.mxu0 0
        %3878 = vmatpush1.bf16.msra.mxu0 0
        %3879 = vmatprep.subr.bf16.mxu0 0
        %3880 = vmatpush1.bf16.msra.mxu0 0
        %3881 = vmatprep.subr.bf16.mxu0 0
        %3882 = vmatpush1.bf16.msra.mxu0 0
        %3883 = vmatprep.subr.bf16.mxu0 0
        %3884 = vmatpush1.bf16.msra.mxu0 0
        %3885 = vmatprep.subr.bf16.mxu0 0
        %3886 = vmatpush1.bf16.msra.mxu0 %v3867
        %3887 = vmatprep.subr.bf16.mxu0 0
        %3888 = vmatpush1.bf16.msra.mxu0 %v3866
        %3889 = vmatprep.subr.bf16.mxu0 0
        %3890 = vmatpush2.bf16.msra.mxu0 0
        %3891 = vmatprep.subr.bf16.mxu0 0
        %3892 = vmatpush2.bf16.msra.mxu0 0
        %3893 = vmatprep.subr.bf16.mxu0 0
        %3894 = vmatpush2.bf16.msra.mxu0 0
        %3895 = vmatprep.subr.bf16.mxu0 0
        %3896 = vmatpush2.bf16.msra.mxu0 0
        %3897 = vmatprep.subr.bf16.mxu0 0
        %3898 = vmatpush2.bf16.msra.mxu0 0
        %3899 = vmatprep.subr.bf16.mxu0 0
        %3900 = vmatpush2.bf16.msra.mxu0 0
        %3901 = vmatprep.subr.bf16.mxu0 0
        %3902 = vmatpush2.bf16.msra.mxu0 0
        %3903 = vmatprep.subr.bf16.mxu0 0
        %3904 = vmatpush2.bf16.msra.mxu0 0
        %3905 = vmatprep.mubr.bf16.mxu0 0
        %3906 = vmatmul.mubr.bf16.gmra.mxu0 %v3871
        %v3907 = vpop.f32.mrf.mxu0
        %v3908 = vadd.f32 %v3856, %v3907
        %v3909 = vpop.f32.mrf.mxu0
        %v3910 = vpop.f32.mrf.mxu0
        %v3911 = vpop.f32.mrf.mxu0
        %3912 = vdwg.mxu0
        %v3913 = vmax.f32 %v3908, 0.0
        %v3914 = vpack.c.bf16 %v3913, %v3913
        %v3915 = vld [vmem:[%s51] sm:$0xf]
        %v3916 = vld [vmem:[%s51 + $0x4] sm:$0xf]
        %v3917 = vld [vmem:[%s51 + $0x8] sm:$0xf]
        %v3918 = vld [vmem:[%s51 + $0xc] sm:$0xf]
        %v3919 = vld [vmem:[%s51 + $0x10] sm:$0xf]
        %v3920 = vld [vmem:[%s51 + $0x14] sm:$0xf]
        %v3921 = vld [vmem:[%s51 + $0x18] sm:$0xf]
        %v3922 = vld [vmem:[%s51 + $0x1c] sm:$0xf]
        %v3923 = vld [vmem:[%s53] sm:$0x1]
        %v3925 = vlaneseq
        %v3926 = vshrl.u32 %v3925, 7
        %v3927 = vsub.s32 0, %v3926
        %v3928 = vrot.slane %v3923, %v3927
        %v3938 = vunpack.c.l.b16 %v3915
        %v3939 = vunpack.c.l.b16 %v3916
        %v3940 = vunpack.c.l.b16 %v3917
        %v3941 = vunpack.c.l.b16 %v3918
        %v3942 = vunpack.c.l.b16 %v3919
        %v3943 = vunpack.c.l.b16 %v3920
        %v3944 = vunpack.c.l.b16 %v3921
        %v3945 = vunpack.c.l.b16 %v3922
        %v3946 = vpack.c.b16 %v3939, %v3938
        %v3947 = vpack.c.b16 %v3941, %v3940
        %v3948 = vpack.c.b16 %v3943, %v3942
        %v3949 = vpack.c.b16 %v3945, %v3944
        %vm3954 = vcmask 523264
        %v3956 = vsel %vm3954, %v3914, 0
        %3958 = vmatprep.subr.bf16.mxu0 0
        %3959 = vmatpush1.bf16.msra.mxu0 0
        %3960 = vmatprep.subr.bf16.mxu0 0
        %3961 = vmatpush1.bf16.msra.mxu0 0
        %3962 = vmatprep.subr.bf16.mxu0 0
        %3963 = vmatpush1.bf16.msra.mxu0 0
        %3964 = vmatprep.subr.bf16.mxu0 0
        %3965 = vmatpush1.bf16.msra.mxu0 0
        %3966 = vmatprep.subr.bf16.mxu0 0
        %3967 = vmatpush1.bf16.msra.mxu0 %v3949
        %3968 = vmatprep.subr.bf16.mxu0 0
        %3969 = vmatpush1.bf16.msra.mxu0 %v3948
        %3970 = vmatprep.subr.bf16.mxu0 0
        %3971 = vmatpush1.bf16.msra.mxu0 %v3947
        %3972 = vmatprep.subr.bf16.mxu0 0
        %3973 = vmatpush1.bf16.msra.mxu0 %v3946
        %3974 = vmatprep.subr.bf16.mxu0 0
        %3975 = vmatpush2.bf16.msra.mxu0 0
        %3976 = vmatprep.subr.bf16.mxu0 0
        %3977 = vmatpush2.bf16.msra.mxu0 0
        %3978 = vmatprep.subr.bf16.mxu0 0
        %3979 = vmatpush2.bf16.msra.mxu0 0
        %3980 = vmatprep.subr.bf16.mxu0 0
        %3981 = vmatpush2.bf16.msra.mxu0 0
        %3982 = vmatprep.subr.bf16.mxu0 0
        %3983 = vmatpush2.bf16.msra.mxu0 0
        %3984 = vmatprep.subr.bf16.mxu0 0
        %3985 = vmatpush2.bf16.msra.mxu0 0
        %3986 = vmatprep.subr.bf16.mxu0 0
        %3987 = vmatpush2.bf16.msra.mxu0 0
        %3988 = vmatprep.subr.bf16.mxu0 0
        %3989 = vmatpush2.bf16.msra.mxu0 0
        %3990 = vmatprep.mubr.bf16.mxu0 0
        %3991 = vmatmul.mubr.bf16.gmra.mxu0 %v3956
        %v3992 = vpop.f32.mrf.mxu0
        %v3993 = vadd.f32 %v3928, %v3992
        %v3994 = vpop.f32.mrf.mxu0
        %v3995 = vpop.f32.mrf.mxu0
        %v3996 = vpop.f32.mrf.mxu0
        %3997 = vdwg.mxu0
        %v3998 = vadd.f32 %v3845, %v3993
        %v3999 = vld [vmem:[%s55] sm:$0x1]
        %v4000 = vld [vmem:[%s57] sm:$0x1]
        %v4001 = vsel %vm1253, %v3998, 0.0
        %4002 = vadd.xlane.f32.xlu0 %v4001
        %v4003 = vpop.xlane.xlu0 %4002
        %v4004 = vmul.f32 %v4003, %v2503
        %v4005 = vsub.f32 %v3998, %v4004
        %v4006 = vmul.f32 %v4005, %v4005
        %v4007 = vsel %vm1253, %v4006, 0.0
        %4008 = vadd.xlane.f32.xlu0 %v4007
        %v4009 = vpop.xlane.xlu0 %4008
        %v4010 = vmul.f32 %v4009, %v2503
        %v4011 = vadd.f32 %v4010, 1e-05
        %v4012 = vrsqrt.pop %v4011
        %v4013 = vmul.f32 %v4005, %v4012
        %v4015 = vlaneseq
        %v4016 = vshrl.u32 %v4015, 7
        %v4017 = vsub.s32 0, %v4016
        %v4018 = vrot.slane %v3999, %v4017
        %v4020 = vmul.f32 %v4013, %v4018
        %v4022 = vlaneseq
        %v4023 = vshrl.u32 %v4022, 7
        %v4024 = vsub.s32 0, %v4023
        %v4025 = vrot.slane %v4000, %v4024
        %v4027 = vadd.f32 %v4020, %v4025
        %4028 = vst.msk [vmem:[%s1186] sm:$0xff] %vm1253, %v4027
        %4029 = vst.msk [vmem:[%s1193] sm:$0xff] %vm1864, %v3408
        %4030 = vst.msk [vmem:[%s1193 + $0x8] sm:$0xff] %vm1864, %v3410
        %4031 = vst.msk [vmem:[%s1193 + $0x10] sm:$0xff] %vm1864, %v3412
        %4032 = vst.msk [vmem:[%s1193 + $0x18] sm:$0xff] %vm1864, %v3414
        %s4033 = sand.u32 %s722, 1
        %s4034 = scalar_lea.sflag [#allocation4], %s4033
        %s4035 = sand.u32 %s722, 1
        %s4036 = smul.addr %s4035, 8
        %s4037 = scalar_lea.vmem [#allocation29], %s4036
        %s4038 = sand.u32 %s748, 1
        %s4039 = scalar_lea.sflag [#allocation31], %s4038
        %s4040 = sand.u32 %s748, 1
        %s4041 = smul.addr %s4040, 32
        %s4042 = scalar_lea.vmem [#allocation30], %s4041
        // Predicated region
        $region205: #{tpu_custom_call.1} parent=135 // pred_check
          %p4043 = pneg %p732
        $region206: #{tpu_custom_call.1} parent=135 // pred_check_branch
          %4045 = sbr.rel (%p4043) target = $region208
        $region207: #{tpu_custom_call.1} parent=135 // pred_region
          %s4047 = ssub.s32 128, 128
          %4048 = vsyncadd %s4034, %s4047
          %s4049 = smul.addr %s90, 128
          %s4050 = scalar_lea.hbm %s59, %s4049
          %s4052 = sshll.u32 %s4037, 4
          %s4053 = int_to_ptr.vmem [resolvable:$true] %s4052
          %4055 = dma.vmem_to_hbm [thread:$0]  %s4053, 128, %s4050, %s4034
        $region208: #{tpu_custom_call.1} parent=135 // pred_fallthru
          _
        // Predicated region
        $region209: #{tpu_custom_call.1} parent=135 // pred_check
          %p4056 = pneg %p758
        $region210: #{tpu_custom_call.1} parent=135 // pred_check_branch
          %4058 = sbr.rel (%p4056) target = $region212
        $region211: #{tpu_custom_call.1} parent=135 // pred_region
          %s4060 = ssub.s32 512, 512
          %4061 = vsyncadd %s4039, %s4060
          %s4062 = smul.addr %s90, 4
          %s4063 = smul.addr %s4062, 128
          %s4064 = scalar_lea.hbm %s61, %s4063
          %s4065 = sshll.u32 %s4042, 4
          %s4066 = int_to_ptr.vmem [resolvable:$true] %s4065
          %4071 = dma.vmem_to_hbm [thread:$0]  %s4066, 512, %s4064, %s4039, 128, 128, 8
        $region212: #{tpu_custom_call.1} parent=135 // pred_fallthru
          _
      $region136: #{tpu_custom_call.1} parent=5 // pred_fallthru
        _
      %p4072 = scmp.le.s32.totalorder 2, %s85
      // Predicated region
      $region213: #{tpu_custom_call.1} parent=5 // pred_check
        %p4073 = pneg %p4072
      $region214: #{tpu_custom_call.1} parent=5 // pred_check_branch
        %4075 = sbr.rel (%p4073) target = $region216
      $region215: #{tpu_custom_call.1} parent=5 // pred_region
        %s4076 = ssub.s32 %s85, 2
        // Predicated region
        $region217: #{tpu_custom_call.1} parent=215 // pred_check
          %p4077 = pneg %p738
        $region218: #{tpu_custom_call.1} parent=215 // pred_check_branch
          %4079 = sbr.rel (%p4077) target = $region220
        $region219: #{tpu_custom_call.1} parent=215 // pred_region
          %s4080 = sand.u32 %s723, 1
          %s4081 = scalar_lea.sflag [#allocation4], %s4080
          %s4082 = sand.u32 %s723, 1
          %s4083 = smul.addr %s4082, 8
          %s4084 = scalar_lea.vmem [#allocation29], %s4083
          %4085 = dma.done %s4081, 128
        $region220: #{tpu_custom_call.1} parent=215 // pred_fallthru
          _
        // Predicated region
        $region221: #{tpu_custom_call.1} parent=215 // pred_check
          %p4086 = pneg %p764
        $region222: #{tpu_custom_call.1} parent=215 // pred_check_branch
          %4088 = sbr.rel (%p4086) target = $region224
        $region223: #{tpu_custom_call.1} parent=215 // pred_region
          %s4089 = sand.u32 %s749, 1
          %s4090 = scalar_lea.sflag [#allocation31], %s4089
          %s4091 = sand.u32 %s749, 1
          %s4092 = smul.addr %s4091, 32
          %s4093 = scalar_lea.vmem [#allocation30], %s4092
          %4094 = dma.done %s4090, 512
        $region224: #{tpu_custom_call.1} parent=215 // pred_fallthru
          _
      $region216: #{tpu_custom_call.1} parent=5 // pred_fallthru
        _
    $region6: #{tpu_custom_call.1} parent=1 // loop_footer
      %s89 = sadd.s32 1, %s85
    $region7: #{tpu_custom_call.1} parent=1 // loop_footer_branch
      %84 = sbr.rel target = $region3
    $region8: #{tpu_custom_call.1} parent=1 // loop_exit
      _
    %4095 = vsyncpa [#allocation3], 1
    %s4096 = scalar_lea.sflag [#allocation3], 1
    %4097 = vsyncpa %s4096, 1
    %4098 = vsyncpa [#allocation6], 1
    %4099 = vsyncpa [#allocation9], 1
    %4100 = vsyncpa [#allocation12], 1
    %4101 = vsyncpa [#allocation15], 1
    %4102 = vsyncpa [#allocation18], 1
    %4103 = vsyncpa [#allocation21], 1
    %4104 = vsyncpa [#allocation24], 1
    %4105 = vsyncpa [#allocation27], 1
    %4106 = vsyncpa [#allocation4], 1
    %s4107 = scalar_lea.sflag [#allocation4], 1
    %4108 = vsyncpa %s4107, 1
    %4109 = vsyncpa [#allocation31], 1
    %s4110 = scalar_lea.sflag [#allocation31], 1
    %4111 = vsyncpa %s4110, 1

</llo_original>
